<compile_context>
chip_gen: v7x
topology: tpu7x:2x2x1
jax: 0.10.0
libtpu: 0.0.40
codegen_flags: <defaults>
</compile_context>

<pallas_src>
import jax
import jax.numpy as jnp
from jax.experimental import pallas as pl
from jax.experimental.pallas import tpu as pltpu

C_TOTAL = 161                  # channels in the raw observation
C_IN = 145                     # channels the network actually consumes
H_SP = 4
W_SP = 9
FEAT = C_IN * H_SP * W_SP      # 5220 real features
FEAT_RAW = C_TOTAL * H_SP * W_SP  # 5796 = un-sliced feature count fed to the kernel
HIDDEN = 256
N_ACT = 235
N_PAD = 256                    # actions padded to a lane-dense 256
EPI_SLAB = 128                 # epilogue row-slab size (bounds vreg live ranges)
MAX_TB = 512                   # batch tile upper bound (v7x VMEM-safe)


def policy_kernel(x_ref, mask_ref, w1_ref, b1_ref, w2_ref, b2_ref, act_ref):
    tb = x_ref.shape[0]
    slab = min(tb, EPI_SLAB)           # tb % slab == 0 by construction (see pick_batch_tile)
    n_slabs = tb // slab
    big = jnp.float32(3.0e38)

    def compute_rows(rows):
        # ---- layer 1: bf16 MXU matmul, f32 accumulation, in-kernel cast ----
        x = x_ref[rows, :].astype(jnp.bfloat16)                      # (slab, FEAT_RAW)
        h = jnp.dot(x, w1_ref[...], preferred_element_type=jnp.float32) + b1_ref[...]
        h = jnp.maximum(h, 0.0).astype(jnp.bfloat16)
        # ---- layer 2: 256-lane (padded) logits ----
        logits = (jnp.dot(h, w2_ref[...], preferred_element_type=jnp.float32)
                  + b2_ref[...])                                     # (slab, N_PAD) f32

        # ---- mask rule: logits + (min - max - 40) * ~mask ----
        # Per-row min/max over the 235 real lanes (argmax-equivalent to the
        # torch global min/max; keeps rows independent across batch tiles).
        lane = jax.lax.broadcasted_iota(jnp.int32, logits.shape, 1)
        real = lane < N_ACT
        rmin = jnp.min(jnp.where(real, logits, big), axis=-1, keepdims=True)
        rmax = jnp.max(jnp.where(real, logits, -big), axis=-1, keepdims=True)
        adj = jnp.where(mask_ref[rows, :] > 0,
                        logits, logits + (rmin - rmax - 40.0))
        adj = jnp.where(real, adj, -big)                 # padded lanes can never win

        # ---- per-row argmax (ties -> lowest index) ----
        row_max = jnp.max(adj, axis=-1, keepdims=True)
        cand = jnp.where(adj == row_max, lane, N_PAD)
        act_ref[rows, :] = jnp.min(cand, axis=-1, keepdims=True).astype(jnp.int32)

    if n_slabs == 1:
        compute_rows(slice(None))
    else:
        def body(s, carry):
            start = pl.multiple_of(s * slab, slab)
            compute_rows(pl.ds(start, slab))
            return carry
        jax.lax.fori_loop(0, n_slabs, body, 0)


def run_policy(x, mask, w1, b1, w2, b2, *, tb):
    B = x.shape[0]
    grid = (pl.cdiv(B, tb),)
    grid_spec = pltpu.PrefetchScalarGridSpec(
        num_scalar_prefetch=0,
        grid=grid,
        in_specs=[
            pl.BlockSpec((tb, FEAT_RAW), lambda i: (i, 0)),      # x     f32, full-K block
            pl.BlockSpec((tb, N_PAD), lambda i: (i, 0)),         # mask  bf16, 256 lanes
            pl.BlockSpec((FEAT_RAW, HIDDEN), lambda i: (0, 0)),  # w1    bf16, VMEM-resident
            pl.BlockSpec((1, HIDDEN), lambda i: (0, 0)),         # b1    f32
            pl.BlockSpec((HIDDEN, N_PAD), lambda i: (0, 0)),     # w2    bf16
            pl.BlockSpec((1, N_PAD), lambda i: (0, 0)),          # b2    f32
        ],
        out_specs=pl.BlockSpec((tb, 1), lambda i: (i, 0)),
    )
    return pl.pallas_call(
        policy_kernel,
        out_shape=jax.ShapeDtypeStruct((B, 1), jnp.int32),
        grid_spec=grid_spec,
        compiler_params=pltpu.CompilerParams(
            dimension_semantics=("parallel",),
            # ~31 MiB used at tb=512 (double-buffered f32 x + resident w1);
            # 48 MiB keeps headroom even inside v7x's 64 MiB core.
            vmem_limit_bytes=48 * 1024 * 1024,
        ),
    )(x, mask, w1, b1, w2, b2)


def _round_up(v, m):
    return ((v + m - 1) // m) * m


def pick_batch_tile(B):
    """Batch tile: multiple of 16 (bf16 sublane packing), >=2 tiles whenever
    B > 16 so both v7x TensorCores get work, multiple of EPI_SLAB when large
    (so the epilogue slab loop divides evenly), capped at MAX_TB."""
    if B <= 16:
        return 16
    tb = min(MAX_TB, _round_up(pl.cdiv(B, 2), 16))
    if tb > EPI_SLAB:
        tb = min(MAX_TB, _round_up(tb, EPI_SLAB))
    return tb


def prepare_params(w1, b1, w2, b2):
    """One-time (init-time) weight prep:
      * w1 (5220,256) -> (5796,256) bf16 with zero rows for the dropped
        channels 145..160, so the kernel consumes the un-sliced observation.
      * w2/b2 padded to 256 action lanes (lane-dense logits/argmax)."""
    w1p = jnp.zeros((FEAT_RAW, HIDDEN), jnp.bfloat16).at[:FEAT, :].set(
        jnp.asarray(w1, jnp.bfloat16))
    b1p = jnp.asarray(b1, jnp.float32).reshape(1, HIDDEN)
    w2p = jnp.zeros((HIDDEN, N_PAD), jnp.bfloat16).at[:, :N_ACT].set(
        jnp.asarray(w2, jnp.bfloat16))
    b2p = jnp.zeros((1, N_PAD), jnp.float32).at[:, :N_ACT].set(
        jnp.asarray(b2, jnp.float32).reshape(1, N_ACT))
    return (w1p, b1p, w2p, b2p)


def wrapper_policy_forward(obs_arr, mask_arr, params):
    """JAX equivalent of wrapper_policy.forward((obs_arr, mask_arr)), deterministic."""
    mask = jnp.asarray(mask_arr)
    out_shape = mask.shape[:-1]
    # Pad actions 235 -> 256 and pass as bf16 (halves mask DMA, lane-dense epilogue).
    mask2d = jnp.pad(mask.reshape(-1, N_ACT).astype(jnp.bfloat16),
                     ((0, 0), (0, N_PAD - N_ACT)))

    # No slice/pad/cast pre-pass: reshape is metadata-only, channel slice is
    # folded into w1's zero rows, bf16 cast happens in-kernel.
    x = jnp.asarray(obs_arr, jnp.float32).reshape(-1, FEAT_RAW)

    B = x.shape[0]
    tb = pick_batch_tile(B)
    action = run_policy(x, mask2d, *params, tb=tb)[:, 0]
    return action.reshape(out_shape)


def init_params(key):
    k1, k2, k3, k4 = jax.random.split(key, 4)
    w1 = jax.random.normal(k1, (FEAT, HIDDEN), jnp.float32) * (1.0 / jnp.sqrt(FEAT))
    b1 = jax.random.normal(k2, (1, HIDDEN), jnp.float32) * 0.01
    w2 = jax.random.normal(k3, (HIDDEN, N_ACT), jnp.float32) * (1.0 / jnp.sqrt(HIDDEN))
    b2 = jax.random.normal(k4, (1, N_ACT), jnp.float32) * 0.01
    return (w1, b1, w2, b2)


if __name__ == "__main__":
    key = jax.random.PRNGKey(0)
    kp, ko, km = jax.random.split(key, 3)

    raw_params = init_params(kp)
    params = prepare_params(*raw_params)

    B = 2
    # obs[0]: (B, 161, 4, 9) float observation planes
    obs_arr = jax.random.normal(ko, (B, C_TOTAL, H_SP, W_SP), jnp.float32)
    # obs[1]: (B, 235) boolean legal-action mask; guarantee at least one legal action
    mask_arr = jax.random.bernoulli(km, 0.3, (B, N_ACT))
    mask_arr = mask_arr.at[:, 0].set(True)

    action = wrapper_policy_forward(obs_arr, mask_arr, params)
    action = jax.block_until_ready(action)

    assert action.shape == (B,)
    # 1) chosen actions must be legal under the mask
    assert bool(jnp.all(mask_arr[jnp.arange(B), action]))
    # 2) tolerance-based agreement with an f32 reference of the torch forward
    #    (bf16 in the kernel can only flip near-tie logits).
    w1f, b1f, w2f, b2f = raw_params
    obs_f = obs_arr[:, :C_IN, :, :].reshape(B, FEAT)
    logits_ref = jnp.maximum(obs_f @ w1f + b1f, 0.0) @ w2f + b2f
    logits_ref = logits_ref + (logits_ref.min() - logits_ref.max() - 40.0) * (~mask_arr)
    chosen = logits_ref[jnp.arange(B), action]
    best = jnp.max(logits_ref, axis=-1)
    assert bool(jnp.all(chosen >= best - 1e-2))
    print("KERNEL_OK")
</pallas_src>

<mosaic_0001>
module attributes {stable_mosaic.version = 11 : i64} {
  func.func @policy_kernel(%arg0: i32, %arg1: memref<16x5796xf32, #tpu.memory_space<vmem>>, %arg2: memref<16x256xbf16, #tpu.memory_space<vmem>>, %arg3: memref<5796x256xbf16, #tpu.memory_space<vmem>>, %arg4: memref<1x256xf32, #tpu.memory_space<vmem>>, %arg5: memref<256x256xbf16, #tpu.memory_space<vmem>>, %arg6: memref<1x256xf32, #tpu.memory_space<vmem>>, %arg7: memref<16x1xi32, #tpu.memory_space<vmem>>) attributes {dimension_semantics = [#tpu.dimension_semantics<parallel>], iteration_bounds = array<i64: 1>, scalar_prefetch = 0 : i64, scratch_operands = 0 : i64, tpu.core_type = #tpu.core_type<tc>, window_params = [{transform_indices = @transform_0, window_bounds = array<i64: 16, 5796>}, {transform_indices = @transform_1, window_bounds = array<i64: 16, 256>}, {pipeline_mode = #tpu.pipeline_mode<synchronous>, transform_indices = @transform_2, window_bounds = array<i64: 5796, 256>}, {pipeline_mode = #tpu.pipeline_mode<synchronous>, transform_indices = @transform_3, window_bounds = array<i64: 1, 256>}, {pipeline_mode = #tpu.pipeline_mode<synchronous>, transform_indices = @transform_4, window_bounds = array<i64: 256, 256>}, {pipeline_mode = #tpu.pipeline_mode<synchronous>, transform_indices = @transform_5, window_bounds = array<i64: 1, 256>}, {transform_indices = @transform_6, window_bounds = array<i64: 16, 1>}]} {
    %c0 = arith.constant 0 : index
    %c0_0 = arith.constant 0 : index
    %0 = vector.load %arg1[%c0, %c0_0] : memref<16x5796xf32, #tpu.memory_space<vmem>>, vector<16x5796xf32>
    %1 = arith.truncf %0 : vector<16x5796xf32> to vector<16x5796xbf16>
    %c0_1 = arith.constant 0 : index
    %c0_2 = arith.constant 0 : index
    %2 = vector.load %arg3[%c0_1, %c0_2] : memref<5796x256xbf16, #tpu.memory_space<vmem>>, vector<5796x256xbf16>
    %cst = arith.constant dense<0.000000e+00> : vector<16x256xf32>
    %3 = tpu.matmul %1, %2, %cst {dimension_numbers = #tpu.dot_dimension_numbers<[1], [0], [0], [1], [0, 0, 1, 1], [], []>} : vector<16x5796xbf16>, vector<5796x256xbf16>, vector<16x256xf32> -> vector<16x256xf32>
    %c0_3 = arith.constant 0 : index
    %c0_4 = arith.constant 0 : index
    %4 = vector.load %arg4[%c0_3, %c0_4] : memref<1x256xf32, #tpu.memory_space<vmem>>, vector<1x256xf32>
    %5 = vector.broadcast %4 : vector<1x256xf32> to vector<16x256xf32>
    %6 = arith.addf %3, %5 : vector<16x256xf32>
    %cst_5 = arith.constant 0.000000e+00 : f32
    %7 = vector.broadcast %cst_5 : f32 to vector<16x256xf32>
    %8 = arith.maximumf %6, %7 : vector<16x256xf32>
    %9 = arith.truncf %8 : vector<16x256xf32> to vector<16x256xbf16>
    %c0_6 = arith.constant 0 : index
    %c0_7 = arith.constant 0 : index
    %10 = vector.load %arg5[%c0_6, %c0_7] : memref<256x256xbf16, #tpu.memory_space<vmem>>, vector<256x256xbf16>
    %cst_8 = arith.constant dense<0.000000e+00> : vector<16x256xf32>
    %11 = tpu.matmul %9, %10, %cst_8 {dimension_numbers = #tpu.dot_dimension_numbers<[1], [0], [0], [1], [0, 0, 1, 1], [], []>} : vector<16x256xbf16>, vector<256x256xbf16>, vector<16x256xf32> -> vector<16x256xf32>
    %c0_9 = arith.constant 0 : index
    %c0_10 = arith.constant 0 : index
    %12 = vector.load %arg6[%c0_9, %c0_10] : memref<1x256xf32, #tpu.memory_space<vmem>>, vector<1x256xf32>
    %13 = vector.broadcast %12 : vector<1x256xf32> to vector<16x256xf32>
    %14 = arith.addf %11, %13 : vector<16x256xf32>
    %15 = tpu.iota {dimensions = array<i32: 1>} : vector<16x256xi32>
    %c235_i32 = arith.constant 235 : i32
    %16 = vector.broadcast %c235_i32 : i32 to vector<16x256xi32>
    %17 = arith.cmpi slt, %15, %16 : vector<16x256xi32>
    %cst_11 = arith.constant 3.000000e+38 : f32
    %18 = vector.broadcast %cst_11 : f32 to vector<16x256xf32>
    %19 = arith.select %17, %14, %18 : vector<16x256xi1>, vector<16x256xf32>
    %cst_12 = arith.constant dense<0x7F800000> : vector<16xf32>
    %20 = vector.multi_reduction <minimumf>, %19, %cst_12 [1] : vector<16x256xf32> to vector<16xf32>
    %21 = vector.shape_cast %20 : vector<16xf32> to vector<16x1xf32>
    %cst_13 = arith.constant 0.000000e+00 : f32
    %cst_14 = arith.constant 3.000000e+38 : f32
    %22 = arith.subf %cst_13, %cst_14 : f32
    %23 = vector.broadcast %22 : f32 to vector<16x256xf32>
    %24 = arith.select %17, %14, %23 : vector<16x256xi1>, vector<16x256xf32>
    %cst_15 = arith.constant dense<0xFF800000> : vector<16xf32>
    %25 = vector.multi_reduction <maximumf>, %24, %cst_15 [1] : vector<16x256xf32> to vector<16xf32>
    %26 = vector.shape_cast %25 : vector<16xf32> to vector<16x1xf32>
    %c0_16 = arith.constant 0 : index
    %c0_17 = arith.constant 0 : index
    %27 = vector.load %arg2[%c0_16, %c0_17] : memref<16x256xbf16, #tpu.memory_space<vmem>>, vector<16x256xbf16>
    %cst_18 = arith.constant 0.000000e+00 : bf16
    %28 = vector.broadcast %cst_18 : bf16 to vector<16x256xbf16>
    %29 = arith.cmpf ogt, %27, %28 : vector<16x256xbf16>
    %30 = arith.subf %21, %26 : vector<16x1xf32>
    %cst_19 = arith.constant 4.000000e+01 : f32
    %31 = vector.broadcast %cst_19 : f32 to vector<16x1xf32>
    %32 = arith.subf %30, %31 : vector<16x1xf32>
    %33 = vector.broadcast %32 : vector<16x1xf32> to vector<16x256xf32>
    %34 = arith.addf %14, %33 : vector<16x256xf32>
    %35 = arith.select %29, %14, %34 : vector<16x256xi1>, vector<16x256xf32>
    %cst_20 = arith.constant 0.000000e+00 : f32
    %cst_21 = arith.constant 3.000000e+38 : f32
    %36 = arith.subf %cst_20, %cst_21 : f32
    %37 = vector.broadcast %36 : f32 to vector<16x256xf32>
    %38 = arith.select %17, %35, %37 : vector<16x256xi1>, vector<16x256xf32>
    %cst_22 = arith.constant dense<0xFF800000> : vector<16xf32>
    %39 = vector.multi_reduction <maximumf>, %38, %cst_22 [1] : vector<16x256xf32> to vector<16xf32>
    %40 = vector.shape_cast %39 : vector<16xf32> to vector<16x1xf32>
    %41 = vector.broadcast %40 : vector<16x1xf32> to vector<16x256xf32>
    %42 = arith.cmpf oeq, %38, %41 : vector<16x256xf32>
    %c256_i32 = arith.constant 256 : i32
    %43 = vector.broadcast %c256_i32 : i32 to vector<16x256xi32>
    %44 = arith.select %42, %15, %43 : vector<16x256xi1>, vector<16x256xi32>
    %cst_23 = arith.constant dense<2147483647> : vector<16xi32>
    %45 = vector.multi_reduction <minsi>, %44, %cst_23 [1] : vector<16x256xi32> to vector<16xi32>
    %46 = vector.shape_cast %45 : vector<16xi32> to vector<16x1xi32>
    %c0_24 = arith.constant 0 : index
    %c0_25 = arith.constant 0 : index
    %47 = vector.load %arg7[%c0_24, %c0_25] : memref<16x1xi32, #tpu.memory_space<vmem>>, vector<16x1xi32>
    tpu.vector_store %arg7[%c0_24, %c0_25], %46 {strides = array<i32>} : memref<16x1xi32, #tpu.memory_space<vmem>>, vector<16x1xi32>,
    return
  }
  func.func @transform_0(%arg0: i32) -> (i32, i32) {
    %c0_i32 = arith.constant 0 : i32
    %c0_i32_0 = arith.constant 0 : i32
    return %arg0, %c0_i32 : i32, i32
  }
  func.func @transform_1(%arg0: i32) -> (i32, i32) {
    %c0_i32 = arith.constant 0 : i32
    %c0_i32_0 = arith.constant 0 : i32
    return %arg0, %c0_i32 : i32, i32
  }
  func.func @transform_2(%arg0: i32) -> (i32, i32) {
    %c0_i32 = arith.constant 0 : i32
    %c0_i32_0 = arith.constant 0 : i32
    %c0_i32_1 = arith.constant 0 : i32
    return %c0_i32, %c0_i32_0 : i32, i32
  }
  func.func @transform_3(%arg0: i32) -> (i32, i32) {
    %c0_i32 = arith.constant 0 : i32
    %c0_i32_0 = arith.constant 0 : i32
    %c0_i32_1 = arith.constant 0 : i32
    return %c0_i32, %c0_i32_0 : i32, i32
  }
  func.func @transform_4(%arg0: i32) -> (i32, i32) {
    %c0_i32 = arith.constant 0 : i32
    %c0_i32_0 = arith.constant 0 : i32
    %c0_i32_1 = arith.constant 0 : i32
    return %c0_i32, %c0_i32_0 : i32, i32
  }
  func.func @transform_5(%arg0: i32) -> (i32, i32) {
    %c0_i32 = arith.constant 0 : i32
    %c0_i32_0 = arith.constant 0 : i32
    %c0_i32_1 = arith.constant 0 : i32
    return %c0_i32, %c0_i32_0 : i32, i32
  }
  func.func @transform_6(%arg0: i32) -> (i32, i32) {
    %c0_i32 = arith.constant 0 : i32
    %c0_i32_0 = arith.constant 0 : i32
    return %arg0, %c0_i32 : i32, i32
  }
}

</mosaic_0001>

<llo_original>
// kernel: tpu_custom_call.1
$region0: #{tpu_custom_call.1}
  #allocation0 [shape = 'u32[]', space=smem, size = 0x4, offset = 0x4, fixed_abs, tag = 'smem constant byte address 0x4 - core index']
  #allocation1 [shape = 'u32[144,128]{1,0:T(1,128)}', space=vmem, size = 0x12000, scoped, tag = 'internal scratch']
  %s0 = inlined_call_operand.hbm [shape: f32[2,5796], index: 0, kind: input, shape index: {}]
  %s1 = inlined_call_operand.hbm [shape: bf16[2,256], index: 1, kind: input, shape index: {}]
  %s2 = inlined_call_operand.hbm [shape: bf16[5796,256], index: 2, kind: input, shape index: {}]
  %s3 = inlined_call_operand.hbm [shape: f32[1,256], index: 3, kind: input, shape index: {}]
  %s4 = inlined_call_operand.hbm [shape: bf16[256,256], index: 4, kind: input, shape index: {}]
  %s5 = inlined_call_operand.hbm [shape: f32[1,256], index: 5, kind: input, shape index: {}]
  %s6 = inlined_call_operand.vmem [shape: s32[2,1], index: 6, kind: output, shape index: {}]
  %s7 = sld [smem:[#allocation0]]
  $region88: #{tpu_custom_call.1} parent=0
    _
  %s9 = ssub.s32 1, %s7
  %s10 = scalar_select 0, %s9, %s7
  $region1: #{tpu_custom_call.1} parent=0
    #allocation2 [shape = 'u8[376832]{0}', space=vmem, size = 0x5c000, scoped, tag = 'input window, operand 0, single buffered']
    #allocation3 [shape = 's32[1]{0}', space=sflag, size = 0x4, scoped, tag = 'scoped memory for tpu_custom_call.1']
    #allocation4 [shape = 'u8[8192]{0}', space=vmem, size = 0x2000, scoped, tag = 'input window, operand 1, single buffered']
    #allocation5 [shape = 's32[1]{0}', space=sflag, size = 0x4, scoped, tag = 'scoped memory for tpu_custom_call.1']
    #allocation6 [shape = 'u8[2969600]{0}', space=vmem, size = 0x2d5000, scoped, tag = 'input window, operand 2, single buffered']
    #allocation7 [shape = 'u8[1024]{0}', space=vmem, size = 0x400, scoped, tag = 'input window, operand 3, single buffered']
    #allocation8 [shape = 's32[1]{0}', space=sflag, size = 0x4, scoped, tag = 'scoped memory for tpu_custom_call.1']
    #allocation9 [shape = 'u8[131072]{0}', space=vmem, size = 0x20000, scoped, tag = 'input window, operand 4, single buffered']
    #allocation10 [shape = 'u8[1024]{0}', space=vmem, size = 0x400, scoped, tag = 'input window, operand 5, single buffered']
    #allocation11 [shape = 's32[1]{0}', space=sflag, size = 0x4, scoped, tag = 'scoped memory for tpu_custom_call.1']
    #allocation12 [shape = 'u8[8192]{0}', space=vmem, size = 0x2000, scoped, tag = 'output window, operand 0, single buffered']
    %11 = vsyncpa [#allocation3], 0
    %12 = vsyncpa [#allocation5], 0
    %13 = vsyncpa [#allocation8], 0
    %14 = vsyncpa [#allocation11], 0
    // Predicated region
    $region2: #{tpu_custom_call.1} parent=1 // pred_check
      _
    $region3: #{tpu_custom_call.1} parent=1 // pred_check_branch
      %16 = sbr.rel (0) target = $region5
    $region4: #{tpu_custom_call.1} parent=1 // pred_region
      %s18 = ssub.s32 11776, 1472
      %19 = vsyncadd [#allocation3], %s18
      %s20 = sshll.u32 [#allocation2], 4
      %s21 = int_to_ptr.vmem [resolvable:$true] %s20
      %26 = dma.hbm_to_vmem [thread:$0]  %s0, 1472, %s21, [#allocation3], 1472, 1472, 92
    $region5: #{tpu_custom_call.1} parent=1 // pred_fallthru
      _
    // Predicated region
    $region6: #{tpu_custom_call.1} parent=1 // pred_check
      _
    $region7: #{tpu_custom_call.1} parent=1 // pred_check_branch
      %28 = sbr.rel (0) target = $region9
    $region8: #{tpu_custom_call.1} parent=1 // pred_region
      %s30 = ssub.s32 256, 32
      %31 = vsyncadd [#allocation5], %s30
      %s32 = sshll.u32 [#allocation4], 4
      %s33 = int_to_ptr.vmem [resolvable:$true] %s32
      %38 = dma.hbm_to_vmem [thread:$0]  %s1, 32, %s33, [#allocation5], 32, 32, 2
    $region9: #{tpu_custom_call.1} parent=1 // pred_fallthru
      _
    // Predicated region
    $region10: #{tpu_custom_call.1} parent=1 // pred_check
      _
    $region11: #{tpu_custom_call.1} parent=1 // pred_check_branch
      %40 = sbr.rel (0) target = $region13
    $region12: #{tpu_custom_call.1} parent=1 // pred_region
      %s42 = ssub.s32 92800, 92800
      %43 = vsyncadd [#allocation5], %s42
      %s44 = sshll.u32 [#allocation6], 4
      %s45 = int_to_ptr.vmem [resolvable:$true] %s44
      %50 = dma.hbm_to_vmem [thread:$0]  %s2, 92800, %s45, [#allocation5], 128, 128, 8
    $region13: #{tpu_custom_call.1} parent=1 // pred_fallthru
      _
    // Predicated region
    $region14: #{tpu_custom_call.1} parent=1 // pred_check
      _
    $region15: #{tpu_custom_call.1} parent=1 // pred_check_branch
      %52 = sbr.rel (0) target = $region17
    $region16: #{tpu_custom_call.1} parent=1 // pred_region
      %s54 = ssub.s32 32, 32
      %55 = vsyncadd [#allocation8], %s54
      %s57 = sshll.u32 [#allocation7], 4
      %s58 = int_to_ptr.vmem [resolvable:$true] %s57
      %60 = dma.hbm_to_vmem [thread:$0]  %s3, 32, %s58, [#allocation8]
    $region17: #{tpu_custom_call.1} parent=1 // pred_fallthru
      _
    // Predicated region
    $region18: #{tpu_custom_call.1} parent=1 // pred_check
      _
    $region19: #{tpu_custom_call.1} parent=1 // pred_check_branch
      %62 = sbr.rel (0) target = $region21
    $region20: #{tpu_custom_call.1} parent=1 // pred_region
      %s64 = ssub.s32 4096, 4096
      %65 = vsyncadd [#allocation8], %s64
      %s66 = sshll.u32 [#allocation9], 4
      %s67 = int_to_ptr.vmem [resolvable:$true] %s66
      %72 = dma.hbm_to_vmem [thread:$0]  %s4, 4096, %s67, [#allocation8], 128, 128, 8
    $region21: #{tpu_custom_call.1} parent=1 // pred_fallthru
      _
    // Predicated region
    $region22: #{tpu_custom_call.1} parent=1 // pred_check
      _
    $region23: #{tpu_custom_call.1} parent=1 // pred_check_branch
      %74 = sbr.rel (0) target = $region25
    $region24: #{tpu_custom_call.1} parent=1 // pred_region
      %s76 = ssub.s32 32, 32
      %77 = vsyncadd [#allocation11], %s76
      %s79 = sshll.u32 [#allocation10], 4
      %s80 = int_to_ptr.vmem [resolvable:$true] %s79
      %82 = dma.hbm_to_vmem [thread:$0]  %s5, 32, %s80, [#allocation11]
    $region25: #{tpu_custom_call.1} parent=1 // pred_fallthru
      _
    // Predicated region
    $region26: #{tpu_custom_call.1} parent=1 // pred_check
      _
    $region27: #{tpu_custom_call.1} parent=1 // pred_check_branch
      %84 = sbr.rel (0) target = $region29
    $region28: #{tpu_custom_call.1} parent=1 // pred_region
      %85 = dma.done [#allocation3], 11776
    $region29: #{tpu_custom_call.1} parent=1 // pred_fallthru
      _
    // Predicated region
    $region30: #{tpu_custom_call.1} parent=1 // pred_check
      _
    $region31: #{tpu_custom_call.1} parent=1 // pred_check_branch
      %87 = sbr.rel (0) target = $region33
    $region32: #{tpu_custom_call.1} parent=1 // pred_region
      %88 = dma.done [#allocation5], 256
    $region33: #{tpu_custom_call.1} parent=1 // pred_fallthru
      _
    // Predicated region
    $region34: #{tpu_custom_call.1} parent=1 // pred_check
      _
    $region35: #{tpu_custom_call.1} parent=1 // pred_check_branch
      %90 = sbr.rel (0) target = $region37
    $region36: #{tpu_custom_call.1} parent=1 // pred_region
      %91 = dma.done [#allocation5], 92800
    $region37: #{tpu_custom_call.1} parent=1 // pred_fallthru
      _
    // Predicated region
    $region38: #{tpu_custom_call.1} parent=1 // pred_check
      _
    $region39: #{tpu_custom_call.1} parent=1 // pred_check_branch
      %93 = sbr.rel (0) target = $region41
    $region40: #{tpu_custom_call.1} parent=1 // pred_region
      %94 = dma.done [#allocation8], 32
    $region41: #{tpu_custom_call.1} parent=1 // pred_fallthru
      _
    // Predicated region
    $region42: #{tpu_custom_call.1} parent=1 // pred_check
      _
    $region43: #{tpu_custom_call.1} parent=1 // pred_check_branch
      %96 = sbr.rel (0) target = $region45
    $region44: #{tpu_custom_call.1} parent=1 // pred_region
      %97 = dma.done [#allocation8], 4096
    $region45: #{tpu_custom_call.1} parent=1 // pred_fallthru
      _
    // Predicated region
    $region46: #{tpu_custom_call.1} parent=1 // pred_check
      _
    $region47: #{tpu_custom_call.1} parent=1 // pred_check_branch
      %99 = sbr.rel (0) target = $region49
    $region48: #{tpu_custom_call.1} parent=1 // pred_region
      %100 = dma.done [#allocation11], 32
    $region49: #{tpu_custom_call.1} parent=1 // pred_fallthru
      _
    %v104 = vld [vmem:[#allocation2] sm:$0xff]
    %v105 = vld [vmem:[#allocation2 + $0x8] sm:$0xff]
    %v106 = vld [vmem:[#allocation2 + $0x10] sm:$0xff]
    %v107 = vld [vmem:[#allocation2 + $0x18] sm:$0xff]
    %v108 = vld [vmem:[#allocation2 + $0x20] sm:$0xff]
    %v109 = vld [vmem:[#allocation2 + $0x28] sm:$0xff]
    %v110 = vld [vmem:[#allocation2 + $0x30] sm:$0xff]
    %v111 = vld [vmem:[#allocation2 + $0x38] sm:$0xff]
    %v112 = vld [vmem:[#allocation2 + $0x40] sm:$0xff]
    %v113 = vld [vmem:[#allocation2 + $0x48] sm:$0xff]
    %v114 = vld [vmem:[#allocation2 + $0x50] sm:$0xff]
    %v115 = vld [vmem:[#allocation2 + $0x58] sm:$0xf]
    %v116 = vld [vmem:[#allocation2 + $0x5c] sm:$0xff]
    %v117 = vld [vmem:[#allocation2 + $0x64] sm:$0xff]
    %v118 = vld [vmem:[#allocation2 + $0x6c] sm:$0xff]
    %v119 = vld [vmem:[#allocation2 + $0x74] sm:$0xff]
    %v120 = vld [vmem:[#allocation2 + $0x7c] sm:$0xff]
    %v121 = vld [vmem:[#allocation2 + $0x84] sm:$0xff]
    %v122 = vld [vmem:[#allocation2 + $0x8c] sm:$0xff]
    %v123 = vld [vmem:[#allocation2 + $0x94] sm:$0xff]
    %v124 = vld [vmem:[#allocation2 + $0x9c] sm:$0xff]
    %v125 = vld [vmem:[#allocation2 + $0xa4] sm:$0xff]
    %v126 = vld [vmem:[#allocation2 + $0xac] sm:$0xff]
    %v127 = vld [vmem:[#allocation2 + $0xb4] sm:$0xf]
    %v128 = vld [vmem:[#allocation2 + $0xb8] sm:$0xff]
    %v129 = vld [vmem:[#allocation2 + $0xc0] sm:$0xff]
    %v130 = vld [vmem:[#allocation2 + $0xc8] sm:$0xff]
    %v131 = vld [vmem:[#allocation2 + $0xd0] sm:$0xff]
    %v132 = vld [vmem:[#allocation2 + $0xd8] sm:$0xff]
    %v133 = vld [vmem:[#allocation2 + $0xe0] sm:$0xff]
    %v134 = vld [vmem:[#allocation2 + $0xe8] sm:$0xff]
    %v135 = vld [vmem:[#allocation2 + $0xf0] sm:$0xff]
    %v136 = vld [vmem:[#allocation2 + $0xf8] sm:$0xff]
    %v137 = vld [vmem:[#allocation2 + $0x100] sm:$0xff]
    %v138 = vld [vmem:[#allocation2 + $0x108] sm:$0xff]
    %v139 = vld [vmem:[#allocation2 + $0x110] sm:$0xf]
    %v140 = vld [vmem:[#allocation2 + $0x114] sm:$0xff]
    %v141 = vld [vmem:[#allocation2 + $0x11c] sm:$0xff]
    %v142 = vld [vmem:[#allocation2 + $0x124] sm:$0xff]
    %v143 = vld [vmem:[#allocation2 + $0x12c] sm:$0xff]
    %v144 = vld [vmem:[#allocation2 + $0x134] sm:$0xff]
    %v145 = vld [vmem:[#allocation2 + $0x13c] sm:$0xff]
    %v146 = vld [vmem:[#allocation2 + $0x144] sm:$0xff]
    %v147 = vld [vmem:[#allocation2 + $0x14c] sm:$0xff]
    %v148 = vld [vmem:[#allocation2 + $0x154] sm:$0xff]
    %v149 = vld [vmem:[#allocation2 + $0x15c] sm:$0xff]
    %v150 = vld [vmem:[#allocation2 + $0x164] sm:$0xff]
    %v151 = vld [vmem:[#allocation2 + $0x16c] sm:$0xf]
    %v152 = vld [vmem:[#allocation2 + $0x170] sm:$0xff]
    %v153 = vld [vmem:[#allocation2 + $0x178] sm:$0xff]
    %v154 = vld [vmem:[#allocation2 + $0x180] sm:$0xff]
    %v155 = vld [vmem:[#allocation2 + $0x188] sm:$0xff]
    %v156 = vld [vmem:[#allocation2 + $0x190] sm:$0xff]
    %v157 = vld [vmem:[#allocation2 + $0x198] sm:$0xff]
    %v158 = vld [vmem:[#allocation2 + $0x1a0] sm:$0xff]
    %v159 = vld [vmem:[#allocation2 + $0x1a8] sm:$0xff]
    %v160 = vld [vmem:[#allocation2 + $0x1b0] sm:$0xff]
    %v161 = vld [vmem:[#allocation2 + $0x1b8] sm:$0xff]
    %v162 = vld [vmem:[#allocation2 + $0x1c0] sm:$0xff]
    %v163 = vld [vmem:[#allocation2 + $0x1c8] sm:$0xf]
    %v164 = vld [vmem:[#allocation2 + $0x1cc] sm:$0xff]
    %v165 = vld [vmem:[#allocation2 + $0x1d4] sm:$0xff]
    %v166 = vld [vmem:[#allocation2 + $0x1dc] sm:$0xff]
    %v167 = vld [vmem:[#allocation2 + $0x1e4] sm:$0xff]
    %v168 = vld [vmem:[#allocation2 + $0x1ec] sm:$0xff]
    %v169 = vld [vmem:[#allocation2 + $0x1f4] sm:$0xff]
    %v170 = vld [vmem:[#allocation2 + $0x1fc] sm:$0xff]
    %v171 = vld [vmem:[#allocation2 + $0x204] sm:$0xff]
    %v172 = vld [vmem:[#allocation2 + $0x20c] sm:$0xff]
    %v173 = vld [vmem:[#allocation2 + $0x214] sm:$0xff]
    %v174 = vld [vmem:[#allocation2 + $0x21c] sm:$0xff]
    %v175 = vld [vmem:[#allocation2 + $0x224] sm:$0xf]
    %v176 = vld [vmem:[#allocation2 + $0x228] sm:$0xff]
    %v177 = vld [vmem:[#allocation2 + $0x230] sm:$0xff]
    %v178 = vld [vmem:[#allocation2 + $0x238] sm:$0xff]
    %v179 = vld [vmem:[#allocation2 + $0x240] sm:$0xff]
    %v180 = vld [vmem:[#allocation2 + $0x248] sm:$0xff]
    %v181 = vld [vmem:[#allocation2 + $0x250] sm:$0xff]
    %v182 = vld [vmem:[#allocation2 + $0x258] sm:$0xff]
    %v183 = vld [vmem:[#allocation2 + $0x260] sm:$0xff]
    %v184 = vld [vmem:[#allocation2 + $0x268] sm:$0xff]
    %v185 = vld [vmem:[#allocation2 + $0x270] sm:$0xff]
    %v186 = vld [vmem:[#allocation2 + $0x278] sm:$0xff]
    %v187 = vld [vmem:[#allocation2 + $0x280] sm:$0xf]
    %v188 = vld [vmem:[#allocation2 + $0x284] sm:$0xff]
    %v189 = vld [vmem:[#allocation2 + $0x28c] sm:$0xff]
    %v190 = vld [vmem:[#allocation2 + $0x294] sm:$0xff]
    %v191 = vld [vmem:[#allocation2 + $0x29c] sm:$0xff]
    %v192 = vld [vmem:[#allocation2 + $0x2a4] sm:$0xff]
    %v193 = vld [vmem:[#allocation2 + $0x2ac] sm:$0xff]
    %v194 = vld [vmem:[#allocation2 + $0x2b4] sm:$0xff]
    %v195 = vld [vmem:[#allocation2 + $0x2bc] sm:$0xff]
    %v196 = vld [vmem:[#allocation2 + $0x2c4] sm:$0xff]
    %v197 = vld [vmem:[#allocation2 + $0x2cc] sm:$0xff]
    %v198 = vld [vmem:[#allocation2 + $0x2d4] sm:$0xff]
    %v199 = vld [vmem:[#allocation2 + $0x2dc] sm:$0xf]
    %v296 = vcombine.low %v104, %v116
    %v297 = vcombine.high %v104, %v116
    %v298 = vcombine.low %v128, %v140
    %v299 = vcombine.high %v128, %v140
    %v301 = vunpack.c.l.s4 1983009808
    %v302 = vunpack.c.0.s8 %v301
    %v303 = vlaneseq
    %v304 = vshrl.u32 %v303, 7
    %v305 = vsub.s32 %v302, %v304
    %v306 = vrot.slane %v296, %v305
    %v308 = vunpack.c.l.s4 1983009808
    %v309 = vunpack.c.0.s8 %v308
    %v310 = vlaneseq
    %v311 = vshrl.u32 %v310, 7
    %v312 = vsub.s32 %v309, %v311
    %v313 = vrot.slane %v297, %v312
    %v315 = vunpack.c.l.s4 1983009808
    %v316 = vunpack.c.0.s8 %v315
    %v317 = vlaneseq
    %v318 = vshrl.u32 %v317, 7
    %v319 = vsub.s32 %v316, %v318
    %v320 = vrot.slane %v298, %v319
    %v322 = vunpack.c.l.s4 1983009808
    %v323 = vunpack.c.0.s8 %v322
    %v324 = vlaneseq
    %v325 = vshrl.u32 %v324, 7
    %v326 = vsub.s32 %v323, %v325
    %v327 = vrot.slane %v299, %v326
    %v328 = vcombine.low %v306, %v320
    %v329 = vcombine.high %v306, %v320
    %v330 = vcombine.low %v313, %v327
    %v331 = vcombine.high %v313, %v327
    %v332 = vcombine.low %v105, %v117
    %v333 = vcombine.high %v105, %v117
    %v334 = vcombine.low %v129, %v141
    %v335 = vcombine.high %v129, %v141
    %v337 = vunpack.c.l.s4 1983009808
    %v338 = vunpack.c.0.s8 %v337
    %v339 = vlaneseq
    %v340 = vshrl.u32 %v339, 7
    %v341 = vsub.s32 %v338, %v340
    %v342 = vrot.slane %v332, %v341
    %v344 = vunpack.c.l.s4 1983009808
    %v345 = vunpack.c.0.s8 %v344
    %v346 = vlaneseq
    %v347 = vshrl.u32 %v346, 7
    %v348 = vsub.s32 %v345, %v347
    %v349 = vrot.slane %v333, %v348
    %v351 = vunpack.c.l.s4 1983009808
    %v352 = vunpack.c.0.s8 %v351
    %v353 = vlaneseq
    %v354 = vshrl.u32 %v353, 7
    %v355 = vsub.s32 %v352, %v354
    %v356 = vrot.slane %v334, %v355
    %v358 = vunpack.c.l.s4 1983009808
    %v359 = vunpack.c.0.s8 %v358
    %v360 = vlaneseq
    %v361 = vshrl.u32 %v360, 7
    %v362 = vsub.s32 %v359, %v361
    %v363 = vrot.slane %v335, %v362
    %v364 = vcombine.low %v342, %v356
    %v365 = vcombine.high %v342, %v356
    %v366 = vcombine.low %v349, %v363
    %v367 = vcombine.high %v349, %v363
    %v368 = vcombine.low %v106, %v118
    %v369 = vcombine.high %v106, %v118
    %v370 = vcombine.low %v130, %v142
    %v371 = vcombine.high %v130, %v142
    %v373 = vunpack.c.l.s4 1983009808
    %v374 = vunpack.c.0.s8 %v373
    %v375 = vlaneseq
    %v376 = vshrl.u32 %v375, 7
    %v377 = vsub.s32 %v374, %v376
    %v378 = vrot.slane %v368, %v377
    %v380 = vunpack.c.l.s4 1983009808
    %v381 = vunpack.c.0.s8 %v380
    %v382 = vlaneseq
    %v383 = vshrl.u32 %v382, 7
    %v384 = vsub.s32 %v381, %v383
    %v385 = vrot.slane %v369, %v384
    %v387 = vunpack.c.l.s4 1983009808
    %v388 = vunpack.c.0.s8 %v387
    %v389 = vlaneseq
    %v390 = vshrl.u32 %v389, 7
    %v391 = vsub.s32 %v388, %v390
    %v392 = vrot.slane %v370, %v391
    %v394 = vunpack.c.l.s4 1983009808
    %v395 = vunpack.c.0.s8 %v394
    %v396 = vlaneseq
    %v397 = vshrl.u32 %v396, 7
    %v398 = vsub.s32 %v395, %v397
    %v399 = vrot.slane %v371, %v398
    %v400 = vcombine.low %v378, %v392
    %v401 = vcombine.high %v378, %v392
    %v402 = vcombine.low %v385, %v399
    %v403 = vcombine.high %v385, %v399
    %v404 = vcombine.low %v107, %v119
    %v405 = vcombine.high %v107, %v119
    %v406 = vcombine.low %v131, %v143
    %v407 = vcombine.high %v131, %v143
    %v409 = vunpack.c.l.s4 1983009808
    %v410 = vunpack.c.0.s8 %v409
    %v411 = vlaneseq
    %v412 = vshrl.u32 %v411, 7
    %v413 = vsub.s32 %v410, %v412
    %v414 = vrot.slane %v404, %v413
    %v416 = vunpack.c.l.s4 1983009808
    %v417 = vunpack.c.0.s8 %v416
    %v418 = vlaneseq
    %v419 = vshrl.u32 %v418, 7
    %v420 = vsub.s32 %v417, %v419
    %v421 = vrot.slane %v405, %v420
    %v423 = vunpack.c.l.s4 1983009808
    %v424 = vunpack.c.0.s8 %v423
    %v425 = vlaneseq
    %v426 = vshrl.u32 %v425, 7
    %v427 = vsub.s32 %v424, %v426
    %v428 = vrot.slane %v406, %v427
    %v430 = vunpack.c.l.s4 1983009808
    %v431 = vunpack.c.0.s8 %v430
    %v432 = vlaneseq
    %v433 = vshrl.u32 %v432, 7
    %v434 = vsub.s32 %v431, %v433
    %v435 = vrot.slane %v407, %v434
    %v436 = vcombine.low %v414, %v428
    %v437 = vcombine.high %v414, %v428
    %v438 = vcombine.low %v421, %v435
    %v439 = vcombine.high %v421, %v435
    %v440 = vcombine.low %v108, %v120
    %v441 = vcombine.high %v108, %v120
    %v442 = vcombine.low %v132, %v144
    %v443 = vcombine.high %v132, %v144
    %v445 = vunpack.c.l.s4 1983009808
    %v446 = vunpack.c.0.s8 %v445
    %v447 = vlaneseq
    %v448 = vshrl.u32 %v447, 7
    %v449 = vsub.s32 %v446, %v448
    %v450 = vrot.slane %v440, %v449
    %v452 = vunpack.c.l.s4 1983009808
    %v453 = vunpack.c.0.s8 %v452
    %v454 = vlaneseq
    %v455 = vshrl.u32 %v454, 7
    %v456 = vsub.s32 %v453, %v455
    %v457 = vrot.slane %v441, %v456
    %v459 = vunpack.c.l.s4 1983009808
    %v460 = vunpack.c.0.s8 %v459
    %v461 = vlaneseq
    %v462 = vshrl.u32 %v461, 7
    %v463 = vsub.s32 %v460, %v462
    %v464 = vrot.slane %v442, %v463
    %v466 = vunpack.c.l.s4 1983009808
    %v467 = vunpack.c.0.s8 %v466
    %v468 = vlaneseq
    %v469 = vshrl.u32 %v468, 7
    %v470 = vsub.s32 %v467, %v469
    %v471 = vrot.slane %v443, %v470
    %v472 = vcombine.low %v450, %v464
    %v473 = vcombine.high %v450, %v464
    %v474 = vcombine.low %v457, %v471
    %v475 = vcombine.high %v457, %v471
    %v476 = vcombine.low %v109, %v121
    %v477 = vcombine.high %v109, %v121
    %v478 = vcombine.low %v133, %v145
    %v479 = vcombine.high %v133, %v145
    %v481 = vunpack.c.l.s4 1983009808
    %v482 = vunpack.c.0.s8 %v481
    %v483 = vlaneseq
    %v484 = vshrl.u32 %v483, 7
    %v485 = vsub.s32 %v482, %v484
    %v486 = vrot.slane %v476, %v485
    %v488 = vunpack.c.l.s4 1983009808
    %v489 = vunpack.c.0.s8 %v488
    %v490 = vlaneseq
    %v491 = vshrl.u32 %v490, 7
    %v492 = vsub.s32 %v489, %v491
    %v493 = vrot.slane %v477, %v492
    %v495 = vunpack.c.l.s4 1983009808
    %v496 = vunpack.c.0.s8 %v495
    %v497 = vlaneseq
    %v498 = vshrl.u32 %v497, 7
    %v499 = vsub.s32 %v496, %v498
    %v500 = vrot.slane %v478, %v499
    %v502 = vunpack.c.l.s4 1983009808
    %v503 = vunpack.c.0.s8 %v502
    %v504 = vlaneseq
    %v505 = vshrl.u32 %v504, 7
    %v506 = vsub.s32 %v503, %v505
    %v507 = vrot.slane %v479, %v506
    %v508 = vcombine.low %v486, %v500
    %v509 = vcombine.high %v486, %v500
    %v510 = vcombine.low %v493, %v507
    %v511 = vcombine.high %v493, %v507
    %v512 = vcombine.low %v110, %v122
    %v513 = vcombine.high %v110, %v122
    %v514 = vcombine.low %v134, %v146
    %v515 = vcombine.high %v134, %v146
    %v517 = vunpack.c.l.s4 1983009808
    %v518 = vunpack.c.0.s8 %v517
    %v519 = vlaneseq
    %v520 = vshrl.u32 %v519, 7
    %v521 = vsub.s32 %v518, %v520
    %v522 = vrot.slane %v512, %v521
    %v524 = vunpack.c.l.s4 1983009808
    %v525 = vunpack.c.0.s8 %v524
    %v526 = vlaneseq
    %v527 = vshrl.u32 %v526, 7
    %v528 = vsub.s32 %v525, %v527
    %v529 = vrot.slane %v513, %v528
    %v531 = vunpack.c.l.s4 1983009808
    %v532 = vunpack.c.0.s8 %v531
    %v533 = vlaneseq
    %v534 = vshrl.u32 %v533, 7
    %v535 = vsub.s32 %v532, %v534
    %v536 = vrot.slane %v514, %v535
    %v538 = vunpack.c.l.s4 1983009808
    %v539 = vunpack.c.0.s8 %v538
    %v540 = vlaneseq
    %v541 = vshrl.u32 %v540, 7
    %v542 = vsub.s32 %v539, %v541
    %v543 = vrot.slane %v515, %v542
    %v544 = vcombine.low %v522, %v536
    %v545 = vcombine.high %v522, %v536
    %v546 = vcombine.low %v529, %v543
    %v547 = vcombine.high %v529, %v543
    %v548 = vcombine.low %v111, %v123
    %v549 = vcombine.high %v111, %v123
    %v550 = vcombine.low %v135, %v147
    %v551 = vcombine.high %v135, %v147
    %v553 = vunpack.c.l.s4 1983009808
    %v554 = vunpack.c.0.s8 %v553
    %v555 = vlaneseq
    %v556 = vshrl.u32 %v555, 7
    %v557 = vsub.s32 %v554, %v556
    %v558 = vrot.slane %v548, %v557
    %v560 = vunpack.c.l.s4 1983009808
    %v561 = vunpack.c.0.s8 %v560
    %v562 = vlaneseq
    %v563 = vshrl.u32 %v562, 7
    %v564 = vsub.s32 %v561, %v563
    %v565 = vrot.slane %v549, %v564
    %v567 = vunpack.c.l.s4 1983009808
    %v568 = vunpack.c.0.s8 %v567
    %v569 = vlaneseq
    %v570 = vshrl.u32 %v569, 7
    %v571 = vsub.s32 %v568, %v570
    %v572 = vrot.slane %v550, %v571
    %v574 = vunpack.c.l.s4 1983009808
    %v575 = vunpack.c.0.s8 %v574
    %v576 = vlaneseq
    %v577 = vshrl.u32 %v576, 7
    %v578 = vsub.s32 %v575, %v577
    %v579 = vrot.slane %v551, %v578
    %v580 = vcombine.low %v558, %v572
    %v581 = vcombine.high %v558, %v572
    %v582 = vcombine.low %v565, %v579
    %v583 = vcombine.high %v565, %v579
    %v584 = vcombine.low %v112, %v124
    %v585 = vcombine.high %v112, %v124
    %v586 = vcombine.low %v136, %v148
    %v587 = vcombine.high %v136, %v148
    %v589 = vunpack.c.l.s4 1983009808
    %v590 = vunpack.c.0.s8 %v589
    %v591 = vlaneseq
    %v592 = vshrl.u32 %v591, 7
    %v593 = vsub.s32 %v590, %v592
    %v594 = vrot.slane %v584, %v593
    %v596 = vunpack.c.l.s4 1983009808
    %v597 = vunpack.c.0.s8 %v596
    %v598 = vlaneseq
    %v599 = vshrl.u32 %v598, 7
    %v600 = vsub.s32 %v597, %v599
    %v601 = vrot.slane %v585, %v600
    %v603 = vunpack.c.l.s4 1983009808
    %v604 = vunpack.c.0.s8 %v603
    %v605 = vlaneseq
    %v606 = vshrl.u32 %v605, 7
    %v607 = vsub.s32 %v604, %v606
    %v608 = vrot.slane %v586, %v607
    %v610 = vunpack.c.l.s4 1983009808
    %v611 = vunpack.c.0.s8 %v610
    %v612 = vlaneseq
    %v613 = vshrl.u32 %v612, 7
    %v614 = vsub.s32 %v611, %v613
    %v615 = vrot.slane %v587, %v614
    %v616 = vcombine.low %v594, %v608
    %v617 = vcombine.high %v594, %v608
    %v618 = vcombine.low %v601, %v615
    %v619 = vcombine.high %v601, %v615
    %v620 = vcombine.low %v113, %v125
    %v621 = vcombine.high %v113, %v125
    %v622 = vcombine.low %v137, %v149
    %v623 = vcombine.high %v137, %v149
    %v625 = vunpack.c.l.s4 1983009808
    %v626 = vunpack.c.0.s8 %v625
    %v627 = vlaneseq
    %v628 = vshrl.u32 %v627, 7
    %v629 = vsub.s32 %v626, %v628
    %v630 = vrot.slane %v620, %v629
    %v632 = vunpack.c.l.s4 1983009808
    %v633 = vunpack.c.0.s8 %v632
    %v634 = vlaneseq
    %v635 = vshrl.u32 %v634, 7
    %v636 = vsub.s32 %v633, %v635
    %v637 = vrot.slane %v621, %v636
    %v639 = vunpack.c.l.s4 1983009808
    %v640 = vunpack.c.0.s8 %v639
    %v641 = vlaneseq
    %v642 = vshrl.u32 %v641, 7
    %v643 = vsub.s32 %v640, %v642
    %v644 = vrot.slane %v622, %v643
    %v646 = vunpack.c.l.s4 1983009808
    %v647 = vunpack.c.0.s8 %v646
    %v648 = vlaneseq
    %v649 = vshrl.u32 %v648, 7
    %v650 = vsub.s32 %v647, %v649
    %v651 = vrot.slane %v623, %v650
    %v652 = vcombine.low %v630, %v644
    %v653 = vcombine.high %v630, %v644
    %v654 = vcombine.low %v637, %v651
    %v655 = vcombine.high %v637, %v651
    %v656 = vcombine.low %v114, %v126
    %v657 = vcombine.high %v114, %v126
    %v658 = vcombine.low %v138, %v150
    %v659 = vcombine.high %v138, %v150
    %v661 = vunpack.c.l.s4 1983009808
    %v662 = vunpack.c.0.s8 %v661
    %v663 = vlaneseq
    %v664 = vshrl.u32 %v663, 7
    %v665 = vsub.s32 %v662, %v664
    %v666 = vrot.slane %v656, %v665
    %v668 = vunpack.c.l.s4 1983009808
    %v669 = vunpack.c.0.s8 %v668
    %v670 = vlaneseq
    %v671 = vshrl.u32 %v670, 7
    %v672 = vsub.s32 %v669, %v671
    %v673 = vrot.slane %v657, %v672
    %v675 = vunpack.c.l.s4 1983009808
    %v676 = vunpack.c.0.s8 %v675
    %v677 = vlaneseq
    %v678 = vshrl.u32 %v677, 7
    %v679 = vsub.s32 %v676, %v678
    %v680 = vrot.slane %v658, %v679
    %v682 = vunpack.c.l.s4 1983009808
    %v683 = vunpack.c.0.s8 %v682
    %v684 = vlaneseq
    %v685 = vshrl.u32 %v684, 7
    %v686 = vsub.s32 %v683, %v685
    %v687 = vrot.slane %v659, %v686
    %v688 = vcombine.low %v666, %v680
    %v689 = vcombine.high %v666, %v680
    %v690 = vcombine.low %v673, %v687
    %v691 = vcombine.high %v673, %v687
    %v692 = vcombine.low %v115, %v127
    %v693 = vcombine.low %v139, %v151
    %v695 = vunpack.c.l.s4 1983009808
    %v696 = vunpack.c.0.s8 %v695
    %v697 = vlaneseq
    %v698 = vshrl.u32 %v697, 7
    %v699 = vsub.s32 %v696, %v698
    %v700 = vrot.slane %v692, %v699
    %v702 = vunpack.c.l.s4 1983009808
    %v703 = vunpack.c.0.s8 %v702
    %v704 = vlaneseq
    %v705 = vshrl.u32 %v704, 7
    %v706 = vsub.s32 %v703, %v705
    %v707 = vrot.slane %v693, %v706
    %v708 = vcombine.low %v700, %v707
    %v709 = vcombine.high %v700, %v707
    %v710 = vcombine.low %v152, %v164
    %v711 = vcombine.high %v152, %v164
    %v712 = vcombine.low %v176, %v188
    %v713 = vcombine.high %v176, %v188
    %v715 = vunpack.c.l.s4 1983009808
    %v716 = vunpack.c.0.s8 %v715
    %v717 = vlaneseq
    %v718 = vshrl.u32 %v717, 7
    %v719 = vsub.s32 %v716, %v718
    %v720 = vrot.slane %v710, %v719
    %v722 = vunpack.c.l.s4 1983009808
    %v723 = vunpack.c.0.s8 %v722
    %v724 = vlaneseq
    %v725 = vshrl.u32 %v724, 7
    %v726 = vsub.s32 %v723, %v725
    %v727 = vrot.slane %v711, %v726
    %v729 = vunpack.c.l.s4 1983009808
    %v730 = vunpack.c.0.s8 %v729
    %v731 = vlaneseq
    %v732 = vshrl.u32 %v731, 7
    %v733 = vsub.s32 %v730, %v732
    %v734 = vrot.slane %v712, %v733
    %v736 = vunpack.c.l.s4 1983009808
    %v737 = vunpack.c.0.s8 %v736
    %v738 = vlaneseq
    %v739 = vshrl.u32 %v738, 7
    %v740 = vsub.s32 %v737, %v739
    %v741 = vrot.slane %v713, %v740
    %v742 = vcombine.low %v720, %v734
    %v743 = vcombine.high %v720, %v734
    %v744 = vcombine.low %v727, %v741
    %v745 = vcombine.high %v727, %v741
    %v746 = vcombine.low %v153, %v165
    %v747 = vcombine.high %v153, %v165
    %v748 = vcombine.low %v177, %v189
    %v749 = vcombine.high %v177, %v189
    %v751 = vunpack.c.l.s4 1983009808
    %v752 = vunpack.c.0.s8 %v751
    %v753 = vlaneseq
    %v754 = vshrl.u32 %v753, 7
    %v755 = vsub.s32 %v752, %v754
    %v756 = vrot.slane %v746, %v755
    %v758 = vunpack.c.l.s4 1983009808
    %v759 = vunpack.c.0.s8 %v758
    %v760 = vlaneseq
    %v761 = vshrl.u32 %v760, 7
    %v762 = vsub.s32 %v759, %v761
    %v763 = vrot.slane %v747, %v762
    %v765 = vunpack.c.l.s4 1983009808
    %v766 = vunpack.c.0.s8 %v765
    %v767 = vlaneseq
    %v768 = vshrl.u32 %v767, 7
    %v769 = vsub.s32 %v766, %v768
    %v770 = vrot.slane %v748, %v769
    %v772 = vunpack.c.l.s4 1983009808
    %v773 = vunpack.c.0.s8 %v772
    %v774 = vlaneseq
    %v775 = vshrl.u32 %v774, 7
    %v776 = vsub.s32 %v773, %v775
    %v777 = vrot.slane %v749, %v776
    %v778 = vcombine.low %v756, %v770
    %v779 = vcombine.high %v756, %v770
    %v780 = vcombine.low %v763, %v777
    %v781 = vcombine.high %v763, %v777
    %v782 = vcombine.low %v154, %v166
    %v783 = vcombine.high %v154, %v166
    %v784 = vcombine.low %v178, %v190
    %v785 = vcombine.high %v178, %v190
    %v787 = vunpack.c.l.s4 1983009808
    %v788 = vunpack.c.0.s8 %v787
    %v789 = vlaneseq
    %v790 = vshrl.u32 %v789, 7
    %v791 = vsub.s32 %v788, %v790
    %v792 = vrot.slane %v782, %v791
    %v794 = vunpack.c.l.s4 1983009808
    %v795 = vunpack.c.0.s8 %v794
    %v796 = vlaneseq
    %v797 = vshrl.u32 %v796, 7
    %v798 = vsub.s32 %v795, %v797
    %v799 = vrot.slane %v783, %v798
    %v801 = vunpack.c.l.s4 1983009808
    %v802 = vunpack.c.0.s8 %v801
    %v803 = vlaneseq
    %v804 = vshrl.u32 %v803, 7
    %v805 = vsub.s32 %v802, %v804
    %v806 = vrot.slane %v784, %v805
    %v808 = vunpack.c.l.s4 1983009808
    %v809 = vunpack.c.0.s8 %v808
    %v810 = vlaneseq
    %v811 = vshrl.u32 %v810, 7
    %v812 = vsub.s32 %v809, %v811
    %v813 = vrot.slane %v785, %v812
    %v814 = vcombine.low %v792, %v806
    %v815 = vcombine.high %v792, %v806
    %v816 = vcombine.low %v799, %v813
    %v817 = vcombine.high %v799, %v813
    %v818 = vcombine.low %v155, %v167
    %v819 = vcombine.high %v155, %v167
    %v820 = vcombine.low %v179, %v191
    %v821 = vcombine.high %v179, %v191
    %v823 = vunpack.c.l.s4 1983009808
    %v824 = vunpack.c.0.s8 %v823
    %v825 = vlaneseq
    %v826 = vshrl.u32 %v825, 7
    %v827 = vsub.s32 %v824, %v826
    %v828 = vrot.slane %v818, %v827
    %v830 = vunpack.c.l.s4 1983009808
    %v831 = vunpack.c.0.s8 %v830
    %v832 = vlaneseq
    %v833 = vshrl.u32 %v832, 7
    %v834 = vsub.s32 %v831, %v833
    %v835 = vrot.slane %v819, %v834
    %v837 = vunpack.c.l.s4 1983009808
    %v838 = vunpack.c.0.s8 %v837
    %v839 = vlaneseq
    %v840 = vshrl.u32 %v839, 7
    %v841 = vsub.s32 %v838, %v840
    %v842 = vrot.slane %v820, %v841
    %v844 = vunpack.c.l.s4 1983009808
    %v845 = vunpack.c.0.s8 %v844
    %v846 = vlaneseq
    %v847 = vshrl.u32 %v846, 7
    %v848 = vsub.s32 %v845, %v847
    %v849 = vrot.slane %v821, %v848
    %v850 = vcombine.low %v828, %v842
    %v851 = vcombine.high %v828, %v842
    %v852 = vcombine.low %v835, %v849
    %v853 = vcombine.high %v835, %v849
    %v854 = vcombine.low %v156, %v168
    %v855 = vcombine.high %v156, %v168
    %v856 = vcombine.low %v180, %v192
    %v857 = vcombine.high %v180, %v192
    %v859 = vunpack.c.l.s4 1983009808
    %v860 = vunpack.c.0.s8 %v859
    %v861 = vlaneseq
    %v862 = vshrl.u32 %v861, 7
    %v863 = vsub.s32 %v860, %v862
    %v864 = vrot.slane %v854, %v863
    %v866 = vunpack.c.l.s4 1983009808
    %v867 = vunpack.c.0.s8 %v866
    %v868 = vlaneseq
    %v869 = vshrl.u32 %v868, 7
    %v870 = vsub.s32 %v867, %v869
    %v871 = vrot.slane %v855, %v870
    %v873 = vunpack.c.l.s4 1983009808
    %v874 = vunpack.c.0.s8 %v873
    %v875 = vlaneseq
    %v876 = vshrl.u32 %v875, 7
    %v877 = vsub.s32 %v874, %v876
    %v878 = vrot.slane %v856, %v877
    %v880 = vunpack.c.l.s4 1983009808
    %v881 = vunpack.c.0.s8 %v880
    %v882 = vlaneseq
    %v883 = vshrl.u32 %v882, 7
    %v884 = vsub.s32 %v881, %v883
    %v885 = vrot.slane %v857, %v884
    %v886 = vcombine.low %v864, %v878
    %v887 = vcombine.high %v864, %v878
    %v888 = vcombine.low %v871, %v885
    %v889 = vcombine.high %v871, %v885
    %v890 = vcombine.low %v157, %v169
    %v891 = vcombine.high %v157, %v169
    %v892 = vcombine.low %v181, %v193
    %v893 = vcombine.high %v181, %v193
    %v895 = vunpack.c.l.s4 1983009808
    %v896 = vunpack.c.0.s8 %v895
    %v897 = vlaneseq
    %v898 = vshrl.u32 %v897, 7
    %v899 = vsub.s32 %v896, %v898
    %v900 = vrot.slane %v890, %v899
    %v902 = vunpack.c.l.s4 1983009808
    %v903 = vunpack.c.0.s8 %v902
    %v904 = vlaneseq
    %v905 = vshrl.u32 %v904, 7
    %v906 = vsub.s32 %v903, %v905
    %v907 = vrot.slane %v891, %v906
    %v909 = vunpack.c.l.s4 1983009808
    %v910 = vunpack.c.0.s8 %v909
    %v911 = vlaneseq
    %v912 = vshrl.u32 %v911, 7
    %v913 = vsub.s32 %v910, %v912
    %v914 = vrot.slane %v892, %v913
    %v916 = vunpack.c.l.s4 1983009808
    %v917 = vunpack.c.0.s8 %v916
    %v918 = vlaneseq
    %v919 = vshrl.u32 %v918, 7
    %v920 = vsub.s32 %v917, %v919
    %v921 = vrot.slane %v893, %v920
    %v922 = vcombine.low %v900, %v914
    %v923 = vcombine.high %v900, %v914
    %v924 = vcombine.low %v907, %v921
    %v925 = vcombine.high %v907, %v921
    %v926 = vcombine.low %v158, %v170
    %v927 = vcombine.high %v158, %v170
    %v928 = vcombine.low %v182, %v194
    %v929 = vcombine.high %v182, %v194
    %v931 = vunpack.c.l.s4 1983009808
    %v932 = vunpack.c.0.s8 %v931
    %v933 = vlaneseq
    %v934 = vshrl.u32 %v933, 7
    %v935 = vsub.s32 %v932, %v934
    %v936 = vrot.slane %v926, %v935
    %v938 = vunpack.c.l.s4 1983009808
    %v939 = vunpack.c.0.s8 %v938
    %v940 = vlaneseq
    %v941 = vshrl.u32 %v940, 7
    %v942 = vsub.s32 %v939, %v941
    %v943 = vrot.slane %v927, %v942
    %v945 = vunpack.c.l.s4 1983009808
    %v946 = vunpack.c.0.s8 %v945
    %v947 = vlaneseq
    %v948 = vshrl.u32 %v947, 7
    %v949 = vsub.s32 %v946, %v948
    %v950 = vrot.slane %v928, %v949
    %v952 = vunpack.c.l.s4 1983009808
    %v953 = vunpack.c.0.s8 %v952
    %v954 = vlaneseq
    %v955 = vshrl.u32 %v954, 7
    %v956 = vsub.s32 %v953, %v955
    %v957 = vrot.slane %v929, %v956
    %v958 = vcombine.low %v936, %v950
    %v959 = vcombine.high %v936, %v950
    %v960 = vcombine.low %v943, %v957
    %v961 = vcombine.high %v943, %v957
    %v962 = vcombine.low %v159, %v171
    %v963 = vcombine.high %v159, %v171
    %v964 = vcombine.low %v183, %v195
    %v965 = vcombine.high %v183, %v195
    %v967 = vunpack.c.l.s4 1983009808
    %v968 = vunpack.c.0.s8 %v967
    %v969 = vlaneseq
    %v970 = vshrl.u32 %v969, 7
    %v971 = vsub.s32 %v968, %v970
    %v972 = vrot.slane %v962, %v971
    %v974 = vunpack.c.l.s4 1983009808
    %v975 = vunpack.c.0.s8 %v974
    %v976 = vlaneseq
    %v977 = vshrl.u32 %v976, 7
    %v978 = vsub.s32 %v975, %v977
    %v979 = vrot.slane %v963, %v978
    %v981 = vunpack.c.l.s4 1983009808
    %v982 = vunpack.c.0.s8 %v981
    %v983 = vlaneseq
    %v984 = vshrl.u32 %v983, 7
    %v985 = vsub.s32 %v982, %v984
    %v986 = vrot.slane %v964, %v985
    %v988 = vunpack.c.l.s4 1983009808
    %v989 = vunpack.c.0.s8 %v988
    %v990 = vlaneseq
    %v991 = vshrl.u32 %v990, 7
    %v992 = vsub.s32 %v989, %v991
    %v993 = vrot.slane %v965, %v992
    %v994 = vcombine.low %v972, %v986
    %v995 = vcombine.high %v972, %v986
    %v996 = vcombine.low %v979, %v993
    %v997 = vcombine.high %v979, %v993
    %v998 = vcombine.low %v160, %v172
    %v999 = vcombine.high %v160, %v172
    %v1000 = vcombine.low %v184, %v196
    %v1001 = vcombine.high %v184, %v196
    %v1003 = vunpack.c.l.s4 1983009808
    %v1004 = vunpack.c.0.s8 %v1003
    %v1005 = vlaneseq
    %v1006 = vshrl.u32 %v1005, 7
    %v1007 = vsub.s32 %v1004, %v1006
    %v1008 = vrot.slane %v998, %v1007
    %v1010 = vunpack.c.l.s4 1983009808
    %v1011 = vunpack.c.0.s8 %v1010
    %v1012 = vlaneseq
    %v1013 = vshrl.u32 %v1012, 7
    %v1014 = vsub.s32 %v1011, %v1013
    %v1015 = vrot.slane %v999, %v1014
    %v1017 = vunpack.c.l.s4 1983009808
    %v1018 = vunpack.c.0.s8 %v1017
    %v1019 = vlaneseq
    %v1020 = vshrl.u32 %v1019, 7
    %v1021 = vsub.s32 %v1018, %v1020
    %v1022 = vrot.slane %v1000, %v1021
    %v1024 = vunpack.c.l.s4 1983009808
    %v1025 = vunpack.c.0.s8 %v1024
    %v1026 = vlaneseq
    %v1027 = vshrl.u32 %v1026, 7
    %v1028 = vsub.s32 %v1025, %v1027
    %v1029 = vrot.slane %v1001, %v1028
    %v1030 = vcombine.low %v1008, %v1022
    %v1031 = vcombine.high %v1008, %v1022
    %v1032 = vcombine.low %v1015, %v1029
    %v1033 = vcombine.high %v1015, %v1029
    %v1034 = vcombine.low %v161, %v173
    %v1035 = vcombine.high %v161, %v173
    %v1036 = vcombine.low %v185, %v197
    %v1037 = vcombine.high %v185, %v197
    %v1039 = vunpack.c.l.s4 1983009808
    %v1040 = vunpack.c.0.s8 %v1039
    %v1041 = vlaneseq
    %v1042 = vshrl.u32 %v1041, 7
    %v1043 = vsub.s32 %v1040, %v1042
    %v1044 = vrot.slane %v1034, %v1043
    %v1046 = vunpack.c.l.s4 1983009808
    %v1047 = vunpack.c.0.s8 %v1046
    %v1048 = vlaneseq
    %v1049 = vshrl.u32 %v1048, 7
    %v1050 = vsub.s32 %v1047, %v1049
    %v1051 = vrot.slane %v1035, %v1050
    %v1053 = vunpack.c.l.s4 1983009808
    %v1054 = vunpack.c.0.s8 %v1053
    %v1055 = vlaneseq
    %v1056 = vshrl.u32 %v1055, 7
    %v1057 = vsub.s32 %v1054, %v1056
    %v1058 = vrot.slane %v1036, %v1057
    %v1060 = vunpack.c.l.s4 1983009808
    %v1061 = vunpack.c.0.s8 %v1060
    %v1062 = vlaneseq
    %v1063 = vshrl.u32 %v1062, 7
    %v1064 = vsub.s32 %v1061, %v1063
    %v1065 = vrot.slane %v1037, %v1064
    %v1066 = vcombine.low %v1044, %v1058
    %v1067 = vcombine.high %v1044, %v1058
    %v1068 = vcombine.low %v1051, %v1065
    %v1069 = vcombine.high %v1051, %v1065
    %v1070 = vcombine.low %v162, %v174
    %v1071 = vcombine.high %v162, %v174
    %v1072 = vcombine.low %v186, %v198
    %v1073 = vcombine.high %v186, %v198
    %v1075 = vunpack.c.l.s4 1983009808
    %v1076 = vunpack.c.0.s8 %v1075
    %v1077 = vlaneseq
    %v1078 = vshrl.u32 %v1077, 7
    %v1079 = vsub.s32 %v1076, %v1078
    %v1080 = vrot.slane %v1070, %v1079
    %v1082 = vunpack.c.l.s4 1983009808
    %v1083 = vunpack.c.0.s8 %v1082
    %v1084 = vlaneseq
    %v1085 = vshrl.u32 %v1084, 7
    %v1086 = vsub.s32 %v1083, %v1085
    %v1087 = vrot.slane %v1071, %v1086
    %v1089 = vunpack.c.l.s4 1983009808
    %v1090 = vunpack.c.0.s8 %v1089
    %v1091 = vlaneseq
    %v1092 = vshrl.u32 %v1091, 7
    %v1093 = vsub.s32 %v1090, %v1092
    %v1094 = vrot.slane %v1072, %v1093
    %v1096 = vunpack.c.l.s4 1983009808
    %v1097 = vunpack.c.0.s8 %v1096
    %v1098 = vlaneseq
    %v1099 = vshrl.u32 %v1098, 7
    %v1100 = vsub.s32 %v1097, %v1099
    %v1101 = vrot.slane %v1073, %v1100
    %v1102 = vcombine.low %v1080, %v1094
    %v1103 = vcombine.high %v1080, %v1094
    %v1104 = vcombine.low %v1087, %v1101
    %v1105 = vcombine.high %v1087, %v1101
    %v1106 = vcombine.low %v163, %v175
    %v1107 = vcombine.low %v187, %v199
    %v1109 = vunpack.c.l.s4 1983009808
    %v1110 = vunpack.c.0.s8 %v1109
    %v1111 = vlaneseq
    %v1112 = vshrl.u32 %v1111, 7
    %v1113 = vsub.s32 %v1110, %v1112
    %v1114 = vrot.slane %v1106, %v1113
    %v1116 = vunpack.c.l.s4 1983009808
    %v1117 = vunpack.c.0.s8 %v1116
    %v1118 = vlaneseq
    %v1119 = vshrl.u32 %v1118, 7
    %v1120 = vsub.s32 %v1117, %v1119
    %v1121 = vrot.slane %v1107, %v1120
    %v1122 = vcombine.low %v1114, %v1121
    %v1123 = vcombine.high %v1114, %v1121
    %v1216 = vpack.c.bf16 %v742, %v328
    %v1217 = vpack.c.bf16 %v743, %v329
    %v1218 = vpack.c.bf16 %v744, %v330
    %v1219 = vpack.c.bf16 %v745, %v331
    %v1220 = vpack.c.bf16 %v778, %v364
    %v1221 = vpack.c.bf16 %v779, %v365
    %v1222 = vpack.c.bf16 %v780, %v366
    %v1223 = vpack.c.bf16 %v781, %v367
    %v1224 = vpack.c.bf16 %v814, %v400
    %v1225 = vpack.c.bf16 %v815, %v401
    %v1226 = vpack.c.bf16 %v816, %v402
    %v1227 = vpack.c.bf16 %v817, %v403
    %v1228 = vpack.c.bf16 %v850, %v436
    %v1229 = vpack.c.bf16 %v851, %v437
    %v1230 = vpack.c.bf16 %v852, %v438
    %v1231 = vpack.c.bf16 %v853, %v439
    %v1232 = vpack.c.bf16 %v886, %v472
    %v1233 = vpack.c.bf16 %v887, %v473
    %v1234 = vpack.c.bf16 %v888, %v474
    %v1235 = vpack.c.bf16 %v889, %v475
    %v1236 = vpack.c.bf16 %v922, %v508
    %v1237 = vpack.c.bf16 %v923, %v509
    %v1238 = vpack.c.bf16 %v924, %v510
    %v1239 = vpack.c.bf16 %v925, %v511
    %v1240 = vpack.c.bf16 %v958, %v544
    %v1241 = vpack.c.bf16 %v959, %v545
    %v1242 = vpack.c.bf16 %v960, %v546
    %v1243 = vpack.c.bf16 %v961, %v547
    %v1244 = vpack.c.bf16 %v994, %v580
    %v1245 = vpack.c.bf16 %v995, %v581
    %v1246 = vpack.c.bf16 %v996, %v582
    %v1247 = vpack.c.bf16 %v997, %v583
    %v1248 = vpack.c.bf16 %v1030, %v616
    %v1249 = vpack.c.bf16 %v1031, %v617
    %v1250 = vpack.c.bf16 %v1032, %v618
    %v1251 = vpack.c.bf16 %v1033, %v619
    %v1252 = vpack.c.bf16 %v1066, %v652
    %v1253 = vpack.c.bf16 %v1067, %v653
    %v1254 = vpack.c.bf16 %v1068, %v654
    %v1255 = vpack.c.bf16 %v1069, %v655
    %v1256 = vpack.c.bf16 %v1102, %v688
    %v1257 = vpack.c.bf16 %v1103, %v689
    %v1258 = vpack.c.bf16 %v1104, %v690
    %v1259 = vpack.c.bf16 %v1105, %v691
    %v1260 = vpack.c.bf16 %v1122, %v708
    %v1261 = vpack.c.bf16 %v1123, %v709
    %v1262 = vld [vmem:[#allocation6] sm:$0xff]
    %v1263 = vld [vmem:[#allocation6 + $0x8] sm:$0xff]
    %v1264 = vld [vmem:[#allocation6 + $0x10] sm:$0xff]
    %v1265 = vld [vmem:[#allocation6 + $0x18] sm:$0xff]
    %v1266 = vld [vmem:[#allocation6 + $0x20] sm:$0xff]
    %v1267 = vld [vmem:[#allocation6 + $0x28] sm:$0xff]
    %v1268 = vld [vmem:[#allocation6 + $0x30] sm:$0xff]
    %v1269 = vld [vmem:[#allocation6 + $0x38] sm:$0xff]
    %v1270 = vld [vmem:[#allocation6 + $0x40] sm:$0xff]
    %v1271 = vld [vmem:[#allocation6 + $0x48] sm:$0xff]
    %v1272 = vld [vmem:[#allocation6 + $0x50] sm:$0xff]
    %v1273 = vld [vmem:[#allocation6 + $0x58] sm:$0xff]
    %v1274 = vld [vmem:[#allocation6 + $0x60] sm:$0xff]
    %v1275 = vld [vmem:[#allocation6 + $0x68] sm:$0xff]
    %v1276 = vld [vmem:[#allocation6 + $0x70] sm:$0xff]
    %v1277 = vld [vmem:[#allocation6 + $0x78] sm:$0xff]
    %v1278 = vld [vmem:[#allocation6 + $0x80] sm:$0xff]
    %v1279 = vld [vmem:[#allocation6 + $0x88] sm:$0xff]
    %v1280 = vld [vmem:[#allocation6 + $0x90] sm:$0xff]
    %v1281 = vld [vmem:[#allocation6 + $0x98] sm:$0xff]
    %v1282 = vld [vmem:[#allocation6 + $0xa0] sm:$0xff]
    %v1283 = vld [vmem:[#allocation6 + $0xa8] sm:$0xff]
    %v1284 = vld [vmem:[#allocation6 + $0xb0] sm:$0xff]
    %v1285 = vld [vmem:[#allocation6 + $0xb8] sm:$0xff]
    %v1286 = vld [vmem:[#allocation6 + $0xc0] sm:$0xff]
    %v1287 = vld [vmem:[#allocation6 + $0xc8] sm:$0xff]
    %v1288 = vld [vmem:[#allocation6 + $0xd0] sm:$0xff]
    %v1289 = vld [vmem:[#allocation6 + $0xd8] sm:$0xff]
    %v1290 = vld [vmem:[#allocation6 + $0xe0] sm:$0xff]
    %v1291 = vld [vmem:[#allocation6 + $0xe8] sm:$0xff]
    %v1292 = vld [vmem:[#allocation6 + $0xf0] sm:$0xff]
    %v1293 = vld [vmem:[#allocation6 + $0xf8] sm:$0xff]
    %v1294 = vld [vmem:[#allocation6 + $0x100] sm:$0xff]
    %v1295 = vld [vmem:[#allocation6 + $0x108] sm:$0xff]
    %v1296 = vld [vmem:[#allocation6 + $0x110] sm:$0xff]
    %v1297 = vld [vmem:[#allocation6 + $0x118] sm:$0xff]
    %v1298 = vld [vmem:[#allocation6 + $0x120] sm:$0xff]
    %v1299 = vld [vmem:[#allocation6 + $0x128] sm:$0xff]
    %v1300 = vld [vmem:[#allocation6 + $0x130] sm:$0xff]
    %v1301 = vld [vmem:[#allocation6 + $0x138] sm:$0xff]
    %v1302 = vld [vmem:[#allocation6 + $0x140] sm:$0xff]
    %v1303 = vld [vmem:[#allocation6 + $0x148] sm:$0xff]
    %v1304 = vld [vmem:[#allocation6 + $0x150] sm:$0xff]
    %v1305 = vld [vmem:[#allocation6 + $0x158] sm:$0xff]
    %v1306 = vld [vmem:[#allocation6 + $0x160] sm:$0xff]
    %v1307 = vld [vmem:[#allocation6 + $0x168] sm:$0xff]
    %v1308 = vld [vmem:[#allocation6 + $0x170] sm:$0xff]
    %v1309 = vld [vmem:[#allocation6 + $0x178] sm:$0xff]
    %v1310 = vld [vmem:[#allocation6 + $0x180] sm:$0xff]
    %v1311 = vld [vmem:[#allocation6 + $0x188] sm:$0xff]
    %v1312 = vld [vmem:[#allocation6 + $0x190] sm:$0xff]
    %v1313 = vld [vmem:[#allocation6 + $0x198] sm:$0xff]
    %v1314 = vld [vmem:[#allocation6 + $0x1a0] sm:$0xff]
    %v1315 = vld [vmem:[#allocation6 + $0x1a8] sm:$0xff]
    %v1316 = vld [vmem:[#allocation6 + $0x1b0] sm:$0xff]
    %v1317 = vld [vmem:[#allocation6 + $0x1b8] sm:$0xff]
    %v1318 = vld [vmem:[#allocation6 + $0x1c0] sm:$0xff]
    %v1319 = vld [vmem:[#allocation6 + $0x1c8] sm:$0xff]
    %v1320 = vld [vmem:[#allocation6 + $0x1d0] sm:$0xff]
    %v1321 = vld [vmem:[#allocation6 + $0x1d8] sm:$0xff]
    %v1322 = vld [vmem:[#allocation6 + $0x1e0] sm:$0xff]
    %v1323 = vld [vmem:[#allocation6 + $0x1e8] sm:$0xff]
    %v1324 = vld [vmem:[#allocation6 + $0x1f0] sm:$0xff]
    %v1325 = vld [vmem:[#allocation6 + $0x1f8] sm:$0xff]
    %v1326 = vld [vmem:[#allocation6 + $0x200] sm:$0xff]
    %v1327 = vld [vmem:[#allocation6 + $0x208] sm:$0xff]
    %v1328 = vld [vmem:[#allocation6 + $0x210] sm:$0xff]
    %v1329 = vld [vmem:[#allocation6 + $0x218] sm:$0xff]
    %v1330 = vld [vmem:[#allocation6 + $0x220] sm:$0xff]
    %v1331 = vld [vmem:[#allocation6 + $0x228] sm:$0xff]
    %v1332 = vld [vmem:[#allocation6 + $0x230] sm:$0xff]
    %v1333 = vld [vmem:[#allocation6 + $0x238] sm:$0xff]
    %v1334 = vld [vmem:[#allocation6 + $0x240] sm:$0xff]
    %v1335 = vld [vmem:[#allocation6 + $0x248] sm:$0xff]
    %v1336 = vld [vmem:[#allocation6 + $0x250] sm:$0xff]
    %v1337 = vld [vmem:[#allocation6 + $0x258] sm:$0xff]
    %v1338 = vld [vmem:[#allocation6 + $0x260] sm:$0xff]
    %v1339 = vld [vmem:[#allocation6 + $0x268] sm:$0xff]
    %v1340 = vld [vmem:[#allocation6 + $0x270] sm:$0xff]
    %v1341 = vld [vmem:[#allocation6 + $0x278] sm:$0xff]
    %v1342 = vld [vmem:[#allocation6 + $0x280] sm:$0xff]
    %v1343 = vld [vmem:[#allocation6 + $0x288] sm:$0xff]
    %v1344 = vld [vmem:[#allocation6 + $0x290] sm:$0xff]
    %v1345 = vld [vmem:[#allocation6 + $0x298] sm:$0xff]
    %v1346 = vld [vmem:[#allocation6 + $0x2a0] sm:$0xff]
    %v1347 = vld [vmem:[#allocation6 + $0x2a8] sm:$0xff]
    %v1348 = vld [vmem:[#allocation6 + $0x2b0] sm:$0xff]
    %v1349 = vld [vmem:[#allocation6 + $0x2b8] sm:$0xff]
    %v1350 = vld [vmem:[#allocation6 + $0x2c0] sm:$0xff]
    %v1351 = vld [vmem:[#allocation6 + $0x2c8] sm:$0xff]
    %v1352 = vld [vmem:[#allocation6 + $0x2d0] sm:$0xff]
    %v1353 = vld [vmem:[#allocation6 + $0x2d8] sm:$0xff]
    %v1354 = vld [vmem:[#allocation6 + $0x2e0] sm:$0xff]
    %v1355 = vld [vmem:[#allocation6 + $0x2e8] sm:$0xff]
    %v1356 = vld [vmem:[#allocation6 + $0x2f0] sm:$0xff]
    %v1357 = vld [vmem:[#allocation6 + $0x2f8] sm:$0xff]
    %v1358 = vld [vmem:[#allocation6 + $0x300] sm:$0xff]
    %v1359 = vld [vmem:[#allocation6 + $0x308] sm:$0xff]
    %v1360 = vld [vmem:[#allocation6 + $0x310] sm:$0xff]
    %v1361 = vld [vmem:[#allocation6 + $0x318] sm:$0xff]
    %v1362 = vld [vmem:[#allocation6 + $0x320] sm:$0xff]
    %v1363 = vld [vmem:[#allocation6 + $0x328] sm:$0xff]
    %v1364 = vld [vmem:[#allocation6 + $0x330] sm:$0xff]
    %v1365 = vld [vmem:[#allocation6 + $0x338] sm:$0xff]
    %v1366 = vld [vmem:[#allocation6 + $0x340] sm:$0xff]
    %v1367 = vld [vmem:[#allocation6 + $0x348] sm:$0xff]
    %v1368 = vld [vmem:[#allocation6 + $0x350] sm:$0xff]
    %v1369 = vld [vmem:[#allocation6 + $0x358] sm:$0xff]
    %v1370 = vld [vmem:[#allocation6 + $0x360] sm:$0xff]
    %v1371 = vld [vmem:[#allocation6 + $0x368] sm:$0xff]
    %v1372 = vld [vmem:[#allocation6 + $0x370] sm:$0xff]
    %v1373 = vld [vmem:[#allocation6 + $0x378] sm:$0xff]
    %v1374 = vld [vmem:[#allocation6 + $0x380] sm:$0xff]
    %v1375 = vld [vmem:[#allocation6 + $0x388] sm:$0xff]
    %v1376 = vld [vmem:[#allocation6 + $0x390] sm:$0xff]
    %v1377 = vld [vmem:[#allocation6 + $0x398] sm:$0xff]
    %v1378 = vld [vmem:[#allocation6 + $0x3a0] sm:$0xff]
    %v1379 = vld [vmem:[#allocation6 + $0x3a8] sm:$0xff]
    %v1380 = vld [vmem:[#allocation6 + $0x3b0] sm:$0xff]
    %v1381 = vld [vmem:[#allocation6 + $0x3b8] sm:$0xff]
    %v1382 = vld [vmem:[#allocation6 + $0x3c0] sm:$0xff]
    %v1383 = vld [vmem:[#allocation6 + $0x3c8] sm:$0xff]
    %v1384 = vld [vmem:[#allocation6 + $0x3d0] sm:$0xff]
    %v1385 = vld [vmem:[#allocation6 + $0x3d8] sm:$0xff]
    %v1386 = vld [vmem:[#allocation6 + $0x3e0] sm:$0xff]
    %v1387 = vld [vmem:[#allocation6 + $0x3e8] sm:$0xff]
    %v1388 = vld [vmem:[#allocation6 + $0x3f0] sm:$0xff]
    %v1389 = vld [vmem:[#allocation6 + $0x3f8] sm:$0xff]
    %v1390 = vld [vmem:[#allocation6 + $0x400] sm:$0xff]
    %v1391 = vld [vmem:[#allocation6 + $0x408] sm:$0xff]
    %v1392 = vld [vmem:[#allocation6 + $0x410] sm:$0xff]
    %v1393 = vld [vmem:[#allocation6 + $0x418] sm:$0xff]
    %v1394 = vld [vmem:[#allocation6 + $0x420] sm:$0xff]
    %v1395 = vld [vmem:[#allocation6 + $0x428] sm:$0xff]
    %v1396 = vld [vmem:[#allocation6 + $0x430] sm:$0xff]
    %v1397 = vld [vmem:[#allocation6 + $0x438] sm:$0xff]
    %v1398 = vld [vmem:[#allocation6 + $0x440] sm:$0xff]
    %v1399 = vld [vmem:[#allocation6 + $0x448] sm:$0xff]
    %v1400 = vld [vmem:[#allocation6 + $0x450] sm:$0xff]
    %v1401 = vld [vmem:[#allocation6 + $0x458] sm:$0xff]
    %v1402 = vld [vmem:[#allocation6 + $0x460] sm:$0xff]
    %v1403 = vld [vmem:[#allocation6 + $0x468] sm:$0xff]
    %v1404 = vld [vmem:[#allocation6 + $0x470] sm:$0xff]
    %v1405 = vld [vmem:[#allocation6 + $0x478] sm:$0xff]
    %v1406 = vld [vmem:[#allocation6 + $0x480] sm:$0xff]
    %v1407 = vld [vmem:[#allocation6 + $0x488] sm:$0xff]
    %v1408 = vld [vmem:[#allocation6 + $0x490] sm:$0xff]
    %v1409 = vld [vmem:[#allocation6 + $0x498] sm:$0xff]
    %v1410 = vld [vmem:[#allocation6 + $0x4a0] sm:$0xff]
    %v1411 = vld [vmem:[#allocation6 + $0x4a8] sm:$0xff]
    %v1412 = vld [vmem:[#allocation6 + $0x4b0] sm:$0xff]
    %v1413 = vld [vmem:[#allocation6 + $0x4b8] sm:$0xff]
    %v1414 = vld [vmem:[#allocation6 + $0x4c0] sm:$0xff]
    %v1415 = vld [vmem:[#allocation6 + $0x4c8] sm:$0xff]
    %v1416 = vld [vmem:[#allocation6 + $0x4d0] sm:$0xff]
    %v1417 = vld [vmem:[#allocation6 + $0x4d8] sm:$0xff]
    %v1418 = vld [vmem:[#allocation6 + $0x4e0] sm:$0xff]
    %v1419 = vld [vmem:[#allocation6 + $0x4e8] sm:$0xff]
    %v1420 = vld [vmem:[#allocation6 + $0x4f0] sm:$0xff]
    %v1421 = vld [vmem:[#allocation6 + $0x4f8] sm:$0xff]
    %v1422 = vld [vmem:[#allocation6 + $0x500] sm:$0xff]
    %v1423 = vld [vmem:[#allocation6 + $0x508] sm:$0xff]
    %v1424 = vld [vmem:[#allocation6 + $0x510] sm:$0xff]
    %v1425 = vld [vmem:[#allocation6 + $0x518] sm:$0xff]
    %v1426 = vld [vmem:[#allocation6 + $0x520] sm:$0xff]
    %v1427 = vld [vmem:[#allocation6 + $0x528] sm:$0xff]
    %v1428 = vld [vmem:[#allocation6 + $0x530] sm:$0xff]
    %v1429 = vld [vmem:[#allocation6 + $0x538] sm:$0xff]
    %v1430 = vld [vmem:[#allocation6 + $0x540] sm:$0xff]
    %v1431 = vld [vmem:[#allocation6 + $0x548] sm:$0xff]
    %v1432 = vld [vmem:[#allocation6 + $0x550] sm:$0xff]
    %v1433 = vld [vmem:[#allocation6 + $0x558] sm:$0xff]
    %v1434 = vld [vmem:[#allocation6 + $0x560] sm:$0xff]
    %v1435 = vld [vmem:[#allocation6 + $0x568] sm:$0xff]
    %v1436 = vld [vmem:[#allocation6 + $0x570] sm:$0xff]
    %v1437 = vld [vmem:[#allocation6 + $0x578] sm:$0xff]
    %v1438 = vld [vmem:[#allocation6 + $0x580] sm:$0xff]
    %v1439 = vld [vmem:[#allocation6 + $0x588] sm:$0xff]
    %v1440 = vld [vmem:[#allocation6 + $0x590] sm:$0xff]
    %v1441 = vld [vmem:[#allocation6 + $0x598] sm:$0xff]
    %v1442 = vld [vmem:[#allocation6 + $0x5a0] sm:$0xff]
    %v1443 = vld [vmem:[#allocation6 + $0x5a8] sm:$0xff]
    %v1444 = vld [vmem:[#allocation6 + $0x5b0] sm:$0xff]
    %v1445 = vld [vmem:[#allocation6 + $0x5b8] sm:$0xff]
    %v1446 = vld [vmem:[#allocation6 + $0x5c0] sm:$0xff]
    %v1447 = vld [vmem:[#allocation6 + $0x5c8] sm:$0xff]
    %v1448 = vld [vmem:[#allocation6 + $0x5d0] sm:$0xff]
    %v1449 = vld [vmem:[#allocation6 + $0x5d8] sm:$0xff]
    %v1450 = vld [vmem:[#allocation6 + $0x5e0] sm:$0xff]
    %v1451 = vld [vmem:[#allocation6 + $0x5e8] sm:$0xff]
    %v1452 = vld [vmem:[#allocation6 + $0x5f0] sm:$0xff]
    %v1453 = vld [vmem:[#allocation6 + $0x5f8] sm:$0xff]
    %v1454 = vld [vmem:[#allocation6 + $0x600] sm:$0xff]
    %v1455 = vld [vmem:[#allocation6 + $0x608] sm:$0xff]
    %v1456 = vld [vmem:[#allocation6 + $0x610] sm:$0xff]
    %v1457 = vld [vmem:[#allocation6 + $0x618] sm:$0xff]
    %v1458 = vld [vmem:[#allocation6 + $0x620] sm:$0xff]
    %v1459 = vld [vmem:[#allocation6 + $0x628] sm:$0xff]
    %v1460 = vld [vmem:[#allocation6 + $0x630] sm:$0xff]
    %v1461 = vld [vmem:[#allocation6 + $0x638] sm:$0xff]
    %v1462 = vld [vmem:[#allocation6 + $0x640] sm:$0xff]
    %v1463 = vld [vmem:[#allocation6 + $0x648] sm:$0xff]
    %v1464 = vld [vmem:[#allocation6 + $0x650] sm:$0xff]
    %v1465 = vld [vmem:[#allocation6 + $0x658] sm:$0xff]
    %v1466 = vld [vmem:[#allocation6 + $0x660] sm:$0xff]
    %v1467 = vld [vmem:[#allocation6 + $0x668] sm:$0xff]
    %v1468 = vld [vmem:[#allocation6 + $0x670] sm:$0xff]
    %v1469 = vld [vmem:[#allocation6 + $0x678] sm:$0xff]
    %v1470 = vld [vmem:[#allocation6 + $0x680] sm:$0xff]
    %v1471 = vld [vmem:[#allocation6 + $0x688] sm:$0xff]
    %v1472 = vld [vmem:[#allocation6 + $0x690] sm:$0xff]
    %v1473 = vld [vmem:[#allocation6 + $0x698] sm:$0xff]
    %v1474 = vld [vmem:[#allocation6 + $0x6a0] sm:$0xff]
    %v1475 = vld [vmem:[#allocation6 + $0x6a8] sm:$0xff]
    %v1476 = vld [vmem:[#allocation6 + $0x6b0] sm:$0xff]
    %v1477 = vld [vmem:[#allocation6 + $0x6b8] sm:$0xff]
    %v1478 = vld [vmem:[#allocation6 + $0x6c0] sm:$0xff]
    %v1479 = vld [vmem:[#allocation6 + $0x6c8] sm:$0xff]
    %v1480 = vld [vmem:[#allocation6 + $0x6d0] sm:$0xff]
    %v1481 = vld [vmem:[#allocation6 + $0x6d8] sm:$0xff]
    %v1482 = vld [vmem:[#allocation6 + $0x6e0] sm:$0xff]
    %v1483 = vld [vmem:[#allocation6 + $0x6e8] sm:$0xff]
    %v1484 = vld [vmem:[#allocation6 + $0x6f0] sm:$0xff]
    %v1485 = vld [vmem:[#allocation6 + $0x6f8] sm:$0xff]
    %v1486 = vld [vmem:[#allocation6 + $0x700] sm:$0xff]
    %v1487 = vld [vmem:[#allocation6 + $0x708] sm:$0xff]
    %v1488 = vld [vmem:[#allocation6 + $0x710] sm:$0xff]
    %v1489 = vld [vmem:[#allocation6 + $0x718] sm:$0xff]
    %v1490 = vld [vmem:[#allocation6 + $0x720] sm:$0xff]
    %v1491 = vld [vmem:[#allocation6 + $0x728] sm:$0xff]
    %v1492 = vld [vmem:[#allocation6 + $0x730] sm:$0xff]
    %v1493 = vld [vmem:[#allocation6 + $0x738] sm:$0xff]
    %v1494 = vld [vmem:[#allocation6 + $0x740] sm:$0xff]
    %v1495 = vld [vmem:[#allocation6 + $0x748] sm:$0xff]
    %v1496 = vld [vmem:[#allocation6 + $0x750] sm:$0xff]
    %v1497 = vld [vmem:[#allocation6 + $0x758] sm:$0xff]
    %v1498 = vld [vmem:[#allocation6 + $0x760] sm:$0xff]
    %v1499 = vld [vmem:[#allocation6 + $0x768] sm:$0xff]
    %v1500 = vld [vmem:[#allocation6 + $0x770] sm:$0xff]
    %v1501 = vld [vmem:[#allocation6 + $0x778] sm:$0xff]
    %v1502 = vld [vmem:[#allocation6 + $0x780] sm:$0xff]
    %v1503 = vld [vmem:[#allocation6 + $0x788] sm:$0xff]
    %v1504 = vld [vmem:[#allocation6 + $0x790] sm:$0xff]
    %v1505 = vld [vmem:[#allocation6 + $0x798] sm:$0xff]
    %v1506 = vld [vmem:[#allocation6 + $0x7a0] sm:$0xff]
    %v1507 = vld [vmem:[#allocation6 + $0x7a8] sm:$0xff]
    %v1508 = vld [vmem:[#allocation6 + $0x7b0] sm:$0xff]
    %v1509 = vld [vmem:[#allocation6 + $0x7b8] sm:$0xff]
    %v1510 = vld [vmem:[#allocation6 + $0x7c0] sm:$0xff]
    %v1511 = vld [vmem:[#allocation6 + $0x7c8] sm:$0xff]
    %v1512 = vld [vmem:[#allocation6 + $0x7d0] sm:$0xff]
    %v1513 = vld [vmem:[#allocation6 + $0x7d8] sm:$0xff]
    %v1514 = vld [vmem:[#allocation6 + $0x7e0] sm:$0xff]
    %v1515 = vld [vmem:[#allocation6 + $0x7e8] sm:$0xff]
    %v1516 = vld [vmem:[#allocation6 + $0x7f0] sm:$0xff]
    %v1517 = vld [vmem:[#allocation6 + $0x7f8] sm:$0xff]
    %v1518 = vld [vmem:[#allocation6 + $0x800] sm:$0xff]
    %v1519 = vld [vmem:[#allocation6 + $0x808] sm:$0xff]
    %v1520 = vld [vmem:[#allocation6 + $0x810] sm:$0xff]
    %v1521 = vld [vmem:[#allocation6 + $0x818] sm:$0xff]
    %v1522 = vld [vmem:[#allocation6 + $0x820] sm:$0xff]
    %v1523 = vld [vmem:[#allocation6 + $0x828] sm:$0xff]
    %v1524 = vld [vmem:[#allocation6 + $0x830] sm:$0xff]
    %v1525 = vld [vmem:[#allocation6 + $0x838] sm:$0xff]
    %v1526 = vld [vmem:[#allocation6 + $0x840] sm:$0xff]
    %v1527 = vld [vmem:[#allocation6 + $0x848] sm:$0xff]
    %v1528 = vld [vmem:[#allocation6 + $0x850] sm:$0xff]
    %v1529 = vld [vmem:[#allocation6 + $0x858] sm:$0xff]
    %v1530 = vld [vmem:[#allocation6 + $0x860] sm:$0xff]
    %v1531 = vld [vmem:[#allocation6 + $0x868] sm:$0xff]
    %v1532 = vld [vmem:[#allocation6 + $0x870] sm:$0xff]
    %v1533 = vld [vmem:[#allocation6 + $0x878] sm:$0xff]
    %v1534 = vld [vmem:[#allocation6 + $0x880] sm:$0xff]
    %v1535 = vld [vmem:[#allocation6 + $0x888] sm:$0xff]
    %v1536 = vld [vmem:[#allocation6 + $0x890] sm:$0xff]
    %v1537 = vld [vmem:[#allocation6 + $0x898] sm:$0xff]
    %v1538 = vld [vmem:[#allocation6 + $0x8a0] sm:$0xff]
    %v1539 = vld [vmem:[#allocation6 + $0x8a8] sm:$0xff]
    %v1540 = vld [vmem:[#allocation6 + $0x8b0] sm:$0xff]
    %v1541 = vld [vmem:[#allocation6 + $0x8b8] sm:$0xff]
    %v1542 = vld [vmem:[#allocation6 + $0x8c0] sm:$0xff]
    %v1543 = vld [vmem:[#allocation6 + $0x8c8] sm:$0xff]
    %v1544 = vld [vmem:[#allocation6 + $0x8d0] sm:$0xff]
    %v1545 = vld [vmem:[#allocation6 + $0x8d8] sm:$0xff]
    %v1546 = vld [vmem:[#allocation6 + $0x8e0] sm:$0xff]
    %v1547 = vld [vmem:[#allocation6 + $0x8e8] sm:$0xff]
    %v1548 = vld [vmem:[#allocation6 + $0x8f0] sm:$0xff]
    %v1549 = vld [vmem:[#allocation6 + $0x8f8] sm:$0xff]
    %v1550 = vld [vmem:[#allocation6 + $0x900] sm:$0xff]
    %v1551 = vld [vmem:[#allocation6 + $0x908] sm:$0xff]
    %v1552 = vld [vmem:[#allocation6 + $0x910] sm:$0xff]
    %v1553 = vld [vmem:[#allocation6 + $0x918] sm:$0xff]
    %v1554 = vld [vmem:[#allocation6 + $0x920] sm:$0xff]
    %v1555 = vld [vmem:[#allocation6 + $0x928] sm:$0xff]
    %v1556 = vld [vmem:[#allocation6 + $0x930] sm:$0xff]
    %v1557 = vld [vmem:[#allocation6 + $0x938] sm:$0xff]
    %v1558 = vld [vmem:[#allocation6 + $0x940] sm:$0xff]
    %v1559 = vld [vmem:[#allocation6 + $0x948] sm:$0xff]
    %v1560 = vld [vmem:[#allocation6 + $0x950] sm:$0xff]
    %v1561 = vld [vmem:[#allocation6 + $0x958] sm:$0xff]
    %v1562 = vld [vmem:[#allocation6 + $0x960] sm:$0xff]
    %v1563 = vld [vmem:[#allocation6 + $0x968] sm:$0xff]
    %v1564 = vld [vmem:[#allocation6 + $0x970] sm:$0xff]
    %v1565 = vld [vmem:[#allocation6 + $0x978] sm:$0xff]
    %v1566 = vld [vmem:[#allocation6 + $0x980] sm:$0xff]
    %v1567 = vld [vmem:[#allocation6 + $0x988] sm:$0xff]
    %v1568 = vld [vmem:[#allocation6 + $0x990] sm:$0xff]
    %v1569 = vld [vmem:[#allocation6 + $0x998] sm:$0xff]
    %v1570 = vld [vmem:[#allocation6 + $0x9a0] sm:$0xff]
    %v1571 = vld [vmem:[#allocation6 + $0x9a8] sm:$0xff]
    %v1572 = vld [vmem:[#allocation6 + $0x9b0] sm:$0xff]
    %v1573 = vld [vmem:[#allocation6 + $0x9b8] sm:$0xff]
    %v1574 = vld [vmem:[#allocation6 + $0x9c0] sm:$0xff]
    %v1575 = vld [vmem:[#allocation6 + $0x9c8] sm:$0xff]
    %v1576 = vld [vmem:[#allocation6 + $0x9d0] sm:$0xff]
    %v1577 = vld [vmem:[#allocation6 + $0x9d8] sm:$0xff]
    %v1578 = vld [vmem:[#allocation6 + $0x9e0] sm:$0xff]
    %v1579 = vld [vmem:[#allocation6 + $0x9e8] sm:$0xff]
    %v1580 = vld [vmem:[#allocation6 + $0x9f0] sm:$0xff]
    %v1581 = vld [vmem:[#allocation6 + $0x9f8] sm:$0xff]
    %v1582 = vld [vmem:[#allocation6 + $0xa00] sm:$0xff]
    %v1583 = vld [vmem:[#allocation6 + $0xa08] sm:$0xff]
    %v1584 = vld [vmem:[#allocation6 + $0xa10] sm:$0xff]
    %v1585 = vld [vmem:[#allocation6 + $0xa18] sm:$0xff]
    %v1586 = vld [vmem:[#allocation6 + $0xa20] sm:$0xff]
    %v1587 = vld [vmem:[#allocation6 + $0xa28] sm:$0xff]
    %v1588 = vld [vmem:[#allocation6 + $0xa30] sm:$0xff]
    %v1589 = vld [vmem:[#allocation6 + $0xa38] sm:$0xff]
    %v1590 = vld [vmem:[#allocation6 + $0xa40] sm:$0xff]
    %v1591 = vld [vmem:[#allocation6 + $0xa48] sm:$0xff]
    %v1592 = vld [vmem:[#allocation6 + $0xa50] sm:$0xff]
    %v1593 = vld [vmem:[#allocation6 + $0xa58] sm:$0xff]
    %v1594 = vld [vmem:[#allocation6 + $0xa60] sm:$0xff]
    %v1595 = vld [vmem:[#allocation6 + $0xa68] sm:$0xff]
    %v1596 = vld [vmem:[#allocation6 + $0xa70] sm:$0xff]
    %v1597 = vld [vmem:[#allocation6 + $0xa78] sm:$0xff]
    %v1598 = vld [vmem:[#allocation6 + $0xa80] sm:$0xff]
    %v1599 = vld [vmem:[#allocation6 + $0xa88] sm:$0xff]
    %v1600 = vld [vmem:[#allocation6 + $0xa90] sm:$0xff]
    %v1601 = vld [vmem:[#allocation6 + $0xa98] sm:$0xff]
    %v1602 = vld [vmem:[#allocation6 + $0xaa0] sm:$0xff]
    %v1603 = vld [vmem:[#allocation6 + $0xaa8] sm:$0xff]
    %v1604 = vld [vmem:[#allocation6 + $0xab0] sm:$0xff]
    %v1605 = vld [vmem:[#allocation6 + $0xab8] sm:$0xff]
    %v1606 = vld [vmem:[#allocation6 + $0xac0] sm:$0xff]
    %v1607 = vld [vmem:[#allocation6 + $0xac8] sm:$0xff]
    %v1608 = vld [vmem:[#allocation6 + $0xad0] sm:$0xff]
    %v1609 = vld [vmem:[#allocation6 + $0xad8] sm:$0xff]
    %v1610 = vld [vmem:[#allocation6 + $0xae0] sm:$0xff]
    %v1611 = vld [vmem:[#allocation6 + $0xae8] sm:$0xff]
    %v1612 = vld [vmem:[#allocation6 + $0xaf0] sm:$0xff]
    %v1613 = vld [vmem:[#allocation6 + $0xaf8] sm:$0xff]
    %v1614 = vld [vmem:[#allocation6 + $0xb00] sm:$0xff]
    %v1615 = vld [vmem:[#allocation6 + $0xb08] sm:$0xff]
    %v1616 = vld [vmem:[#allocation6 + $0xb10] sm:$0xff]
    %v1617 = vld [vmem:[#allocation6 + $0xb18] sm:$0xff]
    %v1618 = vld [vmem:[#allocation6 + $0xb20] sm:$0xff]
    %v1619 = vld [vmem:[#allocation6 + $0xb28] sm:$0xff]
    %v1620 = vld [vmem:[#allocation6 + $0xb30] sm:$0xff]
    %v1621 = vld [vmem:[#allocation6 + $0xb38] sm:$0xff]
    %v1622 = vld [vmem:[#allocation6 + $0xb40] sm:$0xff]
    %v1623 = vld [vmem:[#allocation6 + $0xb48] sm:$0xff]
    %v1624 = vld [vmem:[#allocation6 + $0xb50] sm:$0xff]
    %v1625 = vld [vmem:[#allocation6 + $0xb58] sm:$0xff]
    %v1626 = vld [vmem:[#allocation6 + $0xb60] sm:$0xff]
    %v1627 = vld [vmem:[#allocation6 + $0xb68] sm:$0xff]
    %v1628 = vld [vmem:[#allocation6 + $0xb70] sm:$0xff]
    %v1629 = vld [vmem:[#allocation6 + $0xb78] sm:$0xff]
    %v1630 = vld [vmem:[#allocation6 + $0xb80] sm:$0xff]
    %v1631 = vld [vmem:[#allocation6 + $0xb88] sm:$0xff]
    %v1632 = vld [vmem:[#allocation6 + $0xb90] sm:$0xff]
    %v1633 = vld [vmem:[#allocation6 + $0xb98] sm:$0xff]
    %v1634 = vld [vmem:[#allocation6 + $0xba0] sm:$0xff]
    %v1635 = vld [vmem:[#allocation6 + $0xba8] sm:$0xff]
    %v1636 = vld [vmem:[#allocation6 + $0xbb0] sm:$0xff]
    %v1637 = vld [vmem:[#allocation6 + $0xbb8] sm:$0xff]
    %v1638 = vld [vmem:[#allocation6 + $0xbc0] sm:$0xff]
    %v1639 = vld [vmem:[#allocation6 + $0xbc8] sm:$0xff]
    %v1640 = vld [vmem:[#allocation6 + $0xbd0] sm:$0xff]
    %v1641 = vld [vmem:[#allocation6 + $0xbd8] sm:$0xff]
    %v1642 = vld [vmem:[#allocation6 + $0xbe0] sm:$0xff]
    %v1643 = vld [vmem:[#allocation6 + $0xbe8] sm:$0xff]
    %v1644 = vld [vmem:[#allocation6 + $0xbf0] sm:$0xff]
    %v1645 = vld [vmem:[#allocation6 + $0xbf8] sm:$0xff]
    %v1646 = vld [vmem:[#allocation6 + $0xc00] sm:$0xff]
    %v1647 = vld [vmem:[#allocation6 + $0xc08] sm:$0xff]
    %v1648 = vld [vmem:[#allocation6 + $0xc10] sm:$0xff]
    %v1649 = vld [vmem:[#allocation6 + $0xc18] sm:$0xff]
    %v1650 = vld [vmem:[#allocation6 + $0xc20] sm:$0xff]
    %v1651 = vld [vmem:[#allocation6 + $0xc28] sm:$0xff]
    %v1652 = vld [vmem:[#allocation6 + $0xc30] sm:$0xff]
    %v1653 = vld [vmem:[#allocation6 + $0xc38] sm:$0xff]
    %v1654 = vld [vmem:[#allocation6 + $0xc40] sm:$0xff]
    %v1655 = vld [vmem:[#allocation6 + $0xc48] sm:$0xff]
    %v1656 = vld [vmem:[#allocation6 + $0xc50] sm:$0xff]
    %v1657 = vld [vmem:[#allocation6 + $0xc58] sm:$0xff]
    %v1658 = vld [vmem:[#allocation6 + $0xc60] sm:$0xff]
    %v1659 = vld [vmem:[#allocation6 + $0xc68] sm:$0xff]
    %v1660 = vld [vmem:[#allocation6 + $0xc70] sm:$0xff]
    %v1661 = vld [vmem:[#allocation6 + $0xc78] sm:$0xff]
    %v1662 = vld [vmem:[#allocation6 + $0xc80] sm:$0xff]
    %v1663 = vld [vmem:[#allocation6 + $0xc88] sm:$0xff]
    %v1664 = vld [vmem:[#allocation6 + $0xc90] sm:$0xff]
    %v1665 = vld [vmem:[#allocation6 + $0xc98] sm:$0xff]
    %v1666 = vld [vmem:[#allocation6 + $0xca0] sm:$0xff]
    %v1667 = vld [vmem:[#allocation6 + $0xca8] sm:$0xff]
    %v1668 = vld [vmem:[#allocation6 + $0xcb0] sm:$0xff]
    %v1669 = vld [vmem:[#allocation6 + $0xcb8] sm:$0xff]
    %v1670 = vld [vmem:[#allocation6 + $0xcc0] sm:$0xff]
    %v1671 = vld [vmem:[#allocation6 + $0xcc8] sm:$0xff]
    %v1672 = vld [vmem:[#allocation6 + $0xcd0] sm:$0xff]
    %v1673 = vld [vmem:[#allocation6 + $0xcd8] sm:$0xff]
    %v1674 = vld [vmem:[#allocation6 + $0xce0] sm:$0xff]
    %v1675 = vld [vmem:[#allocation6 + $0xce8] sm:$0xff]
    %v1676 = vld [vmem:[#allocation6 + $0xcf0] sm:$0xff]
    %v1677 = vld [vmem:[#allocation6 + $0xcf8] sm:$0xff]
    %v1678 = vld [vmem:[#allocation6 + $0xd00] sm:$0xff]
    %v1679 = vld [vmem:[#allocation6 + $0xd08] sm:$0xff]
    %v1680 = vld [vmem:[#allocation6 + $0xd10] sm:$0xff]
    %v1681 = vld [vmem:[#allocation6 + $0xd18] sm:$0xff]
    %v1682 = vld [vmem:[#allocation6 + $0xd20] sm:$0xff]
    %v1683 = vld [vmem:[#allocation6 + $0xd28] sm:$0xff]
    %v1684 = vld [vmem:[#allocation6 + $0xd30] sm:$0xff]
    %v1685 = vld [vmem:[#allocation6 + $0xd38] sm:$0xff]
    %v1686 = vld [vmem:[#allocation6 + $0xd40] sm:$0xff]
    %v1687 = vld [vmem:[#allocation6 + $0xd48] sm:$0xff]
    %v1688 = vld [vmem:[#allocation6 + $0xd50] sm:$0xff]
    %v1689 = vld [vmem:[#allocation6 + $0xd58] sm:$0xff]
    %v1690 = vld [vmem:[#allocation6 + $0xd60] sm:$0xff]
    %v1691 = vld [vmem:[#allocation6 + $0xd68] sm:$0xff]
    %v1692 = vld [vmem:[#allocation6 + $0xd70] sm:$0xff]
    %v1693 = vld [vmem:[#allocation6 + $0xd78] sm:$0xff]
    %v1694 = vld [vmem:[#allocation6 + $0xd80] sm:$0xff]
    %v1695 = vld [vmem:[#allocation6 + $0xd88] sm:$0xff]
    %v1696 = vld [vmem:[#allocation6 + $0xd90] sm:$0xff]
    %v1697 = vld [vmem:[#allocation6 + $0xd98] sm:$0xff]
    %v1698 = vld [vmem:[#allocation6 + $0xda0] sm:$0xff]
    %v1699 = vld [vmem:[#allocation6 + $0xda8] sm:$0xff]
    %v1700 = vld [vmem:[#allocation6 + $0xdb0] sm:$0xff]
    %v1701 = vld [vmem:[#allocation6 + $0xdb8] sm:$0xff]
    %v1702 = vld [vmem:[#allocation6 + $0xdc0] sm:$0xff]
    %v1703 = vld [vmem:[#allocation6 + $0xdc8] sm:$0xff]
    %v1704 = vld [vmem:[#allocation6 + $0xdd0] sm:$0xff]
    %v1705 = vld [vmem:[#allocation6 + $0xdd8] sm:$0xff]
    %v1706 = vld [vmem:[#allocation6 + $0xde0] sm:$0xff]
    %v1707 = vld [vmem:[#allocation6 + $0xde8] sm:$0xff]
    %v1708 = vld [vmem:[#allocation6 + $0xdf0] sm:$0xff]
    %v1709 = vld [vmem:[#allocation6 + $0xdf8] sm:$0xff]
    %v1710 = vld [vmem:[#allocation6 + $0xe00] sm:$0xff]
    %v1711 = vld [vmem:[#allocation6 + $0xe08] sm:$0xff]
    %v1712 = vld [vmem:[#allocation6 + $0xe10] sm:$0xff]
    %v1713 = vld [vmem:[#allocation6 + $0xe18] sm:$0xff]
    %v1714 = vld [vmem:[#allocation6 + $0xe20] sm:$0xff]
    %v1715 = vld [vmem:[#allocation6 + $0xe28] sm:$0xff]
    %v1716 = vld [vmem:[#allocation6 + $0xe30] sm:$0xff]
    %v1717 = vld [vmem:[#allocation6 + $0xe38] sm:$0xff]
    %v1718 = vld [vmem:[#allocation6 + $0xe40] sm:$0xff]
    %v1719 = vld [vmem:[#allocation6 + $0xe48] sm:$0xff]
    %v1720 = vld [vmem:[#allocation6 + $0xe50] sm:$0xff]
    %v1721 = vld [vmem:[#allocation6 + $0xe58] sm:$0xff]
    %v1722 = vld [vmem:[#allocation6 + $0xe60] sm:$0xff]
    %v1723 = vld [vmem:[#allocation6 + $0xe68] sm:$0xff]
    %v1724 = vld [vmem:[#allocation6 + $0xe70] sm:$0xff]
    %v1725 = vld [vmem:[#allocation6 + $0xe78] sm:$0xff]
    %v1726 = vld [vmem:[#allocation6 + $0xe80] sm:$0xff]
    %v1727 = vld [vmem:[#allocation6 + $0xe88] sm:$0xff]
    %v1728 = vld [vmem:[#allocation6 + $0xe90] sm:$0xff]
    %v1729 = vld [vmem:[#allocation6 + $0xe98] sm:$0xff]
    %v1730 = vld [vmem:[#allocation6 + $0xea0] sm:$0xff]
    %v1731 = vld [vmem:[#allocation6 + $0xea8] sm:$0xff]
    %v1732 = vld [vmem:[#allocation6 + $0xeb0] sm:$0xff]
    %v1733 = vld [vmem:[#allocation6 + $0xeb8] sm:$0xff]
    %v1734 = vld [vmem:[#allocation6 + $0xec0] sm:$0xff]
    %v1735 = vld [vmem:[#allocation6 + $0xec8] sm:$0xff]
    %v1736 = vld [vmem:[#allocation6 + $0xed0] sm:$0xff]
    %v1737 = vld [vmem:[#allocation6 + $0xed8] sm:$0xff]
    %v1738 = vld [vmem:[#allocation6 + $0xee0] sm:$0xff]
    %v1739 = vld [vmem:[#allocation6 + $0xee8] sm:$0xff]
    %v1740 = vld [vmem:[#allocation6 + $0xef0] sm:$0xff]
    %v1741 = vld [vmem:[#allocation6 + $0xef8] sm:$0xff]
    %v1742 = vld [vmem:[#allocation6 + $0xf00] sm:$0xff]
    %v1743 = vld [vmem:[#allocation6 + $0xf08] sm:$0xff]
    %v1744 = vld [vmem:[#allocation6 + $0xf10] sm:$0xff]
    %v1745 = vld [vmem:[#allocation6 + $0xf18] sm:$0xff]
    %v1746 = vld [vmem:[#allocation6 + $0xf20] sm:$0xff]
    %v1747 = vld [vmem:[#allocation6 + $0xf28] sm:$0xff]
    %v1748 = vld [vmem:[#allocation6 + $0xf30] sm:$0xff]
    %v1749 = vld [vmem:[#allocation6 + $0xf38] sm:$0xff]
    %v1750 = vld [vmem:[#allocation6 + $0xf40] sm:$0xff]
    %v1751 = vld [vmem:[#allocation6 + $0xf48] sm:$0xff]
    %v1752 = vld [vmem:[#allocation6 + $0xf50] sm:$0xff]
    %v1753 = vld [vmem:[#allocation6 + $0xf58] sm:$0xff]
    %v1754 = vld [vmem:[#allocation6 + $0xf60] sm:$0xff]
    %v1755 = vld [vmem:[#allocation6 + $0xf68] sm:$0xff]
    %v1756 = vld [vmem:[#allocation6 + $0xf70] sm:$0xff]
    %v1757 = vld [vmem:[#allocation6 + $0xf78] sm:$0xff]
    %v1758 = vld [vmem:[#allocation6 + $0xf80] sm:$0xff]
    %v1759 = vld [vmem:[#allocation6 + $0xf88] sm:$0xff]
    %v1760 = vld [vmem:[#allocation6 + $0xf90] sm:$0xff]
    %v1761 = vld [vmem:[#allocation6 + $0xf98] sm:$0xff]
    %v1762 = vld [vmem:[#allocation6 + $0xfa0] sm:$0xff]
    %v1763 = vld [vmem:[#allocation6 + $0xfa8] sm:$0xff]
    %v1764 = vld [vmem:[#allocation6 + $0xfb0] sm:$0xff]
    %v1765 = vld [vmem:[#allocation6 + $0xfb8] sm:$0xff]
    %v1766 = vld [vmem:[#allocation6 + $0xfc0] sm:$0xff]
    %v1767 = vld [vmem:[#allocation6 + $0xfc8] sm:$0xff]
    %v1768 = vld [vmem:[#allocation6 + $0xfd0] sm:$0xff]
    %v1769 = vld [vmem:[#allocation6 + $0xfd8] sm:$0xff]
    %v1770 = vld [vmem:[#allocation6 + $0xfe0] sm:$0xff]
    %v1771 = vld [vmem:[#allocation6 + $0xfe8] sm:$0xff]
    %v1772 = vld [vmem:[#allocation6 + $0xff0] sm:$0xff]
    %v1773 = vld [vmem:[#allocation6 + $0xff8] sm:$0xff]
    %v1774 = vld [vmem:[#allocation6 + $0x1000] sm:$0xff]
    %v1775 = vld [vmem:[#allocation6 + $0x1008] sm:$0xff]
    %v1776 = vld [vmem:[#allocation6 + $0x1010] sm:$0xff]
    %v1777 = vld [vmem:[#allocation6 + $0x1018] sm:$0xff]
    %v1778 = vld [vmem:[#allocation6 + $0x1020] sm:$0xff]
    %v1779 = vld [vmem:[#allocation6 + $0x1028] sm:$0xff]
    %v1780 = vld [vmem:[#allocation6 + $0x1030] sm:$0xff]
    %v1781 = vld [vmem:[#allocation6 + $0x1038] sm:$0xff]
    %v1782 = vld [vmem:[#allocation6 + $0x1040] sm:$0xff]
    %v1783 = vld [vmem:[#allocation6 + $0x1048] sm:$0xff]
    %v1784 = vld [vmem:[#allocation6 + $0x1050] sm:$0xff]
    %v1785 = vld [vmem:[#allocation6 + $0x1058] sm:$0xff]
    %v1786 = vld [vmem:[#allocation6 + $0x1060] sm:$0xff]
    %v1787 = vld [vmem:[#allocation6 + $0x1068] sm:$0xff]
    %v1788 = vld [vmem:[#allocation6 + $0x1070] sm:$0xff]
    %v1789 = vld [vmem:[#allocation6 + $0x1078] sm:$0xff]
    %v1790 = vld [vmem:[#allocation6 + $0x1080] sm:$0xff]
    %v1791 = vld [vmem:[#allocation6 + $0x1088] sm:$0xff]
    %v1792 = vld [vmem:[#allocation6 + $0x1090] sm:$0xff]
    %v1793 = vld [vmem:[#allocation6 + $0x1098] sm:$0xff]
    %v1794 = vld [vmem:[#allocation6 + $0x10a0] sm:$0xff]
    %v1795 = vld [vmem:[#allocation6 + $0x10a8] sm:$0xff]
    %v1796 = vld [vmem:[#allocation6 + $0x10b0] sm:$0xff]
    %v1797 = vld [vmem:[#allocation6 + $0x10b8] sm:$0xff]
    %v1798 = vld [vmem:[#allocation6 + $0x10c0] sm:$0xff]
    %v1799 = vld [vmem:[#allocation6 + $0x10c8] sm:$0xff]
    %v1800 = vld [vmem:[#allocation6 + $0x10d0] sm:$0xff]
    %v1801 = vld [vmem:[#allocation6 + $0x10d8] sm:$0xff]
    %v1802 = vld [vmem:[#allocation6 + $0x10e0] sm:$0xff]
    %v1803 = vld [vmem:[#allocation6 + $0x10e8] sm:$0xff]
    %v1804 = vld [vmem:[#allocation6 + $0x10f0] sm:$0xff]
    %v1805 = vld [vmem:[#allocation6 + $0x10f8] sm:$0xff]
    %v1806 = vld [vmem:[#allocation6 + $0x1100] sm:$0xff]
    %v1807 = vld [vmem:[#allocation6 + $0x1108] sm:$0xff]
    %v1808 = vld [vmem:[#allocation6 + $0x1110] sm:$0xff]
    %v1809 = vld [vmem:[#allocation6 + $0x1118] sm:$0xff]
    %v1810 = vld [vmem:[#allocation6 + $0x1120] sm:$0xff]
    %v1811 = vld [vmem:[#allocation6 + $0x1128] sm:$0xff]
    %v1812 = vld [vmem:[#allocation6 + $0x1130] sm:$0xff]
    %v1813 = vld [vmem:[#allocation6 + $0x1138] sm:$0xff]
    %v1814 = vld [vmem:[#allocation6 + $0x1140] sm:$0xff]
    %v1815 = vld [vmem:[#allocation6 + $0x1148] sm:$0xff]
    %v1816 = vld [vmem:[#allocation6 + $0x1150] sm:$0xff]
    %v1817 = vld [vmem:[#allocation6 + $0x1158] sm:$0xff]
    %v1818 = vld [vmem:[#allocation6 + $0x1160] sm:$0xff]
    %v1819 = vld [vmem:[#allocation6 + $0x1168] sm:$0xff]
    %v1820 = vld [vmem:[#allocation6 + $0x1170] sm:$0xff]
    %v1821 = vld [vmem:[#allocation6 + $0x1178] sm:$0xff]
    %v1822 = vld [vmem:[#allocation6 + $0x1180] sm:$0xff]
    %v1823 = vld [vmem:[#allocation6 + $0x1188] sm:$0xff]
    %v1824 = vld [vmem:[#allocation6 + $0x1190] sm:$0xff]
    %v1825 = vld [vmem:[#allocation6 + $0x1198] sm:$0xff]
    %v1826 = vld [vmem:[#allocation6 + $0x11a0] sm:$0xff]
    %v1827 = vld [vmem:[#allocation6 + $0x11a8] sm:$0xff]
    %v1828 = vld [vmem:[#allocation6 + $0x11b0] sm:$0xff]
    %v1829 = vld [vmem:[#allocation6 + $0x11b8] sm:$0xff]
    %v1830 = vld [vmem:[#allocation6 + $0x11c0] sm:$0xff]
    %v1831 = vld [vmem:[#allocation6 + $0x11c8] sm:$0xff]
    %v1832 = vld [vmem:[#allocation6 + $0x11d0] sm:$0xff]
    %v1833 = vld [vmem:[#allocation6 + $0x11d8] sm:$0xff]
    %v1834 = vld [vmem:[#allocation6 + $0x11e0] sm:$0xff]
    %v1835 = vld [vmem:[#allocation6 + $0x11e8] sm:$0xff]
    %v1836 = vld [vmem:[#allocation6 + $0x11f0] sm:$0xff]
    %v1837 = vld [vmem:[#allocation6 + $0x11f8] sm:$0xff]
    %v1838 = vld [vmem:[#allocation6 + $0x1200] sm:$0xff]
    %v1839 = vld [vmem:[#allocation6 + $0x1208] sm:$0xff]
    %v1840 = vld [vmem:[#allocation6 + $0x1210] sm:$0xff]
    %v1841 = vld [vmem:[#allocation6 + $0x1218] sm:$0xff]
    %v1842 = vld [vmem:[#allocation6 + $0x1220] sm:$0xff]
    %v1843 = vld [vmem:[#allocation6 + $0x1228] sm:$0xff]
    %v1844 = vld [vmem:[#allocation6 + $0x1230] sm:$0xff]
    %v1845 = vld [vmem:[#allocation6 + $0x1238] sm:$0xff]
    %v1846 = vld [vmem:[#allocation6 + $0x1240] sm:$0xff]
    %v1847 = vld [vmem:[#allocation6 + $0x1248] sm:$0xff]
    %v1848 = vld [vmem:[#allocation6 + $0x1250] sm:$0xff]
    %v1849 = vld [vmem:[#allocation6 + $0x1258] sm:$0xff]
    %v1850 = vld [vmem:[#allocation6 + $0x1260] sm:$0xff]
    %v1851 = vld [vmem:[#allocation6 + $0x1268] sm:$0xff]
    %v1852 = vld [vmem:[#allocation6 + $0x1270] sm:$0xff]
    %v1853 = vld [vmem:[#allocation6 + $0x1278] sm:$0xff]
    %v1854 = vld [vmem:[#allocation6 + $0x1280] sm:$0xff]
    %v1855 = vld [vmem:[#allocation6 + $0x1288] sm:$0xff]
    %v1856 = vld [vmem:[#allocation6 + $0x1290] sm:$0xff]
    %v1857 = vld [vmem:[#allocation6 + $0x1298] sm:$0xff]
    %v1858 = vld [vmem:[#allocation6 + $0x12a0] sm:$0xff]
    %v1859 = vld [vmem:[#allocation6 + $0x12a8] sm:$0xff]
    %v1860 = vld [vmem:[#allocation6 + $0x12b0] sm:$0xff]
    %v1861 = vld [vmem:[#allocation6 + $0x12b8] sm:$0xff]
    %v1862 = vld [vmem:[#allocation6 + $0x12c0] sm:$0xff]
    %v1863 = vld [vmem:[#allocation6 + $0x12c8] sm:$0xff]
    %v1864 = vld [vmem:[#allocation6 + $0x12d0] sm:$0xff]
    %v1865 = vld [vmem:[#allocation6 + $0x12d8] sm:$0xff]
    %v1866 = vld [vmem:[#allocation6 + $0x12e0] sm:$0xff]
    %v1867 = vld [vmem:[#allocation6 + $0x12e8] sm:$0xff]
    %v1868 = vld [vmem:[#allocation6 + $0x12f0] sm:$0xff]
    %v1869 = vld [vmem:[#allocation6 + $0x12f8] sm:$0xff]
    %v1870 = vld [vmem:[#allocation6 + $0x1300] sm:$0xff]
    %v1871 = vld [vmem:[#allocation6 + $0x1308] sm:$0xff]
    %v1872 = vld [vmem:[#allocation6 + $0x1310] sm:$0xff]
    %v1873 = vld [vmem:[#allocation6 + $0x1318] sm:$0xff]
    %v1874 = vld [vmem:[#allocation6 + $0x1320] sm:$0xff]
    %v1875 = vld [vmem:[#allocation6 + $0x1328] sm:$0xff]
    %v1876 = vld [vmem:[#allocation6 + $0x1330] sm:$0xff]
    %v1877 = vld [vmem:[#allocation6 + $0x1338] sm:$0xff]
    %v1878 = vld [vmem:[#allocation6 + $0x1340] sm:$0xff]
    %v1879 = vld [vmem:[#allocation6 + $0x1348] sm:$0xff]
    %v1880 = vld [vmem:[#allocation6 + $0x1350] sm:$0xff]
    %v1881 = vld [vmem:[#allocation6 + $0x1358] sm:$0xff]
    %v1882 = vld [vmem:[#allocation6 + $0x1360] sm:$0xff]
    %v1883 = vld [vmem:[#allocation6 + $0x1368] sm:$0xff]
    %v1884 = vld [vmem:[#allocation6 + $0x1370] sm:$0xff]
    %v1885 = vld [vmem:[#allocation6 + $0x1378] sm:$0xff]
    %v1886 = vld [vmem:[#allocation6 + $0x1380] sm:$0xff]
    %v1887 = vld [vmem:[#allocation6 + $0x1388] sm:$0xff]
    %v1888 = vld [vmem:[#allocation6 + $0x1390] sm:$0xff]
    %v1889 = vld [vmem:[#allocation6 + $0x1398] sm:$0xff]
    %v1890 = vld [vmem:[#allocation6 + $0x13a0] sm:$0xff]
    %v1891 = vld [vmem:[#allocation6 + $0x13a8] sm:$0xff]
    %v1892 = vld [vmem:[#allocation6 + $0x13b0] sm:$0xff]
    %v1893 = vld [vmem:[#allocation6 + $0x13b8] sm:$0xff]
    %v1894 = vld [vmem:[#allocation6 + $0x13c0] sm:$0xff]
    %v1895 = vld [vmem:[#allocation6 + $0x13c8] sm:$0xff]
    %v1896 = vld [vmem:[#allocation6 + $0x13d0] sm:$0xff]
    %v1897 = vld [vmem:[#allocation6 + $0x13d8] sm:$0xff]
    %v1898 = vld [vmem:[#allocation6 + $0x13e0] sm:$0xff]
    %v1899 = vld [vmem:[#allocation6 + $0x13e8] sm:$0xff]
    %v1900 = vld [vmem:[#allocation6 + $0x13f0] sm:$0xff]
    %v1901 = vld [vmem:[#allocation6 + $0x13f8] sm:$0xff]
    %v1902 = vld [vmem:[#allocation6 + $0x1400] sm:$0xff]
    %v1903 = vld [vmem:[#allocation6 + $0x1408] sm:$0xff]
    %v1904 = vld [vmem:[#allocation6 + $0x1410] sm:$0xff]
    %v1905 = vld [vmem:[#allocation6 + $0x1418] sm:$0xff]
    %v1906 = vld [vmem:[#allocation6 + $0x1420] sm:$0xff]
    %v1907 = vld [vmem:[#allocation6 + $0x1428] sm:$0xff]
    %v1908 = vld [vmem:[#allocation6 + $0x1430] sm:$0xff]
    %v1909 = vld [vmem:[#allocation6 + $0x1438] sm:$0xff]
    %v1910 = vld [vmem:[#allocation6 + $0x1440] sm:$0xff]
    %v1911 = vld [vmem:[#allocation6 + $0x1448] sm:$0xff]
    %v1912 = vld [vmem:[#allocation6 + $0x1450] sm:$0xff]
    %v1913 = vld [vmem:[#allocation6 + $0x1458] sm:$0xff]
    %v1914 = vld [vmem:[#allocation6 + $0x1460] sm:$0xff]
    %v1915 = vld [vmem:[#allocation6 + $0x1468] sm:$0xff]
    %v1916 = vld [vmem:[#allocation6 + $0x1470] sm:$0xff]
    %v1917 = vld [vmem:[#allocation6 + $0x1478] sm:$0xff]
    %v1918 = vld [vmem:[#allocation6 + $0x1480] sm:$0xff]
    %v1919 = vld [vmem:[#allocation6 + $0x1488] sm:$0xff]
    %v1920 = vld [vmem:[#allocation6 + $0x1490] sm:$0xff]
    %v1921 = vld [vmem:[#allocation6 + $0x1498] sm:$0xff]
    %v1922 = vld [vmem:[#allocation6 + $0x14a0] sm:$0xff]
    %v1923 = vld [vmem:[#allocation6 + $0x14a8] sm:$0xff]
    %v1924 = vld [vmem:[#allocation6 + $0x14b0] sm:$0xff]
    %v1925 = vld [vmem:[#allocation6 + $0x14b8] sm:$0xff]
    %v1926 = vld [vmem:[#allocation6 + $0x14c0] sm:$0xff]
    %v1927 = vld [vmem:[#allocation6 + $0x14c8] sm:$0xff]
    %v1928 = vld [vmem:[#allocation6 + $0x14d0] sm:$0xff]
    %v1929 = vld [vmem:[#allocation6 + $0x14d8] sm:$0xff]
    %v1930 = vld [vmem:[#allocation6 + $0x14e0] sm:$0xff]
    %v1931 = vld [vmem:[#allocation6 + $0x14e8] sm:$0xff]
    %v1932 = vld [vmem:[#allocation6 + $0x14f0] sm:$0xff]
    %v1933 = vld [vmem:[#allocation6 + $0x14f8] sm:$0xff]
    %v1934 = vld [vmem:[#allocation6 + $0x1500] sm:$0xff]
    %v1935 = vld [vmem:[#allocation6 + $0x1508] sm:$0xff]
    %v1936 = vld [vmem:[#allocation6 + $0x1510] sm:$0xff]
    %v1937 = vld [vmem:[#allocation6 + $0x1518] sm:$0xff]
    %v1938 = vld [vmem:[#allocation6 + $0x1520] sm:$0xff]
    %v1939 = vld [vmem:[#allocation6 + $0x1528] sm:$0xff]
    %v1940 = vld [vmem:[#allocation6 + $0x1530] sm:$0xff]
    %v1941 = vld [vmem:[#allocation6 + $0x1538] sm:$0xff]
    %v1942 = vld [vmem:[#allocation6 + $0x1540] sm:$0xff]
    %v1943 = vld [vmem:[#allocation6 + $0x1548] sm:$0xff]
    %v1944 = vld [vmem:[#allocation6 + $0x1550] sm:$0xff]
    %v1945 = vld [vmem:[#allocation6 + $0x1558] sm:$0xff]
    %v1946 = vld [vmem:[#allocation6 + $0x1560] sm:$0xff]
    %v1947 = vld [vmem:[#allocation6 + $0x1568] sm:$0xff]
    %v1948 = vld [vmem:[#allocation6 + $0x1570] sm:$0xff]
    %v1949 = vld [vmem:[#allocation6 + $0x1578] sm:$0xff]
    %v1950 = vld [vmem:[#allocation6 + $0x1580] sm:$0xff]
    %v1951 = vld [vmem:[#allocation6 + $0x1588] sm:$0xff]
    %v1952 = vld [vmem:[#allocation6 + $0x1590] sm:$0xff]
    %v1953 = vld [vmem:[#allocation6 + $0x1598] sm:$0xff]
    %v1954 = vld [vmem:[#allocation6 + $0x15a0] sm:$0xff]
    %v1955 = vld [vmem:[#allocation6 + $0x15a8] sm:$0xff]
    %v1956 = vld [vmem:[#allocation6 + $0x15b0] sm:$0xff]
    %v1957 = vld [vmem:[#allocation6 + $0x15b8] sm:$0xff]
    %v1958 = vld [vmem:[#allocation6 + $0x15c0] sm:$0xff]
    %v1959 = vld [vmem:[#allocation6 + $0x15c8] sm:$0xff]
    %v1960 = vld [vmem:[#allocation6 + $0x15d0] sm:$0xff]
    %v1961 = vld [vmem:[#allocation6 + $0x15d8] sm:$0xff]
    %v1962 = vld [vmem:[#allocation6 + $0x15e0] sm:$0xff]
    %v1963 = vld [vmem:[#allocation6 + $0x15e8] sm:$0xff]
    %v1964 = vld [vmem:[#allocation6 + $0x15f0] sm:$0xff]
    %v1965 = vld [vmem:[#allocation6 + $0x15f8] sm:$0xff]
    %v1966 = vld [vmem:[#allocation6 + $0x1600] sm:$0xff]
    %v1967 = vld [vmem:[#allocation6 + $0x1608] sm:$0xff]
    %v1968 = vld [vmem:[#allocation6 + $0x1610] sm:$0xff]
    %v1969 = vld [vmem:[#allocation6 + $0x1618] sm:$0xff]
    %v1970 = vld [vmem:[#allocation6 + $0x1620] sm:$0xff]
    %v1971 = vld [vmem:[#allocation6 + $0x1628] sm:$0xff]
    %v1972 = vld [vmem:[#allocation6 + $0x1630] sm:$0xff]
    %v1973 = vld [vmem:[#allocation6 + $0x1638] sm:$0xff]
    %v1974 = vld [vmem:[#allocation6 + $0x1640] sm:$0xff]
    %v1975 = vld [vmem:[#allocation6 + $0x1648] sm:$0xff]
    %v1976 = vld [vmem:[#allocation6 + $0x1650] sm:$0xff]
    %v1977 = vld [vmem:[#allocation6 + $0x1658] sm:$0xff]
    %v1978 = vld [vmem:[#allocation6 + $0x1660] sm:$0xff]
    %v1979 = vld [vmem:[#allocation6 + $0x1668] sm:$0xff]
    %v1980 = vld [vmem:[#allocation6 + $0x1670] sm:$0xff]
    %v1981 = vld [vmem:[#allocation6 + $0x1678] sm:$0xff]
    %v1982 = vld [vmem:[#allocation6 + $0x1680] sm:$0xff]
    %v1983 = vld [vmem:[#allocation6 + $0x1688] sm:$0xff]
    %v1984 = vld [vmem:[#allocation6 + $0x1690] sm:$0xff]
    %v1985 = vld [vmem:[#allocation6 + $0x1698] sm:$0xff]
    %v1986 = vld [vmem:[#allocation6 + $0x16a0] sm:$0x33]
    %v1987 = vld [vmem:[#allocation7] sm:$0x3]
    %v1989 = vlaneseq
    %v1990 = vshrl.u32 %v1989, 7
    %v1991 = vsub.s32 0, %v1990
    %v1992 = vrot.slane %v1987, %v1991
    %v1993 = vlaneseq
    %v1994 = vshrl.u32 %v1993, 7
    %v1995 = vsub.s32 1, %v1994
    %v1996 = vrot.slane %v1987, %v1995
    %v2724 = vunpack.c.l.b16 %v1262
    %v2725 = vunpack.c.h.b16 %v1262
    %v2726 = vunpack.c.l.b16 %v1263
    %v2727 = vunpack.c.h.b16 %v1263
    %v2728 = vunpack.c.l.b16 %v1264
    %v2729 = vunpack.c.h.b16 %v1264
    %v2730 = vunpack.c.l.b16 %v1265
    %v2731 = vunpack.c.h.b16 %v1265
    %v2732 = vunpack.c.l.b16 %v1266
    %v2733 = vunpack.c.h.b16 %v1266
    %v2734 = vunpack.c.l.b16 %v1267
    %v2735 = vunpack.c.h.b16 %v1267
    %v2736 = vunpack.c.l.b16 %v1268
    %v2737 = vunpack.c.h.b16 %v1268
    %v2738 = vunpack.c.l.b16 %v1269
    %v2739 = vunpack.c.h.b16 %v1269
    %v2740 = vunpack.c.l.b16 %v1270
    %v2741 = vunpack.c.h.b16 %v1270
    %v2742 = vunpack.c.l.b16 %v1271
    %v2743 = vunpack.c.h.b16 %v1271
    %v2744 = vunpack.c.l.b16 %v1272
    %v2745 = vunpack.c.h.b16 %v1272
    %v2746 = vunpack.c.l.b16 %v1273
    %v2747 = vunpack.c.h.b16 %v1273
    %v2748 = vunpack.c.l.b16 %v1274
    %v2749 = vunpack.c.h.b16 %v1274
    %v2750 = vunpack.c.l.b16 %v1275
    %v2751 = vunpack.c.h.b16 %v1275
    %v2752 = vunpack.c.l.b16 %v1276
    %v2753 = vunpack.c.h.b16 %v1276
    %v2754 = vunpack.c.l.b16 %v1277
    %v2755 = vunpack.c.h.b16 %v1277
    %v2756 = vunpack.c.l.b16 %v1278
    %v2757 = vunpack.c.h.b16 %v1278
    %v2758 = vunpack.c.l.b16 %v1279
    %v2759 = vunpack.c.h.b16 %v1279
    %v2760 = vunpack.c.l.b16 %v1280
    %v2761 = vunpack.c.h.b16 %v1280
    %v2762 = vunpack.c.l.b16 %v1281
    %v2763 = vunpack.c.h.b16 %v1281
    %v2764 = vunpack.c.l.b16 %v1282
    %v2765 = vunpack.c.h.b16 %v1282
    %v2766 = vunpack.c.l.b16 %v1283
    %v2767 = vunpack.c.h.b16 %v1283
    %v2768 = vunpack.c.l.b16 %v1284
    %v2769 = vunpack.c.h.b16 %v1284
    %v2770 = vunpack.c.l.b16 %v1285
    %v2771 = vunpack.c.h.b16 %v1285
    %v2772 = vunpack.c.l.b16 %v1286
    %v2773 = vunpack.c.h.b16 %v1286
    %v2774 = vunpack.c.l.b16 %v1287
    %v2775 = vunpack.c.h.b16 %v1287
    %v2776 = vunpack.c.l.b16 %v1288
    %v2777 = vunpack.c.h.b16 %v1288
    %v2778 = vunpack.c.l.b16 %v1289
    %v2779 = vunpack.c.h.b16 %v1289
    %v2780 = vunpack.c.l.b16 %v1290
    %v2781 = vunpack.c.h.b16 %v1290
    %v2782 = vunpack.c.l.b16 %v1291
    %v2783 = vunpack.c.h.b16 %v1291
    %v2784 = vunpack.c.l.b16 %v1292
    %v2785 = vunpack.c.h.b16 %v1292
    %v2786 = vunpack.c.l.b16 %v1293
    %v2787 = vunpack.c.h.b16 %v1293
    %v2788 = vunpack.c.l.b16 %v1294
    %v2789 = vunpack.c.h.b16 %v1294
    %v2790 = vunpack.c.l.b16 %v1295
    %v2791 = vunpack.c.h.b16 %v1295
    %v2792 = vunpack.c.l.b16 %v1296
    %v2793 = vunpack.c.h.b16 %v1296
    %v2794 = vunpack.c.l.b16 %v1297
    %v2795 = vunpack.c.h.b16 %v1297
    %v2796 = vunpack.c.l.b16 %v1298
    %v2797 = vunpack.c.h.b16 %v1298
    %v2798 = vunpack.c.l.b16 %v1299
    %v2799 = vunpack.c.h.b16 %v1299
    %v2800 = vunpack.c.l.b16 %v1300
    %v2801 = vunpack.c.h.b16 %v1300
    %v2802 = vunpack.c.l.b16 %v1301
    %v2803 = vunpack.c.h.b16 %v1301
    %v2804 = vunpack.c.l.b16 %v1302
    %v2805 = vunpack.c.h.b16 %v1302
    %v2806 = vunpack.c.l.b16 %v1303
    %v2807 = vunpack.c.h.b16 %v1303
    %v2808 = vunpack.c.l.b16 %v1304
    %v2809 = vunpack.c.h.b16 %v1304
    %v2810 = vunpack.c.l.b16 %v1305
    %v2811 = vunpack.c.h.b16 %v1305
    %v2812 = vunpack.c.l.b16 %v1306
    %v2813 = vunpack.c.h.b16 %v1306
    %v2814 = vunpack.c.l.b16 %v1307
    %v2815 = vunpack.c.h.b16 %v1307
    %v2816 = vunpack.c.l.b16 %v1308
    %v2817 = vunpack.c.h.b16 %v1308
    %v2818 = vunpack.c.l.b16 %v1309
    %v2819 = vunpack.c.h.b16 %v1309
    %v2820 = vunpack.c.l.b16 %v1310
    %v2821 = vunpack.c.h.b16 %v1310
    %v2822 = vunpack.c.l.b16 %v1311
    %v2823 = vunpack.c.h.b16 %v1311
    %v2824 = vunpack.c.l.b16 %v1312
    %v2825 = vunpack.c.h.b16 %v1312
    %v2826 = vunpack.c.l.b16 %v1313
    %v2827 = vunpack.c.h.b16 %v1313
    %v2828 = vunpack.c.l.b16 %v1314
    %v2829 = vunpack.c.h.b16 %v1314
    %v2830 = vunpack.c.l.b16 %v1315
    %v2831 = vunpack.c.h.b16 %v1315
    %v2832 = vunpack.c.l.b16 %v1316
    %v2833 = vunpack.c.h.b16 %v1316
    %v2834 = vunpack.c.l.b16 %v1317
    %v2835 = vunpack.c.h.b16 %v1317
    %v2836 = vunpack.c.l.b16 %v1318
    %v2837 = vunpack.c.h.b16 %v1318
    %v2838 = vunpack.c.l.b16 %v1319
    %v2839 = vunpack.c.h.b16 %v1319
    %v2840 = vunpack.c.l.b16 %v1320
    %v2841 = vunpack.c.h.b16 %v1320
    %v2842 = vunpack.c.l.b16 %v1321
    %v2843 = vunpack.c.h.b16 %v1321
    %v2844 = vunpack.c.l.b16 %v1322
    %v2845 = vunpack.c.h.b16 %v1322
    %v2846 = vunpack.c.l.b16 %v1323
    %v2847 = vunpack.c.h.b16 %v1323
    %v2848 = vunpack.c.l.b16 %v1324
    %v2849 = vunpack.c.h.b16 %v1324
    %v2850 = vunpack.c.l.b16 %v1325
    %v2851 = vunpack.c.h.b16 %v1325
    %v2852 = vunpack.c.l.b16 %v1326
    %v2853 = vunpack.c.h.b16 %v1326
    %v2854 = vunpack.c.l.b16 %v1327
    %v2855 = vunpack.c.h.b16 %v1327
    %v2856 = vunpack.c.l.b16 %v1328
    %v2857 = vunpack.c.h.b16 %v1328
    %v2858 = vunpack.c.l.b16 %v1329
    %v2859 = vunpack.c.h.b16 %v1329
    %v2860 = vunpack.c.l.b16 %v1330
    %v2861 = vunpack.c.h.b16 %v1330
    %v2862 = vunpack.c.l.b16 %v1331
    %v2863 = vunpack.c.h.b16 %v1331
    %v2864 = vunpack.c.l.b16 %v1332
    %v2865 = vunpack.c.h.b16 %v1332
    %v2866 = vunpack.c.l.b16 %v1333
    %v2867 = vunpack.c.h.b16 %v1333
    %v2868 = vunpack.c.l.b16 %v1334
    %v2869 = vunpack.c.h.b16 %v1334
    %v2870 = vunpack.c.l.b16 %v1335
    %v2871 = vunpack.c.h.b16 %v1335
    %v2872 = vunpack.c.l.b16 %v1336
    %v2873 = vunpack.c.h.b16 %v1336
    %v2874 = vunpack.c.l.b16 %v1337
    %v2875 = vunpack.c.h.b16 %v1337
    %v2876 = vunpack.c.l.b16 %v1338
    %v2877 = vunpack.c.h.b16 %v1338
    %v2878 = vunpack.c.l.b16 %v1339
    %v2879 = vunpack.c.h.b16 %v1339
    %v2880 = vunpack.c.l.b16 %v1340
    %v2881 = vunpack.c.h.b16 %v1340
    %v2882 = vunpack.c.l.b16 %v1341
    %v2883 = vunpack.c.h.b16 %v1341
    %v2884 = vunpack.c.l.b16 %v1342
    %v2885 = vunpack.c.h.b16 %v1342
    %v2886 = vunpack.c.l.b16 %v1343
    %v2887 = vunpack.c.h.b16 %v1343
    %v2888 = vunpack.c.l.b16 %v1344
    %v2889 = vunpack.c.h.b16 %v1344
    %v2890 = vunpack.c.l.b16 %v1345
    %v2891 = vunpack.c.h.b16 %v1345
    %v2892 = vunpack.c.l.b16 %v1346
    %v2893 = vunpack.c.h.b16 %v1346
    %v2894 = vunpack.c.l.b16 %v1347
    %v2895 = vunpack.c.h.b16 %v1347
    %v2896 = vunpack.c.l.b16 %v1348
    %v2897 = vunpack.c.h.b16 %v1348
    %v2898 = vunpack.c.l.b16 %v1349
    %v2899 = vunpack.c.h.b16 %v1349
    %v2900 = vunpack.c.l.b16 %v1350
    %v2901 = vunpack.c.h.b16 %v1350
    %v2902 = vunpack.c.l.b16 %v1351
    %v2903 = vunpack.c.h.b16 %v1351
    %v2904 = vunpack.c.l.b16 %v1352
    %v2905 = vunpack.c.h.b16 %v1352
    %v2906 = vunpack.c.l.b16 %v1353
    %v2907 = vunpack.c.h.b16 %v1353
    %v2908 = vunpack.c.l.b16 %v1354
    %v2909 = vunpack.c.h.b16 %v1354
    %v2910 = vunpack.c.l.b16 %v1355
    %v2911 = vunpack.c.h.b16 %v1355
    %v2912 = vunpack.c.l.b16 %v1356
    %v2913 = vunpack.c.h.b16 %v1356
    %v2914 = vunpack.c.l.b16 %v1357
    %v2915 = vunpack.c.h.b16 %v1357
    %v2916 = vunpack.c.l.b16 %v1358
    %v2917 = vunpack.c.h.b16 %v1358
    %v2918 = vunpack.c.l.b16 %v1359
    %v2919 = vunpack.c.h.b16 %v1359
    %v2920 = vunpack.c.l.b16 %v1360
    %v2921 = vunpack.c.h.b16 %v1360
    %v2922 = vunpack.c.l.b16 %v1361
    %v2923 = vunpack.c.h.b16 %v1361
    %v2924 = vunpack.c.l.b16 %v1362
    %v2925 = vunpack.c.h.b16 %v1362
    %v2926 = vunpack.c.l.b16 %v1363
    %v2927 = vunpack.c.h.b16 %v1363
    %v2928 = vunpack.c.l.b16 %v1364
    %v2929 = vunpack.c.h.b16 %v1364
    %v2930 = vunpack.c.l.b16 %v1365
    %v2931 = vunpack.c.h.b16 %v1365
    %v2932 = vunpack.c.l.b16 %v1366
    %v2933 = vunpack.c.h.b16 %v1366
    %v2934 = vunpack.c.l.b16 %v1367
    %v2935 = vunpack.c.h.b16 %v1367
    %v2936 = vunpack.c.l.b16 %v1368
    %v2937 = vunpack.c.h.b16 %v1368
    %v2938 = vunpack.c.l.b16 %v1369
    %v2939 = vunpack.c.h.b16 %v1369
    %v2940 = vunpack.c.l.b16 %v1370
    %v2941 = vunpack.c.h.b16 %v1370
    %v2942 = vunpack.c.l.b16 %v1371
    %v2943 = vunpack.c.h.b16 %v1371
    %v2944 = vunpack.c.l.b16 %v1372
    %v2945 = vunpack.c.h.b16 %v1372
    %v2946 = vunpack.c.l.b16 %v1373
    %v2947 = vunpack.c.h.b16 %v1373
    %v2948 = vunpack.c.l.b16 %v1374
    %v2949 = vunpack.c.h.b16 %v1374
    %v2950 = vunpack.c.l.b16 %v1375
    %v2951 = vunpack.c.h.b16 %v1375
    %v2952 = vunpack.c.l.b16 %v1376
    %v2953 = vunpack.c.h.b16 %v1376
    %v2954 = vunpack.c.l.b16 %v1377
    %v2955 = vunpack.c.h.b16 %v1377
    %v2956 = vunpack.c.l.b16 %v1378
    %v2957 = vunpack.c.h.b16 %v1378
    %v2958 = vunpack.c.l.b16 %v1379
    %v2959 = vunpack.c.h.b16 %v1379
    %v2960 = vunpack.c.l.b16 %v1380
    %v2961 = vunpack.c.h.b16 %v1380
    %v2962 = vunpack.c.l.b16 %v1381
    %v2963 = vunpack.c.h.b16 %v1381
    %v2964 = vunpack.c.l.b16 %v1382
    %v2965 = vunpack.c.h.b16 %v1382
    %v2966 = vunpack.c.l.b16 %v1383
    %v2967 = vunpack.c.h.b16 %v1383
    %v2968 = vunpack.c.l.b16 %v1384
    %v2969 = vunpack.c.h.b16 %v1384
    %v2970 = vunpack.c.l.b16 %v1385
    %v2971 = vunpack.c.h.b16 %v1385
    %v2972 = vunpack.c.l.b16 %v1386
    %v2973 = vunpack.c.h.b16 %v1386
    %v2974 = vunpack.c.l.b16 %v1387
    %v2975 = vunpack.c.h.b16 %v1387
    %v2976 = vunpack.c.l.b16 %v1388
    %v2977 = vunpack.c.h.b16 %v1388
    %v2978 = vunpack.c.l.b16 %v1389
    %v2979 = vunpack.c.h.b16 %v1389
    %v2980 = vunpack.c.l.b16 %v1390
    %v2981 = vunpack.c.h.b16 %v1390
    %v2982 = vunpack.c.l.b16 %v1391
    %v2983 = vunpack.c.h.b16 %v1391
    %v2984 = vunpack.c.l.b16 %v1392
    %v2985 = vunpack.c.h.b16 %v1392
    %v2986 = vunpack.c.l.b16 %v1393
    %v2987 = vunpack.c.h.b16 %v1393
    %v2988 = vunpack.c.l.b16 %v1394
    %v2989 = vunpack.c.h.b16 %v1394
    %v2990 = vunpack.c.l.b16 %v1395
    %v2991 = vunpack.c.h.b16 %v1395
    %v2992 = vunpack.c.l.b16 %v1396
    %v2993 = vunpack.c.h.b16 %v1396
    %v2994 = vunpack.c.l.b16 %v1397
    %v2995 = vunpack.c.h.b16 %v1397
    %v2996 = vunpack.c.l.b16 %v1398
    %v2997 = vunpack.c.h.b16 %v1398
    %v2998 = vunpack.c.l.b16 %v1399
    %v2999 = vunpack.c.h.b16 %v1399
    %v3000 = vunpack.c.l.b16 %v1400
    %v3001 = vunpack.c.h.b16 %v1400
    %v3002 = vunpack.c.l.b16 %v1401
    %v3003 = vunpack.c.h.b16 %v1401
    %v3004 = vunpack.c.l.b16 %v1402
    %v3005 = vunpack.c.h.b16 %v1402
    %v3006 = vunpack.c.l.b16 %v1403
    %v3007 = vunpack.c.h.b16 %v1403
    %v3008 = vunpack.c.l.b16 %v1404
    %v3009 = vunpack.c.h.b16 %v1404
    %v3010 = vunpack.c.l.b16 %v1405
    %v3011 = vunpack.c.h.b16 %v1405
    %v3012 = vunpack.c.l.b16 %v1406
    %v3013 = vunpack.c.h.b16 %v1406
    %v3014 = vunpack.c.l.b16 %v1407
    %v3015 = vunpack.c.h.b16 %v1407
    %v3016 = vunpack.c.l.b16 %v1408
    %v3017 = vunpack.c.h.b16 %v1408
    %v3018 = vunpack.c.l.b16 %v1409
    %v3019 = vunpack.c.h.b16 %v1409
    %v3020 = vunpack.c.l.b16 %v1410
    %v3021 = vunpack.c.h.b16 %v1410
    %v3022 = vunpack.c.l.b16 %v1411
    %v3023 = vunpack.c.h.b16 %v1411
    %v3024 = vunpack.c.l.b16 %v1412
    %v3025 = vunpack.c.h.b16 %v1412
    %v3026 = vunpack.c.l.b16 %v1413
    %v3027 = vunpack.c.h.b16 %v1413
    %v3028 = vunpack.c.l.b16 %v1414
    %v3029 = vunpack.c.h.b16 %v1414
    %v3030 = vunpack.c.l.b16 %v1415
    %v3031 = vunpack.c.h.b16 %v1415
    %v3032 = vunpack.c.l.b16 %v1416
    %v3033 = vunpack.c.h.b16 %v1416
    %v3034 = vunpack.c.l.b16 %v1417
    %v3035 = vunpack.c.h.b16 %v1417
    %v3036 = vunpack.c.l.b16 %v1418
    %v3037 = vunpack.c.h.b16 %v1418
    %v3038 = vunpack.c.l.b16 %v1419
    %v3039 = vunpack.c.h.b16 %v1419
    %v3040 = vunpack.c.l.b16 %v1420
    %v3041 = vunpack.c.h.b16 %v1420
    %v3042 = vunpack.c.l.b16 %v1421
    %v3043 = vunpack.c.h.b16 %v1421
    %v3044 = vunpack.c.l.b16 %v1422
    %v3045 = vunpack.c.h.b16 %v1422
    %v3046 = vunpack.c.l.b16 %v1423
    %v3047 = vunpack.c.h.b16 %v1423
    %v3048 = vunpack.c.l.b16 %v1424
    %v3049 = vunpack.c.h.b16 %v1424
    %v3050 = vunpack.c.l.b16 %v1425
    %v3051 = vunpack.c.h.b16 %v1425
    %v3052 = vunpack.c.l.b16 %v1426
    %v3053 = vunpack.c.h.b16 %v1426
    %v3054 = vunpack.c.l.b16 %v1427
    %v3055 = vunpack.c.h.b16 %v1427
    %v3056 = vunpack.c.l.b16 %v1428
    %v3057 = vunpack.c.h.b16 %v1428
    %v3058 = vunpack.c.l.b16 %v1429
    %v3059 = vunpack.c.h.b16 %v1429
    %v3060 = vunpack.c.l.b16 %v1430
    %v3061 = vunpack.c.h.b16 %v1430
    %v3062 = vunpack.c.l.b16 %v1431
    %v3063 = vunpack.c.h.b16 %v1431
    %v3064 = vunpack.c.l.b16 %v1432
    %v3065 = vunpack.c.h.b16 %v1432
    %v3066 = vunpack.c.l.b16 %v1433
    %v3067 = vunpack.c.h.b16 %v1433
    %v3068 = vunpack.c.l.b16 %v1434
    %v3069 = vunpack.c.h.b16 %v1434
    %v3070 = vunpack.c.l.b16 %v1435
    %v3071 = vunpack.c.h.b16 %v1435
    %v3072 = vunpack.c.l.b16 %v1436
    %v3073 = vunpack.c.h.b16 %v1436
    %v3074 = vunpack.c.l.b16 %v1437
    %v3075 = vunpack.c.h.b16 %v1437
    %v3076 = vunpack.c.l.b16 %v1438
    %v3077 = vunpack.c.h.b16 %v1438
    %v3078 = vunpack.c.l.b16 %v1439
    %v3079 = vunpack.c.h.b16 %v1439
    %v3080 = vunpack.c.l.b16 %v1440
    %v3081 = vunpack.c.h.b16 %v1440
    %v3082 = vunpack.c.l.b16 %v1441
    %v3083 = vunpack.c.h.b16 %v1441
    %v3084 = vunpack.c.l.b16 %v1442
    %v3085 = vunpack.c.h.b16 %v1442
    %v3086 = vunpack.c.l.b16 %v1443
    %v3087 = vunpack.c.h.b16 %v1443
    %v3088 = vunpack.c.l.b16 %v1444
    %v3089 = vunpack.c.h.b16 %v1444
    %v3090 = vunpack.c.l.b16 %v1445
    %v3091 = vunpack.c.h.b16 %v1445
    %v3092 = vunpack.c.l.b16 %v1446
    %v3093 = vunpack.c.h.b16 %v1446
    %v3094 = vunpack.c.l.b16 %v1447
    %v3095 = vunpack.c.h.b16 %v1447
    %v3096 = vunpack.c.l.b16 %v1448
    %v3097 = vunpack.c.h.b16 %v1448
    %v3098 = vunpack.c.l.b16 %v1449
    %v3099 = vunpack.c.h.b16 %v1449
    %v3100 = vunpack.c.l.b16 %v1450
    %v3101 = vunpack.c.h.b16 %v1450
    %v3102 = vunpack.c.l.b16 %v1451
    %v3103 = vunpack.c.h.b16 %v1451
    %v3104 = vunpack.c.l.b16 %v1452
    %v3105 = vunpack.c.h.b16 %v1452
    %v3106 = vunpack.c.l.b16 %v1453
    %v3107 = vunpack.c.h.b16 %v1453
    %v3108 = vunpack.c.l.b16 %v1454
    %v3109 = vunpack.c.h.b16 %v1454
    %v3110 = vunpack.c.l.b16 %v1455
    %v3111 = vunpack.c.h.b16 %v1455
    %v3112 = vunpack.c.l.b16 %v1456
    %v3113 = vunpack.c.h.b16 %v1456
    %v3114 = vunpack.c.l.b16 %v1457
    %v3115 = vunpack.c.h.b16 %v1457
    %v3116 = vunpack.c.l.b16 %v1458
    %v3117 = vunpack.c.h.b16 %v1458
    %v3118 = vunpack.c.l.b16 %v1459
    %v3119 = vunpack.c.h.b16 %v1459
    %v3120 = vunpack.c.l.b16 %v1460
    %v3121 = vunpack.c.h.b16 %v1460
    %v3122 = vunpack.c.l.b16 %v1461
    %v3123 = vunpack.c.h.b16 %v1461
    %v3124 = vunpack.c.l.b16 %v1462
    %v3125 = vunpack.c.h.b16 %v1462
    %v3126 = vunpack.c.l.b16 %v1463
    %v3127 = vunpack.c.h.b16 %v1463
    %v3128 = vunpack.c.l.b16 %v1464
    %v3129 = vunpack.c.h.b16 %v1464
    %v3130 = vunpack.c.l.b16 %v1465
    %v3131 = vunpack.c.h.b16 %v1465
    %v3132 = vunpack.c.l.b16 %v1466
    %v3133 = vunpack.c.h.b16 %v1466
    %v3134 = vunpack.c.l.b16 %v1467
    %v3135 = vunpack.c.h.b16 %v1467
    %v3136 = vunpack.c.l.b16 %v1468
    %v3137 = vunpack.c.h.b16 %v1468
    %v3138 = vunpack.c.l.b16 %v1469
    %v3139 = vunpack.c.h.b16 %v1469
    %v3140 = vunpack.c.l.b16 %v1470
    %v3141 = vunpack.c.h.b16 %v1470
    %v3142 = vunpack.c.l.b16 %v1471
    %v3143 = vunpack.c.h.b16 %v1471
    %v3144 = vunpack.c.l.b16 %v1472
    %v3145 = vunpack.c.h.b16 %v1472
    %v3146 = vunpack.c.l.b16 %v1473
    %v3147 = vunpack.c.h.b16 %v1473
    %v3148 = vunpack.c.l.b16 %v1474
    %v3149 = vunpack.c.h.b16 %v1474
    %v3150 = vunpack.c.l.b16 %v1475
    %v3151 = vunpack.c.h.b16 %v1475
    %v3152 = vunpack.c.l.b16 %v1476
    %v3153 = vunpack.c.h.b16 %v1476
    %v3154 = vunpack.c.l.b16 %v1477
    %v3155 = vunpack.c.h.b16 %v1477
    %v3156 = vunpack.c.l.b16 %v1478
    %v3157 = vunpack.c.h.b16 %v1478
    %v3158 = vunpack.c.l.b16 %v1479
    %v3159 = vunpack.c.h.b16 %v1479
    %v3160 = vunpack.c.l.b16 %v1480
    %v3161 = vunpack.c.h.b16 %v1480
    %v3162 = vunpack.c.l.b16 %v1481
    %v3163 = vunpack.c.h.b16 %v1481
    %v3164 = vunpack.c.l.b16 %v1482
    %v3165 = vunpack.c.h.b16 %v1482
    %v3166 = vunpack.c.l.b16 %v1483
    %v3167 = vunpack.c.h.b16 %v1483
    %v3168 = vunpack.c.l.b16 %v1484
    %v3169 = vunpack.c.h.b16 %v1484
    %v3170 = vunpack.c.l.b16 %v1485
    %v3171 = vunpack.c.h.b16 %v1485
    %v3172 = vunpack.c.l.b16 %v1486
    %v3173 = vunpack.c.h.b16 %v1486
    %v3174 = vunpack.c.l.b16 %v1487
    %v3175 = vunpack.c.h.b16 %v1487
    %v3176 = vunpack.c.l.b16 %v1488
    %v3177 = vunpack.c.h.b16 %v1488
    %v3178 = vunpack.c.l.b16 %v1489
    %v3179 = vunpack.c.h.b16 %v1489
    %v3180 = vunpack.c.l.b16 %v1490
    %v3181 = vunpack.c.h.b16 %v1490
    %v3182 = vunpack.c.l.b16 %v1491
    %v3183 = vunpack.c.h.b16 %v1491
    %v3184 = vunpack.c.l.b16 %v1492
    %v3185 = vunpack.c.h.b16 %v1492
    %v3186 = vunpack.c.l.b16 %v1493
    %v3187 = vunpack.c.h.b16 %v1493
    %v3188 = vunpack.c.l.b16 %v1494
    %v3189 = vunpack.c.h.b16 %v1494
    %v3190 = vunpack.c.l.b16 %v1495
    %v3191 = vunpack.c.h.b16 %v1495
    %v3192 = vunpack.c.l.b16 %v1496
    %v3193 = vunpack.c.h.b16 %v1496
    %v3194 = vunpack.c.l.b16 %v1497
    %v3195 = vunpack.c.h.b16 %v1497
    %v3196 = vunpack.c.l.b16 %v1498
    %v3197 = vunpack.c.h.b16 %v1498
    %v3198 = vunpack.c.l.b16 %v1499
    %v3199 = vunpack.c.h.b16 %v1499
    %v3200 = vunpack.c.l.b16 %v1500
    %v3201 = vunpack.c.h.b16 %v1500
    %v3202 = vunpack.c.l.b16 %v1501
    %v3203 = vunpack.c.h.b16 %v1501
    %v3204 = vunpack.c.l.b16 %v1502
    %v3205 = vunpack.c.h.b16 %v1502
    %v3206 = vunpack.c.l.b16 %v1503
    %v3207 = vunpack.c.h.b16 %v1503
    %v3208 = vunpack.c.l.b16 %v1504
    %v3209 = vunpack.c.h.b16 %v1504
    %v3210 = vunpack.c.l.b16 %v1505
    %v3211 = vunpack.c.h.b16 %v1505
    %v3212 = vunpack.c.l.b16 %v1506
    %v3213 = vunpack.c.h.b16 %v1506
    %v3214 = vunpack.c.l.b16 %v1507
    %v3215 = vunpack.c.h.b16 %v1507
    %v3216 = vunpack.c.l.b16 %v1508
    %v3217 = vunpack.c.h.b16 %v1508
    %v3218 = vunpack.c.l.b16 %v1509
    %v3219 = vunpack.c.h.b16 %v1509
    %v3220 = vunpack.c.l.b16 %v1510
    %v3221 = vunpack.c.h.b16 %v1510
    %v3222 = vunpack.c.l.b16 %v1511
    %v3223 = vunpack.c.h.b16 %v1511
    %v3224 = vunpack.c.l.b16 %v1512
    %v3225 = vunpack.c.h.b16 %v1512
    %v3226 = vunpack.c.l.b16 %v1513
    %v3227 = vunpack.c.h.b16 %v1513
    %v3228 = vunpack.c.l.b16 %v1514
    %v3229 = vunpack.c.h.b16 %v1514
    %v3230 = vunpack.c.l.b16 %v1515
    %v3231 = vunpack.c.h.b16 %v1515
    %v3232 = vunpack.c.l.b16 %v1516
    %v3233 = vunpack.c.h.b16 %v1516
    %v3234 = vunpack.c.l.b16 %v1517
    %v3235 = vunpack.c.h.b16 %v1517
    %v3236 = vunpack.c.l.b16 %v1518
    %v3237 = vunpack.c.h.b16 %v1518
    %v3238 = vunpack.c.l.b16 %v1519
    %v3239 = vunpack.c.h.b16 %v1519
    %v3240 = vunpack.c.l.b16 %v1520
    %v3241 = vunpack.c.h.b16 %v1520
    %v3242 = vunpack.c.l.b16 %v1521
    %v3243 = vunpack.c.h.b16 %v1521
    %v3244 = vunpack.c.l.b16 %v1522
    %v3245 = vunpack.c.h.b16 %v1522
    %v3246 = vunpack.c.l.b16 %v1523
    %v3247 = vunpack.c.h.b16 %v1523
    %v3248 = vunpack.c.l.b16 %v1524
    %v3249 = vunpack.c.h.b16 %v1524
    %v3250 = vunpack.c.l.b16 %v1525
    %v3251 = vunpack.c.h.b16 %v1525
    %v3252 = vunpack.c.l.b16 %v1526
    %v3253 = vunpack.c.h.b16 %v1526
    %v3254 = vunpack.c.l.b16 %v1527
    %v3255 = vunpack.c.h.b16 %v1527
    %v3256 = vunpack.c.l.b16 %v1528
    %v3257 = vunpack.c.h.b16 %v1528
    %v3258 = vunpack.c.l.b16 %v1529
    %v3259 = vunpack.c.h.b16 %v1529
    %v3260 = vunpack.c.l.b16 %v1530
    %v3261 = vunpack.c.h.b16 %v1530
    %v3262 = vunpack.c.l.b16 %v1531
    %v3263 = vunpack.c.h.b16 %v1531
    %v3264 = vunpack.c.l.b16 %v1532
    %v3265 = vunpack.c.h.b16 %v1532
    %v3266 = vunpack.c.l.b16 %v1533
    %v3267 = vunpack.c.h.b16 %v1533
    %v3268 = vunpack.c.l.b16 %v1534
    %v3269 = vunpack.c.h.b16 %v1534
    %v3270 = vunpack.c.l.b16 %v1535
    %v3271 = vunpack.c.h.b16 %v1535
    %v3272 = vunpack.c.l.b16 %v1536
    %v3273 = vunpack.c.h.b16 %v1536
    %v3274 = vunpack.c.l.b16 %v1537
    %v3275 = vunpack.c.h.b16 %v1537
    %v3276 = vunpack.c.l.b16 %v1538
    %v3277 = vunpack.c.h.b16 %v1538
    %v3278 = vunpack.c.l.b16 %v1539
    %v3279 = vunpack.c.h.b16 %v1539
    %v3280 = vunpack.c.l.b16 %v1540
    %v3281 = vunpack.c.h.b16 %v1540
    %v3282 = vunpack.c.l.b16 %v1541
    %v3283 = vunpack.c.h.b16 %v1541
    %v3284 = vunpack.c.l.b16 %v1542
    %v3285 = vunpack.c.h.b16 %v1542
    %v3286 = vunpack.c.l.b16 %v1543
    %v3287 = vunpack.c.h.b16 %v1543
    %v3288 = vunpack.c.l.b16 %v1544
    %v3289 = vunpack.c.h.b16 %v1544
    %v3290 = vunpack.c.l.b16 %v1545
    %v3291 = vunpack.c.h.b16 %v1545
    %v3292 = vunpack.c.l.b16 %v1546
    %v3293 = vunpack.c.h.b16 %v1546
    %v3294 = vunpack.c.l.b16 %v1547
    %v3295 = vunpack.c.h.b16 %v1547
    %v3296 = vunpack.c.l.b16 %v1548
    %v3297 = vunpack.c.h.b16 %v1548
    %v3298 = vunpack.c.l.b16 %v1549
    %v3299 = vunpack.c.h.b16 %v1549
    %v3300 = vunpack.c.l.b16 %v1550
    %v3301 = vunpack.c.h.b16 %v1550
    %v3302 = vunpack.c.l.b16 %v1551
    %v3303 = vunpack.c.h.b16 %v1551
    %v3304 = vunpack.c.l.b16 %v1552
    %v3305 = vunpack.c.h.b16 %v1552
    %v3306 = vunpack.c.l.b16 %v1553
    %v3307 = vunpack.c.h.b16 %v1553
    %v3308 = vunpack.c.l.b16 %v1554
    %v3309 = vunpack.c.h.b16 %v1554
    %v3310 = vunpack.c.l.b16 %v1555
    %v3311 = vunpack.c.h.b16 %v1555
    %v3312 = vunpack.c.l.b16 %v1556
    %v3313 = vunpack.c.h.b16 %v1556
    %v3314 = vunpack.c.l.b16 %v1557
    %v3315 = vunpack.c.h.b16 %v1557
    %v3316 = vunpack.c.l.b16 %v1558
    %v3317 = vunpack.c.h.b16 %v1558
    %v3318 = vunpack.c.l.b16 %v1559
    %v3319 = vunpack.c.h.b16 %v1559
    %v3320 = vunpack.c.l.b16 %v1560
    %v3321 = vunpack.c.h.b16 %v1560
    %v3322 = vunpack.c.l.b16 %v1561
    %v3323 = vunpack.c.h.b16 %v1561
    %v3324 = vunpack.c.l.b16 %v1562
    %v3325 = vunpack.c.h.b16 %v1562
    %v3326 = vunpack.c.l.b16 %v1563
    %v3327 = vunpack.c.h.b16 %v1563
    %v3328 = vunpack.c.l.b16 %v1564
    %v3329 = vunpack.c.h.b16 %v1564
    %v3330 = vunpack.c.l.b16 %v1565
    %v3331 = vunpack.c.h.b16 %v1565
    %v3332 = vunpack.c.l.b16 %v1566
    %v3333 = vunpack.c.h.b16 %v1566
    %v3334 = vunpack.c.l.b16 %v1567
    %v3335 = vunpack.c.h.b16 %v1567
    %v3336 = vunpack.c.l.b16 %v1568
    %v3337 = vunpack.c.h.b16 %v1568
    %v3338 = vunpack.c.l.b16 %v1569
    %v3339 = vunpack.c.h.b16 %v1569
    %v3340 = vunpack.c.l.b16 %v1570
    %v3341 = vunpack.c.h.b16 %v1570
    %v3342 = vunpack.c.l.b16 %v1571
    %v3343 = vunpack.c.h.b16 %v1571
    %v3344 = vunpack.c.l.b16 %v1572
    %v3345 = vunpack.c.h.b16 %v1572
    %v3346 = vunpack.c.l.b16 %v1573
    %v3347 = vunpack.c.h.b16 %v1573
    %v3348 = vunpack.c.l.b16 %v1574
    %v3349 = vunpack.c.h.b16 %v1574
    %v3350 = vunpack.c.l.b16 %v1575
    %v3351 = vunpack.c.h.b16 %v1575
    %v3352 = vunpack.c.l.b16 %v1576
    %v3353 = vunpack.c.h.b16 %v1576
    %v3354 = vunpack.c.l.b16 %v1577
    %v3355 = vunpack.c.h.b16 %v1577
    %v3356 = vunpack.c.l.b16 %v1578
    %v3357 = vunpack.c.h.b16 %v1578
    %v3358 = vunpack.c.l.b16 %v1579
    %v3359 = vunpack.c.h.b16 %v1579
    %v3360 = vunpack.c.l.b16 %v1580
    %v3361 = vunpack.c.h.b16 %v1580
    %v3362 = vunpack.c.l.b16 %v1581
    %v3363 = vunpack.c.h.b16 %v1581
    %v3364 = vunpack.c.l.b16 %v1582
    %v3365 = vunpack.c.h.b16 %v1582
    %v3366 = vunpack.c.l.b16 %v1583
    %v3367 = vunpack.c.h.b16 %v1583
    %v3368 = vunpack.c.l.b16 %v1584
    %v3369 = vunpack.c.h.b16 %v1584
    %v3370 = vunpack.c.l.b16 %v1585
    %v3371 = vunpack.c.h.b16 %v1585
    %v3372 = vunpack.c.l.b16 %v1586
    %v3373 = vunpack.c.h.b16 %v1586
    %v3374 = vunpack.c.l.b16 %v1587
    %v3375 = vunpack.c.h.b16 %v1587
    %v3376 = vunpack.c.l.b16 %v1588
    %v3377 = vunpack.c.h.b16 %v1588
    %v3378 = vunpack.c.l.b16 %v1589
    %v3379 = vunpack.c.h.b16 %v1589
    %v3380 = vunpack.c.l.b16 %v1590
    %v3381 = vunpack.c.h.b16 %v1590
    %v3382 = vunpack.c.l.b16 %v1591
    %v3383 = vunpack.c.h.b16 %v1591
    %v3384 = vunpack.c.l.b16 %v1592
    %v3385 = vunpack.c.h.b16 %v1592
    %v3386 = vunpack.c.l.b16 %v1593
    %v3387 = vunpack.c.h.b16 %v1593
    %v3388 = vunpack.c.l.b16 %v1594
    %v3389 = vunpack.c.h.b16 %v1594
    %v3390 = vunpack.c.l.b16 %v1595
    %v3391 = vunpack.c.h.b16 %v1595
    %v3392 = vunpack.c.l.b16 %v1596
    %v3393 = vunpack.c.h.b16 %v1596
    %v3394 = vunpack.c.l.b16 %v1597
    %v3395 = vunpack.c.h.b16 %v1597
    %v3396 = vunpack.c.l.b16 %v1598
    %v3397 = vunpack.c.h.b16 %v1598
    %v3398 = vunpack.c.l.b16 %v1599
    %v3399 = vunpack.c.h.b16 %v1599
    %v3400 = vunpack.c.l.b16 %v1600
    %v3401 = vunpack.c.h.b16 %v1600
    %v3402 = vunpack.c.l.b16 %v1601
    %v3403 = vunpack.c.h.b16 %v1601
    %v3404 = vunpack.c.l.b16 %v1602
    %v3405 = vunpack.c.h.b16 %v1602
    %v3406 = vunpack.c.l.b16 %v1603
    %v3407 = vunpack.c.h.b16 %v1603
    %v3408 = vunpack.c.l.b16 %v1604
    %v3409 = vunpack.c.h.b16 %v1604
    %v3410 = vunpack.c.l.b16 %v1605
    %v3411 = vunpack.c.h.b16 %v1605
    %v3412 = vunpack.c.l.b16 %v1606
    %v3413 = vunpack.c.h.b16 %v1606
    %v3414 = vunpack.c.l.b16 %v1607
    %v3415 = vunpack.c.h.b16 %v1607
    %v3416 = vunpack.c.l.b16 %v1608
    %v3417 = vunpack.c.h.b16 %v1608
    %v3418 = vunpack.c.l.b16 %v1609
    %v3419 = vunpack.c.h.b16 %v1609
    %v3420 = vunpack.c.l.b16 %v1610
    %v3421 = vunpack.c.h.b16 %v1610
    %v3422 = vunpack.c.l.b16 %v1611
    %v3423 = vunpack.c.h.b16 %v1611
    %v3424 = vunpack.c.l.b16 %v1612
    %v3425 = vunpack.c.h.b16 %v1612
    %v3426 = vunpack.c.l.b16 %v1613
    %v3427 = vunpack.c.h.b16 %v1613
    %v3428 = vunpack.c.l.b16 %v1614
    %v3429 = vunpack.c.h.b16 %v1614
    %v3430 = vunpack.c.l.b16 %v1615
    %v3431 = vunpack.c.h.b16 %v1615
    %v3432 = vunpack.c.l.b16 %v1616
    %v3433 = vunpack.c.h.b16 %v1616
    %v3434 = vunpack.c.l.b16 %v1617
    %v3435 = vunpack.c.h.b16 %v1617
    %v3436 = vunpack.c.l.b16 %v1618
    %v3437 = vunpack.c.h.b16 %v1618
    %v3438 = vunpack.c.l.b16 %v1619
    %v3439 = vunpack.c.h.b16 %v1619
    %v3440 = vunpack.c.l.b16 %v1620
    %v3441 = vunpack.c.h.b16 %v1620
    %v3442 = vunpack.c.l.b16 %v1621
    %v3443 = vunpack.c.h.b16 %v1621
    %v3444 = vunpack.c.l.b16 %v1622
    %v3445 = vunpack.c.h.b16 %v1622
    %v3446 = vunpack.c.l.b16 %v1623
    %v3447 = vunpack.c.h.b16 %v1623
    %v3448 = vunpack.c.l.b16 %v1624
    %v3449 = vunpack.c.h.b16 %v1624
    %v3450 = vunpack.c.l.b16 %v1625
    %v3451 = vunpack.c.h.b16 %v1625
    %v3452 = vunpack.c.l.b16 %v1626
    %v3453 = vunpack.c.h.b16 %v1626
    %v3454 = vunpack.c.l.b16 %v1627
    %v3455 = vunpack.c.h.b16 %v1627
    %v3456 = vunpack.c.l.b16 %v1628
    %v3457 = vunpack.c.h.b16 %v1628
    %v3458 = vunpack.c.l.b16 %v1629
    %v3459 = vunpack.c.h.b16 %v1629
    %v3460 = vunpack.c.l.b16 %v1630
    %v3461 = vunpack.c.h.b16 %v1630
    %v3462 = vunpack.c.l.b16 %v1631
    %v3463 = vunpack.c.h.b16 %v1631
    %v3464 = vunpack.c.l.b16 %v1632
    %v3465 = vunpack.c.h.b16 %v1632
    %v3466 = vunpack.c.l.b16 %v1633
    %v3467 = vunpack.c.h.b16 %v1633
    %v3468 = vunpack.c.l.b16 %v1634
    %v3469 = vunpack.c.h.b16 %v1634
    %v3470 = vunpack.c.l.b16 %v1635
    %v3471 = vunpack.c.h.b16 %v1635
    %v3472 = vunpack.c.l.b16 %v1636
    %v3473 = vunpack.c.h.b16 %v1636
    %v3474 = vunpack.c.l.b16 %v1637
    %v3475 = vunpack.c.h.b16 %v1637
    %v3476 = vunpack.c.l.b16 %v1638
    %v3477 = vunpack.c.h.b16 %v1638
    %v3478 = vunpack.c.l.b16 %v1639
    %v3479 = vunpack.c.h.b16 %v1639
    %v3480 = vunpack.c.l.b16 %v1640
    %v3481 = vunpack.c.h.b16 %v1640
    %v3482 = vunpack.c.l.b16 %v1641
    %v3483 = vunpack.c.h.b16 %v1641
    %v3484 = vunpack.c.l.b16 %v1642
    %v3485 = vunpack.c.h.b16 %v1642
    %v3486 = vunpack.c.l.b16 %v1643
    %v3487 = vunpack.c.h.b16 %v1643
    %v3488 = vunpack.c.l.b16 %v1644
    %v3489 = vunpack.c.h.b16 %v1644
    %v3490 = vunpack.c.l.b16 %v1645
    %v3491 = vunpack.c.h.b16 %v1645
    %v3492 = vunpack.c.l.b16 %v1646
    %v3493 = vunpack.c.h.b16 %v1646
    %v3494 = vunpack.c.l.b16 %v1647
    %v3495 = vunpack.c.h.b16 %v1647
    %v3496 = vunpack.c.l.b16 %v1648
    %v3497 = vunpack.c.h.b16 %v1648
    %v3498 = vunpack.c.l.b16 %v1649
    %v3499 = vunpack.c.h.b16 %v1649
    %v3500 = vunpack.c.l.b16 %v1650
    %v3501 = vunpack.c.h.b16 %v1650
    %v3502 = vunpack.c.l.b16 %v1651
    %v3503 = vunpack.c.h.b16 %v1651
    %v3504 = vunpack.c.l.b16 %v1652
    %v3505 = vunpack.c.h.b16 %v1652
    %v3506 = vunpack.c.l.b16 %v1653
    %v3507 = vunpack.c.h.b16 %v1653
    %v3508 = vunpack.c.l.b16 %v1654
    %v3509 = vunpack.c.h.b16 %v1654
    %v3510 = vunpack.c.l.b16 %v1655
    %v3511 = vunpack.c.h.b16 %v1655
    %v3512 = vunpack.c.l.b16 %v1656
    %v3513 = vunpack.c.h.b16 %v1656
    %v3514 = vunpack.c.l.b16 %v1657
    %v3515 = vunpack.c.h.b16 %v1657
    %v3516 = vunpack.c.l.b16 %v1658
    %v3517 = vunpack.c.h.b16 %v1658
    %v3518 = vunpack.c.l.b16 %v1659
    %v3519 = vunpack.c.h.b16 %v1659
    %v3520 = vunpack.c.l.b16 %v1660
    %v3521 = vunpack.c.h.b16 %v1660
    %v3522 = vunpack.c.l.b16 %v1661
    %v3523 = vunpack.c.h.b16 %v1661
    %v3524 = vunpack.c.l.b16 %v1662
    %v3525 = vunpack.c.h.b16 %v1662
    %v3526 = vunpack.c.l.b16 %v1663
    %v3527 = vunpack.c.h.b16 %v1663
    %v3528 = vunpack.c.l.b16 %v1664
    %v3529 = vunpack.c.h.b16 %v1664
    %v3530 = vunpack.c.l.b16 %v1665
    %v3531 = vunpack.c.h.b16 %v1665
    %v3532 = vunpack.c.l.b16 %v1666
    %v3533 = vunpack.c.h.b16 %v1666
    %v3534 = vunpack.c.l.b16 %v1667
    %v3535 = vunpack.c.h.b16 %v1667
    %v3536 = vunpack.c.l.b16 %v1668
    %v3537 = vunpack.c.h.b16 %v1668
    %v3538 = vunpack.c.l.b16 %v1669
    %v3539 = vunpack.c.h.b16 %v1669
    %v3540 = vunpack.c.l.b16 %v1670
    %v3541 = vunpack.c.h.b16 %v1670
    %v3542 = vunpack.c.l.b16 %v1671
    %v3543 = vunpack.c.h.b16 %v1671
    %v3544 = vunpack.c.l.b16 %v1672
    %v3545 = vunpack.c.h.b16 %v1672
    %v3546 = vunpack.c.l.b16 %v1673
    %v3547 = vunpack.c.h.b16 %v1673
    %v3548 = vunpack.c.l.b16 %v1674
    %v3549 = vunpack.c.h.b16 %v1674
    %v3550 = vunpack.c.l.b16 %v1675
    %v3551 = vunpack.c.h.b16 %v1675
    %v3552 = vunpack.c.l.b16 %v1676
    %v3553 = vunpack.c.h.b16 %v1676
    %v3554 = vunpack.c.l.b16 %v1677
    %v3555 = vunpack.c.h.b16 %v1677
    %v3556 = vunpack.c.l.b16 %v1678
    %v3557 = vunpack.c.h.b16 %v1678
    %v3558 = vunpack.c.l.b16 %v1679
    %v3559 = vunpack.c.h.b16 %v1679
    %v3560 = vunpack.c.l.b16 %v1680
    %v3561 = vunpack.c.h.b16 %v1680
    %v3562 = vunpack.c.l.b16 %v1681
    %v3563 = vunpack.c.h.b16 %v1681
    %v3564 = vunpack.c.l.b16 %v1682
    %v3565 = vunpack.c.h.b16 %v1682
    %v3566 = vunpack.c.l.b16 %v1683
    %v3567 = vunpack.c.h.b16 %v1683
    %v3568 = vunpack.c.l.b16 %v1684
    %v3569 = vunpack.c.h.b16 %v1684
    %v3570 = vunpack.c.l.b16 %v1685
    %v3571 = vunpack.c.h.b16 %v1685
    %v3572 = vunpack.c.l.b16 %v1686
    %v3573 = vunpack.c.h.b16 %v1686
    %v3574 = vunpack.c.l.b16 %v1687
    %v3575 = vunpack.c.h.b16 %v1687
    %v3576 = vunpack.c.l.b16 %v1688
    %v3577 = vunpack.c.h.b16 %v1688
    %v3578 = vunpack.c.l.b16 %v1689
    %v3579 = vunpack.c.h.b16 %v1689
    %v3580 = vunpack.c.l.b16 %v1690
    %v3581 = vunpack.c.h.b16 %v1690
    %v3582 = vunpack.c.l.b16 %v1691
    %v3583 = vunpack.c.h.b16 %v1691
    %v3584 = vunpack.c.l.b16 %v1692
    %v3585 = vunpack.c.h.b16 %v1692
    %v3586 = vunpack.c.l.b16 %v1693
    %v3587 = vunpack.c.h.b16 %v1693
    %v3588 = vunpack.c.l.b16 %v1694
    %v3589 = vunpack.c.h.b16 %v1694
    %v3590 = vunpack.c.l.b16 %v1695
    %v3591 = vunpack.c.h.b16 %v1695
    %v3592 = vunpack.c.l.b16 %v1696
    %v3593 = vunpack.c.h.b16 %v1696
    %v3594 = vunpack.c.l.b16 %v1697
    %v3595 = vunpack.c.h.b16 %v1697
    %v3596 = vunpack.c.l.b16 %v1698
    %v3597 = vunpack.c.h.b16 %v1698
    %v3598 = vunpack.c.l.b16 %v1699
    %v3599 = vunpack.c.h.b16 %v1699
    %v3600 = vunpack.c.l.b16 %v1700
    %v3601 = vunpack.c.h.b16 %v1700
    %v3602 = vunpack.c.l.b16 %v1701
    %v3603 = vunpack.c.h.b16 %v1701
    %v3604 = vunpack.c.l.b16 %v1702
    %v3605 = vunpack.c.h.b16 %v1702
    %v3606 = vunpack.c.l.b16 %v1703
    %v3607 = vunpack.c.h.b16 %v1703
    %v3608 = vunpack.c.l.b16 %v1704
    %v3609 = vunpack.c.h.b16 %v1704
    %v3610 = vunpack.c.l.b16 %v1705
    %v3611 = vunpack.c.h.b16 %v1705
    %v3612 = vunpack.c.l.b16 %v1706
    %v3613 = vunpack.c.h.b16 %v1706
    %v3614 = vunpack.c.l.b16 %v1707
    %v3615 = vunpack.c.h.b16 %v1707
    %v3616 = vunpack.c.l.b16 %v1708
    %v3617 = vunpack.c.h.b16 %v1708
    %v3618 = vunpack.c.l.b16 %v1709
    %v3619 = vunpack.c.h.b16 %v1709
    %v3620 = vunpack.c.l.b16 %v1710
    %v3621 = vunpack.c.h.b16 %v1710
    %v3622 = vunpack.c.l.b16 %v1711
    %v3623 = vunpack.c.h.b16 %v1711
    %v3624 = vunpack.c.l.b16 %v1712
    %v3625 = vunpack.c.h.b16 %v1712
    %v3626 = vunpack.c.l.b16 %v1713
    %v3627 = vunpack.c.h.b16 %v1713
    %v3628 = vunpack.c.l.b16 %v1714
    %v3629 = vunpack.c.h.b16 %v1714
    %v3630 = vunpack.c.l.b16 %v1715
    %v3631 = vunpack.c.h.b16 %v1715
    %v3632 = vunpack.c.l.b16 %v1716
    %v3633 = vunpack.c.h.b16 %v1716
    %v3634 = vunpack.c.l.b16 %v1717
    %v3635 = vunpack.c.h.b16 %v1717
    %v3636 = vunpack.c.l.b16 %v1718
    %v3637 = vunpack.c.h.b16 %v1718
    %v3638 = vunpack.c.l.b16 %v1719
    %v3639 = vunpack.c.h.b16 %v1719
    %v3640 = vunpack.c.l.b16 %v1720
    %v3641 = vunpack.c.h.b16 %v1720
    %v3642 = vunpack.c.l.b16 %v1721
    %v3643 = vunpack.c.h.b16 %v1721
    %v3644 = vunpack.c.l.b16 %v1722
    %v3645 = vunpack.c.h.b16 %v1722
    %v3646 = vunpack.c.l.b16 %v1723
    %v3647 = vunpack.c.h.b16 %v1723
    %v3648 = vunpack.c.l.b16 %v1724
    %v3649 = vunpack.c.h.b16 %v1724
    %v3650 = vunpack.c.l.b16 %v1725
    %v3651 = vunpack.c.h.b16 %v1725
    %v3652 = vunpack.c.l.b16 %v1726
    %v3653 = vunpack.c.h.b16 %v1726
    %v3654 = vunpack.c.l.b16 %v1727
    %v3655 = vunpack.c.h.b16 %v1727
    %v3656 = vunpack.c.l.b16 %v1728
    %v3657 = vunpack.c.h.b16 %v1728
    %v3658 = vunpack.c.l.b16 %v1729
    %v3659 = vunpack.c.h.b16 %v1729
    %v3660 = vunpack.c.l.b16 %v1730
    %v3661 = vunpack.c.h.b16 %v1730
    %v3662 = vunpack.c.l.b16 %v1731
    %v3663 = vunpack.c.h.b16 %v1731
    %v3664 = vunpack.c.l.b16 %v1732
    %v3665 = vunpack.c.h.b16 %v1732
    %v3666 = vunpack.c.l.b16 %v1733
    %v3667 = vunpack.c.h.b16 %v1733
    %v3668 = vunpack.c.l.b16 %v1734
    %v3669 = vunpack.c.h.b16 %v1734
    %v3670 = vunpack.c.l.b16 %v1735
    %v3671 = vunpack.c.h.b16 %v1735
    %v3672 = vunpack.c.l.b16 %v1736
    %v3673 = vunpack.c.h.b16 %v1736
    %v3674 = vunpack.c.l.b16 %v1737
    %v3675 = vunpack.c.h.b16 %v1737
    %v3676 = vunpack.c.l.b16 %v1738
    %v3677 = vunpack.c.h.b16 %v1738
    %v3678 = vunpack.c.l.b16 %v1739
    %v3679 = vunpack.c.h.b16 %v1739
    %v3680 = vunpack.c.l.b16 %v1740
    %v3681 = vunpack.c.h.b16 %v1740
    %v3682 = vunpack.c.l.b16 %v1741
    %v3683 = vunpack.c.h.b16 %v1741
    %v3684 = vunpack.c.l.b16 %v1742
    %v3685 = vunpack.c.h.b16 %v1742
    %v3686 = vunpack.c.l.b16 %v1743
    %v3687 = vunpack.c.h.b16 %v1743
    %v3688 = vunpack.c.l.b16 %v1744
    %v3689 = vunpack.c.h.b16 %v1744
    %v3690 = vunpack.c.l.b16 %v1745
    %v3691 = vunpack.c.h.b16 %v1745
    %v3692 = vunpack.c.l.b16 %v1746
    %v3693 = vunpack.c.h.b16 %v1746
    %v3694 = vunpack.c.l.b16 %v1747
    %v3695 = vunpack.c.h.b16 %v1747
    %v3696 = vunpack.c.l.b16 %v1748
    %v3697 = vunpack.c.h.b16 %v1748
    %v3698 = vunpack.c.l.b16 %v1749
    %v3699 = vunpack.c.h.b16 %v1749
    %v3700 = vunpack.c.l.b16 %v1750
    %v3701 = vunpack.c.h.b16 %v1750
    %v3702 = vunpack.c.l.b16 %v1751
    %v3703 = vunpack.c.h.b16 %v1751
    %v3704 = vunpack.c.l.b16 %v1752
    %v3705 = vunpack.c.h.b16 %v1752
    %v3706 = vunpack.c.l.b16 %v1753
    %v3707 = vunpack.c.h.b16 %v1753
    %v3708 = vunpack.c.l.b16 %v1754
    %v3709 = vunpack.c.h.b16 %v1754
    %v3710 = vunpack.c.l.b16 %v1755
    %v3711 = vunpack.c.h.b16 %v1755
    %v3712 = vunpack.c.l.b16 %v1756
    %v3713 = vunpack.c.h.b16 %v1756
    %v3714 = vunpack.c.l.b16 %v1757
    %v3715 = vunpack.c.h.b16 %v1757
    %v3716 = vunpack.c.l.b16 %v1758
    %v3717 = vunpack.c.h.b16 %v1758
    %v3718 = vunpack.c.l.b16 %v1759
    %v3719 = vunpack.c.h.b16 %v1759
    %v3720 = vunpack.c.l.b16 %v1760
    %v3721 = vunpack.c.h.b16 %v1760
    %v3722 = vunpack.c.l.b16 %v1761
    %v3723 = vunpack.c.h.b16 %v1761
    %v3724 = vunpack.c.l.b16 %v1762
    %v3725 = vunpack.c.h.b16 %v1762
    %v3726 = vunpack.c.l.b16 %v1763
    %v3727 = vunpack.c.h.b16 %v1763
    %v3728 = vunpack.c.l.b16 %v1764
    %v3729 = vunpack.c.h.b16 %v1764
    %v3730 = vunpack.c.l.b16 %v1765
    %v3731 = vunpack.c.h.b16 %v1765
    %v3732 = vunpack.c.l.b16 %v1766
    %v3733 = vunpack.c.h.b16 %v1766
    %v3734 = vunpack.c.l.b16 %v1767
    %v3735 = vunpack.c.h.b16 %v1767
    %v3736 = vunpack.c.l.b16 %v1768
    %v3737 = vunpack.c.h.b16 %v1768
    %v3738 = vunpack.c.l.b16 %v1769
    %v3739 = vunpack.c.h.b16 %v1769
    %v3740 = vunpack.c.l.b16 %v1770
    %v3741 = vunpack.c.h.b16 %v1770
    %v3742 = vunpack.c.l.b16 %v1771
    %v3743 = vunpack.c.h.b16 %v1771
    %v3744 = vunpack.c.l.b16 %v1772
    %v3745 = vunpack.c.h.b16 %v1772
    %v3746 = vunpack.c.l.b16 %v1773
    %v3747 = vunpack.c.h.b16 %v1773
    %v3748 = vunpack.c.l.b16 %v1774
    %v3749 = vunpack.c.h.b16 %v1774
    %v3750 = vunpack.c.l.b16 %v1775
    %v3751 = vunpack.c.h.b16 %v1775
    %v3752 = vunpack.c.l.b16 %v1776
    %v3753 = vunpack.c.h.b16 %v1776
    %v3754 = vunpack.c.l.b16 %v1777
    %v3755 = vunpack.c.h.b16 %v1777
    %v3756 = vunpack.c.l.b16 %v1778
    %v3757 = vunpack.c.h.b16 %v1778
    %v3758 = vunpack.c.l.b16 %v1779
    %v3759 = vunpack.c.h.b16 %v1779
    %v3760 = vunpack.c.l.b16 %v1780
    %v3761 = vunpack.c.h.b16 %v1780
    %v3762 = vunpack.c.l.b16 %v1781
    %v3763 = vunpack.c.h.b16 %v1781
    %v3764 = vunpack.c.l.b16 %v1782
    %v3765 = vunpack.c.h.b16 %v1782
    %v3766 = vunpack.c.l.b16 %v1783
    %v3767 = vunpack.c.h.b16 %v1783
    %v3768 = vunpack.c.l.b16 %v1784
    %v3769 = vunpack.c.h.b16 %v1784
    %v3770 = vunpack.c.l.b16 %v1785
    %v3771 = vunpack.c.h.b16 %v1785
    %v3772 = vunpack.c.l.b16 %v1786
    %v3773 = vunpack.c.h.b16 %v1786
    %v3774 = vunpack.c.l.b16 %v1787
    %v3775 = vunpack.c.h.b16 %v1787
    %v3776 = vunpack.c.l.b16 %v1788
    %v3777 = vunpack.c.h.b16 %v1788
    %v3778 = vunpack.c.l.b16 %v1789
    %v3779 = vunpack.c.h.b16 %v1789
    %v3780 = vunpack.c.l.b16 %v1790
    %v3781 = vunpack.c.h.b16 %v1790
    %v3782 = vunpack.c.l.b16 %v1791
    %v3783 = vunpack.c.h.b16 %v1791
    %v3784 = vunpack.c.l.b16 %v1792
    %v3785 = vunpack.c.h.b16 %v1792
    %v3786 = vunpack.c.l.b16 %v1793
    %v3787 = vunpack.c.h.b16 %v1793
    %v3788 = vunpack.c.l.b16 %v1794
    %v3789 = vunpack.c.h.b16 %v1794
    %v3790 = vunpack.c.l.b16 %v1795
    %v3791 = vunpack.c.h.b16 %v1795
    %v3792 = vunpack.c.l.b16 %v1796
    %v3793 = vunpack.c.h.b16 %v1796
    %v3794 = vunpack.c.l.b16 %v1797
    %v3795 = vunpack.c.h.b16 %v1797
    %v3796 = vunpack.c.l.b16 %v1798
    %v3797 = vunpack.c.h.b16 %v1798
    %v3798 = vunpack.c.l.b16 %v1799
    %v3799 = vunpack.c.h.b16 %v1799
    %v3800 = vunpack.c.l.b16 %v1800
    %v3801 = vunpack.c.h.b16 %v1800
    %v3802 = vunpack.c.l.b16 %v1801
    %v3803 = vunpack.c.h.b16 %v1801
    %v3804 = vunpack.c.l.b16 %v1802
    %v3805 = vunpack.c.h.b16 %v1802
    %v3806 = vunpack.c.l.b16 %v1803
    %v3807 = vunpack.c.h.b16 %v1803
    %v3808 = vunpack.c.l.b16 %v1804
    %v3809 = vunpack.c.h.b16 %v1804
    %v3810 = vunpack.c.l.b16 %v1805
    %v3811 = vunpack.c.h.b16 %v1805
    %v3812 = vunpack.c.l.b16 %v1806
    %v3813 = vunpack.c.h.b16 %v1806
    %v3814 = vunpack.c.l.b16 %v1807
    %v3815 = vunpack.c.h.b16 %v1807
    %v3816 = vunpack.c.l.b16 %v1808
    %v3817 = vunpack.c.h.b16 %v1808
    %v3818 = vunpack.c.l.b16 %v1809
    %v3819 = vunpack.c.h.b16 %v1809
    %v3820 = vunpack.c.l.b16 %v1810
    %v3821 = vunpack.c.h.b16 %v1810
    %v3822 = vunpack.c.l.b16 %v1811
    %v3823 = vunpack.c.h.b16 %v1811
    %v3824 = vunpack.c.l.b16 %v1812
    %v3825 = vunpack.c.h.b16 %v1812
    %v3826 = vunpack.c.l.b16 %v1813
    %v3827 = vunpack.c.h.b16 %v1813
    %v3828 = vunpack.c.l.b16 %v1814
    %v3829 = vunpack.c.h.b16 %v1814
    %v3830 = vunpack.c.l.b16 %v1815
    %v3831 = vunpack.c.h.b16 %v1815
    %v3832 = vunpack.c.l.b16 %v1816
    %v3833 = vunpack.c.h.b16 %v1816
    %v3834 = vunpack.c.l.b16 %v1817
    %v3835 = vunpack.c.h.b16 %v1817
    %v3836 = vunpack.c.l.b16 %v1818
    %v3837 = vunpack.c.h.b16 %v1818
    %v3838 = vunpack.c.l.b16 %v1819
    %v3839 = vunpack.c.h.b16 %v1819
    %v3840 = vunpack.c.l.b16 %v1820
    %v3841 = vunpack.c.h.b16 %v1820
    %v3842 = vunpack.c.l.b16 %v1821
    %v3843 = vunpack.c.h.b16 %v1821
    %v3844 = vunpack.c.l.b16 %v1822
    %v3845 = vunpack.c.h.b16 %v1822
    %v3846 = vunpack.c.l.b16 %v1823
    %v3847 = vunpack.c.h.b16 %v1823
    %v3848 = vunpack.c.l.b16 %v1824
    %v3849 = vunpack.c.h.b16 %v1824
    %v3850 = vunpack.c.l.b16 %v1825
    %v3851 = vunpack.c.h.b16 %v1825
    %v3852 = vunpack.c.l.b16 %v1826
    %v3853 = vunpack.c.h.b16 %v1826
    %v3854 = vunpack.c.l.b16 %v1827
    %v3855 = vunpack.c.h.b16 %v1827
    %v3856 = vunpack.c.l.b16 %v1828
    %v3857 = vunpack.c.h.b16 %v1828
    %v3858 = vunpack.c.l.b16 %v1829
    %v3859 = vunpack.c.h.b16 %v1829
    %v3860 = vunpack.c.l.b16 %v1830
    %v3861 = vunpack.c.h.b16 %v1830
    %v3862 = vunpack.c.l.b16 %v1831
    %v3863 = vunpack.c.h.b16 %v1831
    %v3864 = vunpack.c.l.b16 %v1832
    %v3865 = vunpack.c.h.b16 %v1832
    %v3866 = vunpack.c.l.b16 %v1833
    %v3867 = vunpack.c.h.b16 %v1833
    %v3868 = vunpack.c.l.b16 %v1834
    %v3869 = vunpack.c.h.b16 %v1834
    %v3870 = vunpack.c.l.b16 %v1835
    %v3871 = vunpack.c.h.b16 %v1835
    %v3872 = vunpack.c.l.b16 %v1836
    %v3873 = vunpack.c.h.b16 %v1836
    %v3874 = vunpack.c.l.b16 %v1837
    %v3875 = vunpack.c.h.b16 %v1837
    %v3876 = vunpack.c.l.b16 %v1838
    %v3877 = vunpack.c.h.b16 %v1838
    %v3878 = vunpack.c.l.b16 %v1839
    %v3879 = vunpack.c.h.b16 %v1839
    %v3880 = vunpack.c.l.b16 %v1840
    %v3881 = vunpack.c.h.b16 %v1840
    %v3882 = vunpack.c.l.b16 %v1841
    %v3883 = vunpack.c.h.b16 %v1841
    %v3884 = vunpack.c.l.b16 %v1842
    %v3885 = vunpack.c.h.b16 %v1842
    %v3886 = vunpack.c.l.b16 %v1843
    %v3887 = vunpack.c.h.b16 %v1843
    %v3888 = vunpack.c.l.b16 %v1844
    %v3889 = vunpack.c.h.b16 %v1844
    %v3890 = vunpack.c.l.b16 %v1845
    %v3891 = vunpack.c.h.b16 %v1845
    %v3892 = vunpack.c.l.b16 %v1846
    %v3893 = vunpack.c.h.b16 %v1846
    %v3894 = vunpack.c.l.b16 %v1847
    %v3895 = vunpack.c.h.b16 %v1847
    %v3896 = vunpack.c.l.b16 %v1848
    %v3897 = vunpack.c.h.b16 %v1848
    %v3898 = vunpack.c.l.b16 %v1849
    %v3899 = vunpack.c.h.b16 %v1849
    %v3900 = vunpack.c.l.b16 %v1850
    %v3901 = vunpack.c.h.b16 %v1850
    %v3902 = vunpack.c.l.b16 %v1851
    %v3903 = vunpack.c.h.b16 %v1851
    %v3904 = vunpack.c.l.b16 %v1852
    %v3905 = vunpack.c.h.b16 %v1852
    %v3906 = vunpack.c.l.b16 %v1853
    %v3907 = vunpack.c.h.b16 %v1853
    %v3908 = vunpack.c.l.b16 %v1854
    %v3909 = vunpack.c.h.b16 %v1854
    %v3910 = vunpack.c.l.b16 %v1855
    %v3911 = vunpack.c.h.b16 %v1855
    %v3912 = vunpack.c.l.b16 %v1856
    %v3913 = vunpack.c.h.b16 %v1856
    %v3914 = vunpack.c.l.b16 %v1857
    %v3915 = vunpack.c.h.b16 %v1857
    %v3916 = vunpack.c.l.b16 %v1858
    %v3917 = vunpack.c.h.b16 %v1858
    %v3918 = vunpack.c.l.b16 %v1859
    %v3919 = vunpack.c.h.b16 %v1859
    %v3920 = vunpack.c.l.b16 %v1860
    %v3921 = vunpack.c.h.b16 %v1860
    %v3922 = vunpack.c.l.b16 %v1861
    %v3923 = vunpack.c.h.b16 %v1861
    %v3924 = vunpack.c.l.b16 %v1862
    %v3925 = vunpack.c.h.b16 %v1862
    %v3926 = vunpack.c.l.b16 %v1863
    %v3927 = vunpack.c.h.b16 %v1863
    %v3928 = vunpack.c.l.b16 %v1864
    %v3929 = vunpack.c.h.b16 %v1864
    %v3930 = vunpack.c.l.b16 %v1865
    %v3931 = vunpack.c.h.b16 %v1865
    %v3932 = vunpack.c.l.b16 %v1866
    %v3933 = vunpack.c.h.b16 %v1866
    %v3934 = vunpack.c.l.b16 %v1867
    %v3935 = vunpack.c.h.b16 %v1867
    %v3936 = vunpack.c.l.b16 %v1868
    %v3937 = vunpack.c.h.b16 %v1868
    %v3938 = vunpack.c.l.b16 %v1869
    %v3939 = vunpack.c.h.b16 %v1869
    %v3940 = vunpack.c.l.b16 %v1870
    %v3941 = vunpack.c.h.b16 %v1870
    %v3942 = vunpack.c.l.b16 %v1871
    %v3943 = vunpack.c.h.b16 %v1871
    %v3944 = vunpack.c.l.b16 %v1872
    %v3945 = vunpack.c.h.b16 %v1872
    %v3946 = vunpack.c.l.b16 %v1873
    %v3947 = vunpack.c.h.b16 %v1873
    %v3948 = vunpack.c.l.b16 %v1874
    %v3949 = vunpack.c.h.b16 %v1874
    %v3950 = vunpack.c.l.b16 %v1875
    %v3951 = vunpack.c.h.b16 %v1875
    %v3952 = vunpack.c.l.b16 %v1876
    %v3953 = vunpack.c.h.b16 %v1876
    %v3954 = vunpack.c.l.b16 %v1877
    %v3955 = vunpack.c.h.b16 %v1877
    %v3956 = vunpack.c.l.b16 %v1878
    %v3957 = vunpack.c.h.b16 %v1878
    %v3958 = vunpack.c.l.b16 %v1879
    %v3959 = vunpack.c.h.b16 %v1879
    %v3960 = vunpack.c.l.b16 %v1880
    %v3961 = vunpack.c.h.b16 %v1880
    %v3962 = vunpack.c.l.b16 %v1881
    %v3963 = vunpack.c.h.b16 %v1881
    %v3964 = vunpack.c.l.b16 %v1882
    %v3965 = vunpack.c.h.b16 %v1882
    %v3966 = vunpack.c.l.b16 %v1883
    %v3967 = vunpack.c.h.b16 %v1883
    %v3968 = vunpack.c.l.b16 %v1884
    %v3969 = vunpack.c.h.b16 %v1884
    %v3970 = vunpack.c.l.b16 %v1885
    %v3971 = vunpack.c.h.b16 %v1885
    %v3972 = vunpack.c.l.b16 %v1886
    %v3973 = vunpack.c.h.b16 %v1886
    %v3974 = vunpack.c.l.b16 %v1887
    %v3975 = vunpack.c.h.b16 %v1887
    %v3976 = vunpack.c.l.b16 %v1888
    %v3977 = vunpack.c.h.b16 %v1888
    %v3978 = vunpack.c.l.b16 %v1889
    %v3979 = vunpack.c.h.b16 %v1889
    %v3980 = vunpack.c.l.b16 %v1890
    %v3981 = vunpack.c.h.b16 %v1890
    %v3982 = vunpack.c.l.b16 %v1891
    %v3983 = vunpack.c.h.b16 %v1891
    %v3984 = vunpack.c.l.b16 %v1892
    %v3985 = vunpack.c.h.b16 %v1892
    %v3986 = vunpack.c.l.b16 %v1893
    %v3987 = vunpack.c.h.b16 %v1893
    %v3988 = vunpack.c.l.b16 %v1894
    %v3989 = vunpack.c.h.b16 %v1894
    %v3990 = vunpack.c.l.b16 %v1895
    %v3991 = vunpack.c.h.b16 %v1895
    %v3992 = vunpack.c.l.b16 %v1896
    %v3993 = vunpack.c.h.b16 %v1896
    %v3994 = vunpack.c.l.b16 %v1897
    %v3995 = vunpack.c.h.b16 %v1897
    %v3996 = vunpack.c.l.b16 %v1898
    %v3997 = vunpack.c.h.b16 %v1898
    %v3998 = vunpack.c.l.b16 %v1899
    %v3999 = vunpack.c.h.b16 %v1899
    %v4000 = vunpack.c.l.b16 %v1900
    %v4001 = vunpack.c.h.b16 %v1900
    %v4002 = vunpack.c.l.b16 %v1901
    %v4003 = vunpack.c.h.b16 %v1901
    %v4004 = vunpack.c.l.b16 %v1902
    %v4005 = vunpack.c.h.b16 %v1902
    %v4006 = vunpack.c.l.b16 %v1903
    %v4007 = vunpack.c.h.b16 %v1903
    %v4008 = vunpack.c.l.b16 %v1904
    %v4009 = vunpack.c.h.b16 %v1904
    %v4010 = vunpack.c.l.b16 %v1905
    %v4011 = vunpack.c.h.b16 %v1905
    %v4012 = vunpack.c.l.b16 %v1906
    %v4013 = vunpack.c.h.b16 %v1906
    %v4014 = vunpack.c.l.b16 %v1907
    %v4015 = vunpack.c.h.b16 %v1907
    %v4016 = vunpack.c.l.b16 %v1908
    %v4017 = vunpack.c.h.b16 %v1908
    %v4018 = vunpack.c.l.b16 %v1909
    %v4019 = vunpack.c.h.b16 %v1909
    %v4020 = vunpack.c.l.b16 %v1910
    %v4021 = vunpack.c.h.b16 %v1910
    %v4022 = vunpack.c.l.b16 %v1911
    %v4023 = vunpack.c.h.b16 %v1911
    %v4024 = vunpack.c.l.b16 %v1912
    %v4025 = vunpack.c.h.b16 %v1912
    %v4026 = vunpack.c.l.b16 %v1913
    %v4027 = vunpack.c.h.b16 %v1913
    %v4028 = vunpack.c.l.b16 %v1914
    %v4029 = vunpack.c.h.b16 %v1914
    %v4030 = vunpack.c.l.b16 %v1915
    %v4031 = vunpack.c.h.b16 %v1915
    %v4032 = vunpack.c.l.b16 %v1916
    %v4033 = vunpack.c.h.b16 %v1916
    %v4034 = vunpack.c.l.b16 %v1917
    %v4035 = vunpack.c.h.b16 %v1917
    %v4036 = vunpack.c.l.b16 %v1918
    %v4037 = vunpack.c.h.b16 %v1918
    %v4038 = vunpack.c.l.b16 %v1919
    %v4039 = vunpack.c.h.b16 %v1919
    %v4040 = vunpack.c.l.b16 %v1920
    %v4041 = vunpack.c.h.b16 %v1920
    %v4042 = vunpack.c.l.b16 %v1921
    %v4043 = vunpack.c.h.b16 %v1921
    %v4044 = vunpack.c.l.b16 %v1922
    %v4045 = vunpack.c.h.b16 %v1922
    %v4046 = vunpack.c.l.b16 %v1923
    %v4047 = vunpack.c.h.b16 %v1923
    %v4048 = vunpack.c.l.b16 %v1924
    %v4049 = vunpack.c.h.b16 %v1924
    %v4050 = vunpack.c.l.b16 %v1925
    %v4051 = vunpack.c.h.b16 %v1925
    %v4052 = vunpack.c.l.b16 %v1926
    %v4053 = vunpack.c.h.b16 %v1926
    %v4054 = vunpack.c.l.b16 %v1927
    %v4055 = vunpack.c.h.b16 %v1927
    %v4056 = vunpack.c.l.b16 %v1928
    %v4057 = vunpack.c.h.b16 %v1928
    %v4058 = vunpack.c.l.b16 %v1929
    %v4059 = vunpack.c.h.b16 %v1929
    %v4060 = vunpack.c.l.b16 %v1930
    %v4061 = vunpack.c.h.b16 %v1930
    %v4062 = vunpack.c.l.b16 %v1931
    %v4063 = vunpack.c.h.b16 %v1931
    %v4064 = vunpack.c.l.b16 %v1932
    %v4065 = vunpack.c.h.b16 %v1932
    %v4066 = vunpack.c.l.b16 %v1933
    %v4067 = vunpack.c.h.b16 %v1933
    %v4068 = vunpack.c.l.b16 %v1934
    %v4069 = vunpack.c.h.b16 %v1934
    %v4070 = vunpack.c.l.b16 %v1935
    %v4071 = vunpack.c.h.b16 %v1935
    %v4072 = vunpack.c.l.b16 %v1936
    %v4073 = vunpack.c.h.b16 %v1936
    %v4074 = vunpack.c.l.b16 %v1937
    %v4075 = vunpack.c.h.b16 %v1937
    %v4076 = vunpack.c.l.b16 %v1938
    %v4077 = vunpack.c.h.b16 %v1938
    %v4078 = vunpack.c.l.b16 %v1939
    %v4079 = vunpack.c.h.b16 %v1939
    %v4080 = vunpack.c.l.b16 %v1940
    %v4081 = vunpack.c.h.b16 %v1940
    %v4082 = vunpack.c.l.b16 %v1941
    %v4083 = vunpack.c.h.b16 %v1941
    %v4084 = vunpack.c.l.b16 %v1942
    %v4085 = vunpack.c.h.b16 %v1942
    %v4086 = vunpack.c.l.b16 %v1943
    %v4087 = vunpack.c.h.b16 %v1943
    %v4088 = vunpack.c.l.b16 %v1944
    %v4089 = vunpack.c.h.b16 %v1944
    %v4090 = vunpack.c.l.b16 %v1945
    %v4091 = vunpack.c.h.b16 %v1945
    %v4092 = vunpack.c.l.b16 %v1946
    %v4093 = vunpack.c.h.b16 %v1946
    %v4094 = vunpack.c.l.b16 %v1947
    %v4095 = vunpack.c.h.b16 %v1947
    %v4096 = vunpack.c.l.b16 %v1948
    %v4097 = vunpack.c.h.b16 %v1948
    %v4098 = vunpack.c.l.b16 %v1949
    %v4099 = vunpack.c.h.b16 %v1949
    %v4100 = vunpack.c.l.b16 %v1950
    %v4101 = vunpack.c.h.b16 %v1950
    %v4102 = vunpack.c.l.b16 %v1951
    %v4103 = vunpack.c.h.b16 %v1951
    %v4104 = vunpack.c.l.b16 %v1952
    %v4105 = vunpack.c.h.b16 %v1952
    %v4106 = vunpack.c.l.b16 %v1953
    %v4107 = vunpack.c.h.b16 %v1953
    %v4108 = vunpack.c.l.b16 %v1954
    %v4109 = vunpack.c.h.b16 %v1954
    %v4110 = vunpack.c.l.b16 %v1955
    %v4111 = vunpack.c.h.b16 %v1955
    %v4112 = vunpack.c.l.b16 %v1956
    %v4113 = vunpack.c.h.b16 %v1956
    %v4114 = vunpack.c.l.b16 %v1957
    %v4115 = vunpack.c.h.b16 %v1957
    %v4116 = vunpack.c.l.b16 %v1958
    %v4117 = vunpack.c.h.b16 %v1958
    %v4118 = vunpack.c.l.b16 %v1959
    %v4119 = vunpack.c.h.b16 %v1959
    %v4120 = vunpack.c.l.b16 %v1960
    %v4121 = vunpack.c.h.b16 %v1960
    %v4122 = vunpack.c.l.b16 %v1961
    %v4123 = vunpack.c.h.b16 %v1961
    %v4124 = vunpack.c.l.b16 %v1962
    %v4125 = vunpack.c.h.b16 %v1962
    %v4126 = vunpack.c.l.b16 %v1963
    %v4127 = vunpack.c.h.b16 %v1963
    %v4128 = vunpack.c.l.b16 %v1964
    %v4129 = vunpack.c.h.b16 %v1964
    %v4130 = vunpack.c.l.b16 %v1965
    %v4131 = vunpack.c.h.b16 %v1965
    %v4132 = vunpack.c.l.b16 %v1966
    %v4133 = vunpack.c.h.b16 %v1966
    %v4134 = vunpack.c.l.b16 %v1967
    %v4135 = vunpack.c.h.b16 %v1967
    %v4136 = vunpack.c.l.b16 %v1968
    %v4137 = vunpack.c.h.b16 %v1968
    %v4138 = vunpack.c.l.b16 %v1969
    %v4139 = vunpack.c.h.b16 %v1969
    %v4140 = vunpack.c.l.b16 %v1970
    %v4141 = vunpack.c.h.b16 %v1970
    %v4142 = vunpack.c.l.b16 %v1971
    %v4143 = vunpack.c.h.b16 %v1971
    %v4144 = vunpack.c.l.b16 %v1972
    %v4145 = vunpack.c.h.b16 %v1972
    %v4146 = vunpack.c.l.b16 %v1973
    %v4147 = vunpack.c.h.b16 %v1973
    %v4148 = vunpack.c.l.b16 %v1974
    %v4149 = vunpack.c.h.b16 %v1974
    %v4150 = vunpack.c.l.b16 %v1975
    %v4151 = vunpack.c.h.b16 %v1975
    %v4152 = vunpack.c.l.b16 %v1976
    %v4153 = vunpack.c.h.b16 %v1976
    %v4154 = vunpack.c.l.b16 %v1977
    %v4155 = vunpack.c.h.b16 %v1977
    %v4156 = vunpack.c.l.b16 %v1978
    %v4157 = vunpack.c.h.b16 %v1978
    %v4158 = vunpack.c.l.b16 %v1979
    %v4159 = vunpack.c.h.b16 %v1979
    %v4160 = vunpack.c.l.b16 %v1980
    %v4161 = vunpack.c.h.b16 %v1980
    %v4162 = vunpack.c.l.b16 %v1981
    %v4163 = vunpack.c.h.b16 %v1981
    %v4164 = vunpack.c.l.b16 %v1982
    %v4165 = vunpack.c.h.b16 %v1982
    %v4166 = vunpack.c.l.b16 %v1983
    %v4167 = vunpack.c.h.b16 %v1983
    %v4168 = vunpack.c.l.b16 %v1984
    %v4169 = vunpack.c.h.b16 %v1984
    %v4170 = vunpack.c.l.b16 %v1985
    %v4171 = vunpack.c.h.b16 %v1985
    %v4172 = vunpack.c.l.b16 %v1986
    %v4173 = vunpack.c.h.b16 %v1986
    %v4174 = vpack.c.b16 %v2726, %v2724
    %v4175 = vpack.c.b16 %v2727, %v2725
    %v4176 = vpack.c.b16 %v2730, %v2728
    %v4177 = vpack.c.b16 %v2731, %v2729
    %v4178 = vpack.c.b16 %v2734, %v2732
    %v4179 = vpack.c.b16 %v2735, %v2733
    %v4180 = vpack.c.b16 %v2738, %v2736
    %v4181 = vpack.c.b16 %v2739, %v2737
    %v4182 = vpack.c.b16 %v2742, %v2740
    %v4183 = vpack.c.b16 %v2743, %v2741
    %v4184 = vpack.c.b16 %v2746, %v2744
    %v4185 = vpack.c.b16 %v2747, %v2745
    %v4186 = vpack.c.b16 %v2750, %v2748
    %v4187 = vpack.c.b16 %v2751, %v2749
    %v4188 = vpack.c.b16 %v2754, %v2752
    %v4189 = vpack.c.b16 %v2755, %v2753
    %v4190 = vpack.c.b16 %v2758, %v2756
    %v4191 = vpack.c.b16 %v2759, %v2757
    %v4192 = vpack.c.b16 %v2762, %v2760
    %v4193 = vpack.c.b16 %v2763, %v2761
    %v4194 = vpack.c.b16 %v2766, %v2764
    %v4195 = vpack.c.b16 %v2767, %v2765
    %v4196 = vpack.c.b16 %v2770, %v2768
    %v4197 = vpack.c.b16 %v2771, %v2769
    %v4198 = vpack.c.b16 %v2774, %v2772
    %v4199 = vpack.c.b16 %v2775, %v2773
    %v4200 = vpack.c.b16 %v2778, %v2776
    %v4201 = vpack.c.b16 %v2779, %v2777
    %v4202 = vpack.c.b16 %v2782, %v2780
    %v4203 = vpack.c.b16 %v2783, %v2781
    %v4204 = vpack.c.b16 %v2786, %v2784
    %v4205 = vpack.c.b16 %v2787, %v2785
    %v4206 = vpack.c.b16 %v2790, %v2788
    %v4207 = vpack.c.b16 %v2791, %v2789
    %v4208 = vpack.c.b16 %v2794, %v2792
    %v4209 = vpack.c.b16 %v2795, %v2793
    %v4210 = vpack.c.b16 %v2798, %v2796
    %v4211 = vpack.c.b16 %v2799, %v2797
    %v4212 = vpack.c.b16 %v2802, %v2800
    %v4213 = vpack.c.b16 %v2803, %v2801
    %v4214 = vpack.c.b16 %v2806, %v2804
    %v4215 = vpack.c.b16 %v2807, %v2805
    %v4216 = vpack.c.b16 %v2810, %v2808
    %v4217 = vpack.c.b16 %v2811, %v2809
    %v4218 = vpack.c.b16 %v2814, %v2812
    %v4219 = vpack.c.b16 %v2815, %v2813
    %v4220 = vpack.c.b16 %v2818, %v2816
    %v4221 = vpack.c.b16 %v2819, %v2817
    %v4222 = vpack.c.b16 %v2822, %v2820
    %v4223 = vpack.c.b16 %v2823, %v2821
    %v4224 = vpack.c.b16 %v2826, %v2824
    %v4225 = vpack.c.b16 %v2827, %v2825
    %v4226 = vpack.c.b16 %v2830, %v2828
    %v4227 = vpack.c.b16 %v2831, %v2829
    %v4228 = vpack.c.b16 %v2834, %v2832
    %v4229 = vpack.c.b16 %v2835, %v2833
    %v4230 = vpack.c.b16 %v2838, %v2836
    %v4231 = vpack.c.b16 %v2839, %v2837
    %v4232 = vpack.c.b16 %v2842, %v2840
    %v4233 = vpack.c.b16 %v2843, %v2841
    %v4234 = vpack.c.b16 %v2846, %v2844
    %v4235 = vpack.c.b16 %v2847, %v2845
    %v4236 = vpack.c.b16 %v2850, %v2848
    %v4237 = vpack.c.b16 %v2851, %v2849
    %v4238 = vpack.c.b16 %v2854, %v2852
    %v4239 = vpack.c.b16 %v2855, %v2853
    %v4240 = vpack.c.b16 %v2858, %v2856
    %v4241 = vpack.c.b16 %v2859, %v2857
    %v4242 = vpack.c.b16 %v2862, %v2860
    %v4243 = vpack.c.b16 %v2863, %v2861
    %v4244 = vpack.c.b16 %v2866, %v2864
    %v4245 = vpack.c.b16 %v2867, %v2865
    %v4246 = vpack.c.b16 %v2870, %v2868
    %v4247 = vpack.c.b16 %v2871, %v2869
    %v4248 = vpack.c.b16 %v2874, %v2872
    %v4249 = vpack.c.b16 %v2875, %v2873
    %v4250 = vpack.c.b16 %v2878, %v2876
    %v4251 = vpack.c.b16 %v2879, %v2877
    %v4252 = vpack.c.b16 %v2882, %v2880
    %v4253 = vpack.c.b16 %v2883, %v2881
    %v4254 = vpack.c.b16 %v2886, %v2884
    %v4255 = vpack.c.b16 %v2887, %v2885
    %v4256 = vpack.c.b16 %v2890, %v2888
    %v4257 = vpack.c.b16 %v2891, %v2889
    %v4258 = vpack.c.b16 %v2894, %v2892
    %v4259 = vpack.c.b16 %v2895, %v2893
    %v4260 = vpack.c.b16 %v2898, %v2896
    %v4261 = vpack.c.b16 %v2899, %v2897
    %v4262 = vpack.c.b16 %v2902, %v2900
    %v4263 = vpack.c.b16 %v2903, %v2901
    %v4264 = vpack.c.b16 %v2906, %v2904
    %v4265 = vpack.c.b16 %v2907, %v2905
    %v4266 = vpack.c.b16 %v2910, %v2908
    %v4267 = vpack.c.b16 %v2911, %v2909
    %v4268 = vpack.c.b16 %v2914, %v2912
    %v4269 = vpack.c.b16 %v2915, %v2913
    %v4270 = vpack.c.b16 %v2918, %v2916
    %v4271 = vpack.c.b16 %v2919, %v2917
    %v4272 = vpack.c.b16 %v2922, %v2920
    %v4273 = vpack.c.b16 %v2923, %v2921
    %v4274 = vpack.c.b16 %v2926, %v2924
    %v4275 = vpack.c.b16 %v2927, %v2925
    %v4276 = vpack.c.b16 %v2930, %v2928
    %v4277 = vpack.c.b16 %v2931, %v2929
    %v4278 = vpack.c.b16 %v2934, %v2932
    %v4279 = vpack.c.b16 %v2935, %v2933
    %v4280 = vpack.c.b16 %v2938, %v2936
    %v4281 = vpack.c.b16 %v2939, %v2937
    %v4282 = vpack.c.b16 %v2942, %v2940
    %v4283 = vpack.c.b16 %v2943, %v2941
    %v4284 = vpack.c.b16 %v2946, %v2944
    %v4285 = vpack.c.b16 %v2947, %v2945
    %v4286 = vpack.c.b16 %v2950, %v2948
    %v4287 = vpack.c.b16 %v2951, %v2949
    %v4288 = vpack.c.b16 %v2954, %v2952
    %v4289 = vpack.c.b16 %v2955, %v2953
    %v4290 = vpack.c.b16 %v2958, %v2956
    %v4291 = vpack.c.b16 %v2959, %v2957
    %v4292 = vpack.c.b16 %v2962, %v2960
    %v4293 = vpack.c.b16 %v2963, %v2961
    %v4294 = vpack.c.b16 %v2966, %v2964
    %v4295 = vpack.c.b16 %v2967, %v2965
    %v4296 = vpack.c.b16 %v2970, %v2968
    %v4297 = vpack.c.b16 %v2971, %v2969
    %v4298 = vpack.c.b16 %v2974, %v2972
    %v4299 = vpack.c.b16 %v2975, %v2973
    %v4300 = vpack.c.b16 %v2978, %v2976
    %v4301 = vpack.c.b16 %v2979, %v2977
    %v4302 = vpack.c.b16 %v2982, %v2980
    %v4303 = vpack.c.b16 %v2983, %v2981
    %v4304 = vpack.c.b16 %v2986, %v2984
    %v4305 = vpack.c.b16 %v2987, %v2985
    %v4306 = vpack.c.b16 %v2990, %v2988
    %v4307 = vpack.c.b16 %v2991, %v2989
    %v4308 = vpack.c.b16 %v2994, %v2992
    %v4309 = vpack.c.b16 %v2995, %v2993
    %v4310 = vpack.c.b16 %v2998, %v2996
    %v4311 = vpack.c.b16 %v2999, %v2997
    %v4312 = vpack.c.b16 %v3002, %v3000
    %v4313 = vpack.c.b16 %v3003, %v3001
    %v4314 = vpack.c.b16 %v3006, %v3004
    %v4315 = vpack.c.b16 %v3007, %v3005
    %v4316 = vpack.c.b16 %v3010, %v3008
    %v4317 = vpack.c.b16 %v3011, %v3009
    %v4318 = vpack.c.b16 %v3014, %v3012
    %v4319 = vpack.c.b16 %v3015, %v3013
    %v4320 = vpack.c.b16 %v3018, %v3016
    %v4321 = vpack.c.b16 %v3019, %v3017
    %v4322 = vpack.c.b16 %v3022, %v3020
    %v4323 = vpack.c.b16 %v3023, %v3021
    %v4324 = vpack.c.b16 %v3026, %v3024
    %v4325 = vpack.c.b16 %v3027, %v3025
    %v4326 = vpack.c.b16 %v3030, %v3028
    %v4327 = vpack.c.b16 %v3031, %v3029
    %v4328 = vpack.c.b16 %v3034, %v3032
    %v4329 = vpack.c.b16 %v3035, %v3033
    %v4330 = vpack.c.b16 %v3038, %v3036
    %v4331 = vpack.c.b16 %v3039, %v3037
    %v4332 = vpack.c.b16 %v3042, %v3040
    %v4333 = vpack.c.b16 %v3043, %v3041
    %v4334 = vpack.c.b16 %v3046, %v3044
    %v4335 = vpack.c.b16 %v3047, %v3045
    %v4336 = vpack.c.b16 %v3050, %v3048
    %v4337 = vpack.c.b16 %v3051, %v3049
    %v4338 = vpack.c.b16 %v3054, %v3052
    %v4339 = vpack.c.b16 %v3055, %v3053
    %v4340 = vpack.c.b16 %v3058, %v3056
    %v4341 = vpack.c.b16 %v3059, %v3057
    %v4342 = vpack.c.b16 %v3062, %v3060
    %v4343 = vpack.c.b16 %v3063, %v3061
    %v4344 = vpack.c.b16 %v3066, %v3064
    %v4345 = vpack.c.b16 %v3067, %v3065
    %v4346 = vpack.c.b16 %v3070, %v3068
    %v4347 = vpack.c.b16 %v3071, %v3069
    %v4348 = vpack.c.b16 %v3074, %v3072
    %v4349 = vpack.c.b16 %v3075, %v3073
    %v4350 = vpack.c.b16 %v3078, %v3076
    %v4351 = vpack.c.b16 %v3079, %v3077
    %v4352 = vpack.c.b16 %v3082, %v3080
    %v4353 = vpack.c.b16 %v3083, %v3081
    %v4354 = vpack.c.b16 %v3086, %v3084
    %v4355 = vpack.c.b16 %v3087, %v3085
    %v4356 = vpack.c.b16 %v3090, %v3088
    %v4357 = vpack.c.b16 %v3091, %v3089
    %v4358 = vpack.c.b16 %v3094, %v3092
    %v4359 = vpack.c.b16 %v3095, %v3093
    %v4360 = vpack.c.b16 %v3098, %v3096
    %v4361 = vpack.c.b16 %v3099, %v3097
    %v4362 = vpack.c.b16 %v3102, %v3100
    %v4363 = vpack.c.b16 %v3103, %v3101
    %v4364 = vpack.c.b16 %v3106, %v3104
    %v4365 = vpack.c.b16 %v3107, %v3105
    %v4366 = vpack.c.b16 %v3110, %v3108
    %v4367 = vpack.c.b16 %v3111, %v3109
    %v4368 = vpack.c.b16 %v3114, %v3112
    %v4369 = vpack.c.b16 %v3115, %v3113
    %v4370 = vpack.c.b16 %v3118, %v3116
    %v4371 = vpack.c.b16 %v3119, %v3117
    %v4372 = vpack.c.b16 %v3122, %v3120
    %v4373 = vpack.c.b16 %v3123, %v3121
    %v4374 = vpack.c.b16 %v3126, %v3124
    %v4375 = vpack.c.b16 %v3127, %v3125
    %v4376 = vpack.c.b16 %v3130, %v3128
    %v4377 = vpack.c.b16 %v3131, %v3129
    %v4378 = vpack.c.b16 %v3134, %v3132
    %v4379 = vpack.c.b16 %v3135, %v3133
    %v4380 = vpack.c.b16 %v3138, %v3136
    %v4381 = vpack.c.b16 %v3139, %v3137
    %v4382 = vpack.c.b16 %v3142, %v3140
    %v4383 = vpack.c.b16 %v3143, %v3141
    %v4384 = vpack.c.b16 %v3146, %v3144
    %v4385 = vpack.c.b16 %v3147, %v3145
    %v4386 = vpack.c.b16 %v3150, %v3148
    %v4387 = vpack.c.b16 %v3151, %v3149
    %v4388 = vpack.c.b16 %v3154, %v3152
    %v4389 = vpack.c.b16 %v3155, %v3153
    %v4390 = vpack.c.b16 %v3158, %v3156
    %v4391 = vpack.c.b16 %v3159, %v3157
    %v4392 = vpack.c.b16 %v3162, %v3160
    %v4393 = vpack.c.b16 %v3163, %v3161
    %v4394 = vpack.c.b16 %v3166, %v3164
    %v4395 = vpack.c.b16 %v3167, %v3165
    %v4396 = vpack.c.b16 %v3170, %v3168
    %v4397 = vpack.c.b16 %v3171, %v3169
    %v4398 = vpack.c.b16 %v3174, %v3172
    %v4399 = vpack.c.b16 %v3175, %v3173
    %v4400 = vpack.c.b16 %v3178, %v3176
    %v4401 = vpack.c.b16 %v3179, %v3177
    %v4402 = vpack.c.b16 %v3182, %v3180
    %v4403 = vpack.c.b16 %v3183, %v3181
    %v4404 = vpack.c.b16 %v3186, %v3184
    %v4405 = vpack.c.b16 %v3187, %v3185
    %v4406 = vpack.c.b16 %v3190, %v3188
    %v4407 = vpack.c.b16 %v3191, %v3189
    %v4408 = vpack.c.b16 %v3194, %v3192
    %v4409 = vpack.c.b16 %v3195, %v3193
    %v4410 = vpack.c.b16 %v3198, %v3196
    %v4411 = vpack.c.b16 %v3199, %v3197
    %v4412 = vpack.c.b16 %v3202, %v3200
    %v4413 = vpack.c.b16 %v3203, %v3201
    %v4414 = vpack.c.b16 %v3206, %v3204
    %v4415 = vpack.c.b16 %v3207, %v3205
    %v4416 = vpack.c.b16 %v3210, %v3208
    %v4417 = vpack.c.b16 %v3211, %v3209
    %v4418 = vpack.c.b16 %v3214, %v3212
    %v4419 = vpack.c.b16 %v3215, %v3213
    %v4420 = vpack.c.b16 %v3218, %v3216
    %v4421 = vpack.c.b16 %v3219, %v3217
    %v4422 = vpack.c.b16 %v3222, %v3220
    %v4423 = vpack.c.b16 %v3223, %v3221
    %v4424 = vpack.c.b16 %v3226, %v3224
    %v4425 = vpack.c.b16 %v3227, %v3225
    %v4426 = vpack.c.b16 %v3230, %v3228
    %v4427 = vpack.c.b16 %v3231, %v3229
    %v4428 = vpack.c.b16 %v3234, %v3232
    %v4429 = vpack.c.b16 %v3235, %v3233
    %v4430 = vpack.c.b16 %v3238, %v3236
    %v4431 = vpack.c.b16 %v3239, %v3237
    %v4432 = vpack.c.b16 %v3242, %v3240
    %v4433 = vpack.c.b16 %v3243, %v3241
    %v4434 = vpack.c.b16 %v3246, %v3244
    %v4435 = vpack.c.b16 %v3247, %v3245
    %v4436 = vpack.c.b16 %v3250, %v3248
    %v4437 = vpack.c.b16 %v3251, %v3249
    %v4438 = vpack.c.b16 %v3254, %v3252
    %v4439 = vpack.c.b16 %v3255, %v3253
    %v4440 = vpack.c.b16 %v3258, %v3256
    %v4441 = vpack.c.b16 %v3259, %v3257
    %v4442 = vpack.c.b16 %v3262, %v3260
    %v4443 = vpack.c.b16 %v3263, %v3261
    %v4444 = vpack.c.b16 %v3266, %v3264
    %v4445 = vpack.c.b16 %v3267, %v3265
    %v4446 = vpack.c.b16 %v3270, %v3268
    %v4447 = vpack.c.b16 %v3271, %v3269
    %v4448 = vpack.c.b16 %v3274, %v3272
    %v4449 = vpack.c.b16 %v3275, %v3273
    %v4450 = vpack.c.b16 %v3278, %v3276
    %v4451 = vpack.c.b16 %v3279, %v3277
    %v4452 = vpack.c.b16 %v3282, %v3280
    %v4453 = vpack.c.b16 %v3283, %v3281
    %v4454 = vpack.c.b16 %v3286, %v3284
    %v4455 = vpack.c.b16 %v3287, %v3285
    %v4456 = vpack.c.b16 %v3290, %v3288
    %v4457 = vpack.c.b16 %v3291, %v3289
    %v4458 = vpack.c.b16 %v3294, %v3292
    %v4459 = vpack.c.b16 %v3295, %v3293
    %v4460 = vpack.c.b16 %v3298, %v3296
    %v4461 = vpack.c.b16 %v3299, %v3297
    %v4462 = vpack.c.b16 %v3302, %v3300
    %v4463 = vpack.c.b16 %v3303, %v3301
    %v4464 = vpack.c.b16 %v3306, %v3304
    %v4465 = vpack.c.b16 %v3307, %v3305
    %v4466 = vpack.c.b16 %v3310, %v3308
    %v4467 = vpack.c.b16 %v3311, %v3309
    %v4468 = vpack.c.b16 %v3314, %v3312
    %v4469 = vpack.c.b16 %v3315, %v3313
    %v4470 = vpack.c.b16 %v3318, %v3316
    %v4471 = vpack.c.b16 %v3319, %v3317
    %v4472 = vpack.c.b16 %v3322, %v3320
    %v4473 = vpack.c.b16 %v3323, %v3321
    %v4474 = vpack.c.b16 %v3326, %v3324
    %v4475 = vpack.c.b16 %v3327, %v3325
    %v4476 = vpack.c.b16 %v3330, %v3328
    %v4477 = vpack.c.b16 %v3331, %v3329
    %v4478 = vpack.c.b16 %v3334, %v3332
    %v4479 = vpack.c.b16 %v3335, %v3333
    %v4480 = vpack.c.b16 %v3338, %v3336
    %v4481 = vpack.c.b16 %v3339, %v3337
    %v4482 = vpack.c.b16 %v3342, %v3340
    %v4483 = vpack.c.b16 %v3343, %v3341
    %v4484 = vpack.c.b16 %v3346, %v3344
    %v4485 = vpack.c.b16 %v3347, %v3345
    %v4486 = vpack.c.b16 %v3350, %v3348
    %v4487 = vpack.c.b16 %v3351, %v3349
    %v4488 = vpack.c.b16 %v3354, %v3352
    %v4489 = vpack.c.b16 %v3355, %v3353
    %v4490 = vpack.c.b16 %v3358, %v3356
    %v4491 = vpack.c.b16 %v3359, %v3357
    %v4492 = vpack.c.b16 %v3362, %v3360
    %v4493 = vpack.c.b16 %v3363, %v3361
    %v4494 = vpack.c.b16 %v3366, %v3364
    %v4495 = vpack.c.b16 %v3367, %v3365
    %v4496 = vpack.c.b16 %v3370, %v3368
    %v4497 = vpack.c.b16 %v3371, %v3369
    %v4498 = vpack.c.b16 %v3374, %v3372
    %v4499 = vpack.c.b16 %v3375, %v3373
    %v4500 = vpack.c.b16 %v3378, %v3376
    %v4501 = vpack.c.b16 %v3379, %v3377
    %v4502 = vpack.c.b16 %v3382, %v3380
    %v4503 = vpack.c.b16 %v3383, %v3381
    %v4504 = vpack.c.b16 %v3386, %v3384
    %v4505 = vpack.c.b16 %v3387, %v3385
    %v4506 = vpack.c.b16 %v3390, %v3388
    %v4507 = vpack.c.b16 %v3391, %v3389
    %v4508 = vpack.c.b16 %v3394, %v3392
    %v4509 = vpack.c.b16 %v3395, %v3393
    %v4510 = vpack.c.b16 %v3398, %v3396
    %v4511 = vpack.c.b16 %v3399, %v3397
    %v4512 = vpack.c.b16 %v3402, %v3400
    %v4513 = vpack.c.b16 %v3403, %v3401
    %v4514 = vpack.c.b16 %v3406, %v3404
    %v4515 = vpack.c.b16 %v3407, %v3405
    %v4516 = vpack.c.b16 %v3410, %v3408
    %v4517 = vpack.c.b16 %v3411, %v3409
    %v4518 = vpack.c.b16 %v3414, %v3412
    %v4519 = vpack.c.b16 %v3415, %v3413
    %v4520 = vpack.c.b16 %v3418, %v3416
    %v4521 = vpack.c.b16 %v3419, %v3417
    %v4522 = vpack.c.b16 %v3422, %v3420
    %v4523 = vpack.c.b16 %v3423, %v3421
    %v4524 = vpack.c.b16 %v3426, %v3424
    %v4525 = vpack.c.b16 %v3427, %v3425
    %v4526 = vpack.c.b16 %v3430, %v3428
    %v4527 = vpack.c.b16 %v3431, %v3429
    %v4528 = vpack.c.b16 %v3434, %v3432
    %v4529 = vpack.c.b16 %v3435, %v3433
    %v4530 = vpack.c.b16 %v3438, %v3436
    %v4531 = vpack.c.b16 %v3439, %v3437
    %v4532 = vpack.c.b16 %v3442, %v3440
    %v4533 = vpack.c.b16 %v3443, %v3441
    %v4534 = vpack.c.b16 %v3446, %v3444
    %v4535 = vpack.c.b16 %v3447, %v3445
    %v4536 = vpack.c.b16 %v3450, %v3448
    %v4537 = vpack.c.b16 %v3451, %v3449
    %v4538 = vpack.c.b16 %v3454, %v3452
    %v4539 = vpack.c.b16 %v3455, %v3453
    %v4540 = vpack.c.b16 %v3458, %v3456
    %v4541 = vpack.c.b16 %v3459, %v3457
    %v4542 = vpack.c.b16 %v3462, %v3460
    %v4543 = vpack.c.b16 %v3463, %v3461
    %v4544 = vpack.c.b16 %v3466, %v3464
    %v4545 = vpack.c.b16 %v3467, %v3465
    %v4546 = vpack.c.b16 %v3470, %v3468
    %v4547 = vpack.c.b16 %v3471, %v3469
    %v4548 = vpack.c.b16 %v3474, %v3472
    %v4549 = vpack.c.b16 %v3475, %v3473
    %v4550 = vpack.c.b16 %v3478, %v3476
    %v4551 = vpack.c.b16 %v3479, %v3477
    %v4552 = vpack.c.b16 %v3482, %v3480
    %v4553 = vpack.c.b16 %v3483, %v3481
    %v4554 = vpack.c.b16 %v3486, %v3484
    %v4555 = vpack.c.b16 %v3487, %v3485
    %v4556 = vpack.c.b16 %v3490, %v3488
    %v4557 = vpack.c.b16 %v3491, %v3489
    %v4558 = vpack.c.b16 %v3494, %v3492
    %v4559 = vpack.c.b16 %v3495, %v3493
    %v4560 = vpack.c.b16 %v3498, %v3496
    %v4561 = vpack.c.b16 %v3499, %v3497
    %v4562 = vpack.c.b16 %v3502, %v3500
    %v4563 = vpack.c.b16 %v3503, %v3501
    %v4564 = vpack.c.b16 %v3506, %v3504
    %v4565 = vpack.c.b16 %v3507, %v3505
    %v4566 = vpack.c.b16 %v3510, %v3508
    %v4567 = vpack.c.b16 %v3511, %v3509
    %v4568 = vpack.c.b16 %v3514, %v3512
    %v4569 = vpack.c.b16 %v3515, %v3513
    %v4570 = vpack.c.b16 %v3518, %v3516
    %v4571 = vpack.c.b16 %v3519, %v3517
    %v4572 = vpack.c.b16 %v3522, %v3520
    %v4573 = vpack.c.b16 %v3523, %v3521
    %v4574 = vpack.c.b16 %v3526, %v3524
    %v4575 = vpack.c.b16 %v3527, %v3525
    %v4576 = vpack.c.b16 %v3530, %v3528
    %v4577 = vpack.c.b16 %v3531, %v3529
    %v4578 = vpack.c.b16 %v3534, %v3532
    %v4579 = vpack.c.b16 %v3535, %v3533
    %v4580 = vpack.c.b16 %v3538, %v3536
    %v4581 = vpack.c.b16 %v3539, %v3537
    %v4582 = vpack.c.b16 %v3542, %v3540
    %v4583 = vpack.c.b16 %v3543, %v3541
    %v4584 = vpack.c.b16 %v3546, %v3544
    %v4585 = vpack.c.b16 %v3547, %v3545
    %v4586 = vpack.c.b16 %v3550, %v3548
    %v4587 = vpack.c.b16 %v3551, %v3549
    %v4588 = vpack.c.b16 %v3554, %v3552
    %v4589 = vpack.c.b16 %v3555, %v3553
    %v4590 = vpack.c.b16 %v3558, %v3556
    %v4591 = vpack.c.b16 %v3559, %v3557
    %v4592 = vpack.c.b16 %v3562, %v3560
    %v4593 = vpack.c.b16 %v3563, %v3561
    %v4594 = vpack.c.b16 %v3566, %v3564
    %v4595 = vpack.c.b16 %v3567, %v3565
    %v4596 = vpack.c.b16 %v3570, %v3568
    %v4597 = vpack.c.b16 %v3571, %v3569
    %v4598 = vpack.c.b16 %v3574, %v3572
    %v4599 = vpack.c.b16 %v3575, %v3573
    %v4600 = vpack.c.b16 %v3578, %v3576
    %v4601 = vpack.c.b16 %v3579, %v3577
    %v4602 = vpack.c.b16 %v3582, %v3580
    %v4603 = vpack.c.b16 %v3583, %v3581
    %v4604 = vpack.c.b16 %v3586, %v3584
    %v4605 = vpack.c.b16 %v3587, %v3585
    %v4606 = vpack.c.b16 %v3590, %v3588
    %v4607 = vpack.c.b16 %v3591, %v3589
    %v4608 = vpack.c.b16 %v3594, %v3592
    %v4609 = vpack.c.b16 %v3595, %v3593
    %v4610 = vpack.c.b16 %v3598, %v3596
    %v4611 = vpack.c.b16 %v3599, %v3597
    %v4612 = vpack.c.b16 %v3602, %v3600
    %v4613 = vpack.c.b16 %v3603, %v3601
    %v4614 = vpack.c.b16 %v3606, %v3604
    %v4615 = vpack.c.b16 %v3607, %v3605
    %v4616 = vpack.c.b16 %v3610, %v3608
    %v4617 = vpack.c.b16 %v3611, %v3609
    %v4618 = vpack.c.b16 %v3614, %v3612
    %v4619 = vpack.c.b16 %v3615, %v3613
    %v4620 = vpack.c.b16 %v3618, %v3616
    %v4621 = vpack.c.b16 %v3619, %v3617
    %v4622 = vpack.c.b16 %v3622, %v3620
    %v4623 = vpack.c.b16 %v3623, %v3621
    %v4624 = vpack.c.b16 %v3626, %v3624
    %v4625 = vpack.c.b16 %v3627, %v3625
    %v4626 = vpack.c.b16 %v3630, %v3628
    %v4627 = vpack.c.b16 %v3631, %v3629
    %v4628 = vpack.c.b16 %v3634, %v3632
    %v4629 = vpack.c.b16 %v3635, %v3633
    %v4630 = vpack.c.b16 %v3638, %v3636
    %v4631 = vpack.c.b16 %v3639, %v3637
    %v4632 = vpack.c.b16 %v3642, %v3640
    %v4633 = vpack.c.b16 %v3643, %v3641
    %v4634 = vpack.c.b16 %v3646, %v3644
    %v4635 = vpack.c.b16 %v3647, %v3645
    %v4636 = vpack.c.b16 %v3650, %v3648
    %v4637 = vpack.c.b16 %v3651, %v3649
    %v4638 = vpack.c.b16 %v3654, %v3652
    %v4639 = vpack.c.b16 %v3655, %v3653
    %v4640 = vpack.c.b16 %v3658, %v3656
    %v4641 = vpack.c.b16 %v3659, %v3657
    %v4642 = vpack.c.b16 %v3662, %v3660
    %v4643 = vpack.c.b16 %v3663, %v3661
    %v4644 = vpack.c.b16 %v3666, %v3664
    %v4645 = vpack.c.b16 %v3667, %v3665
    %v4646 = vpack.c.b16 %v3670, %v3668
    %v4647 = vpack.c.b16 %v3671, %v3669
    %v4648 = vpack.c.b16 %v3674, %v3672
    %v4649 = vpack.c.b16 %v3675, %v3673
    %v4650 = vpack.c.b16 %v3678, %v3676
    %v4651 = vpack.c.b16 %v3679, %v3677
    %v4652 = vpack.c.b16 %v3682, %v3680
    %v4653 = vpack.c.b16 %v3683, %v3681
    %v4654 = vpack.c.b16 %v3686, %v3684
    %v4655 = vpack.c.b16 %v3687, %v3685
    %v4656 = vpack.c.b16 %v3690, %v3688
    %v4657 = vpack.c.b16 %v3691, %v3689
    %v4658 = vpack.c.b16 %v3694, %v3692
    %v4659 = vpack.c.b16 %v3695, %v3693
    %v4660 = vpack.c.b16 %v3698, %v3696
    %v4661 = vpack.c.b16 %v3699, %v3697
    %v4662 = vpack.c.b16 %v3702, %v3700
    %v4663 = vpack.c.b16 %v3703, %v3701
    %v4664 = vpack.c.b16 %v3706, %v3704
    %v4665 = vpack.c.b16 %v3707, %v3705
    %v4666 = vpack.c.b16 %v3710, %v3708
    %v4667 = vpack.c.b16 %v3711, %v3709
    %v4668 = vpack.c.b16 %v3714, %v3712
    %v4669 = vpack.c.b16 %v3715, %v3713
    %v4670 = vpack.c.b16 %v3718, %v3716
    %v4671 = vpack.c.b16 %v3719, %v3717
    %v4672 = vpack.c.b16 %v3722, %v3720
    %v4673 = vpack.c.b16 %v3723, %v3721
    %v4674 = vpack.c.b16 %v3726, %v3724
    %v4675 = vpack.c.b16 %v3727, %v3725
    %v4676 = vpack.c.b16 %v3730, %v3728
    %v4677 = vpack.c.b16 %v3731, %v3729
    %v4678 = vpack.c.b16 %v3734, %v3732
    %v4679 = vpack.c.b16 %v3735, %v3733
    %v4680 = vpack.c.b16 %v3738, %v3736
    %v4681 = vpack.c.b16 %v3739, %v3737
    %v4682 = vpack.c.b16 %v3742, %v3740
    %v4683 = vpack.c.b16 %v3743, %v3741
    %v4684 = vpack.c.b16 %v3746, %v3744
    %v4685 = vpack.c.b16 %v3747, %v3745
    %v4686 = vpack.c.b16 %v3750, %v3748
    %v4687 = vpack.c.b16 %v3751, %v3749
    %v4688 = vpack.c.b16 %v3754, %v3752
    %v4689 = vpack.c.b16 %v3755, %v3753
    %v4690 = vpack.c.b16 %v3758, %v3756
    %v4691 = vpack.c.b16 %v3759, %v3757
    %v4692 = vpack.c.b16 %v3762, %v3760
    %v4693 = vpack.c.b16 %v3763, %v3761
    %v4694 = vpack.c.b16 %v3766, %v3764
    %v4695 = vpack.c.b16 %v3767, %v3765
    %v4696 = vpack.c.b16 %v3770, %v3768
    %v4697 = vpack.c.b16 %v3771, %v3769
    %v4698 = vpack.c.b16 %v3774, %v3772
    %v4699 = vpack.c.b16 %v3775, %v3773
    %v4700 = vpack.c.b16 %v3778, %v3776
    %v4701 = vpack.c.b16 %v3779, %v3777
    %v4702 = vpack.c.b16 %v3782, %v3780
    %v4703 = vpack.c.b16 %v3783, %v3781
    %v4704 = vpack.c.b16 %v3786, %v3784
    %v4705 = vpack.c.b16 %v3787, %v3785
    %v4706 = vpack.c.b16 %v3790, %v3788
    %v4707 = vpack.c.b16 %v3791, %v3789
    %v4708 = vpack.c.b16 %v3794, %v3792
    %v4709 = vpack.c.b16 %v3795, %v3793
    %v4710 = vpack.c.b16 %v3798, %v3796
    %v4711 = vpack.c.b16 %v3799, %v3797
    %v4712 = vpack.c.b16 %v3802, %v3800
    %v4713 = vpack.c.b16 %v3803, %v3801
    %v4714 = vpack.c.b16 %v3806, %v3804
    %v4715 = vpack.c.b16 %v3807, %v3805
    %v4716 = vpack.c.b16 %v3810, %v3808
    %v4717 = vpack.c.b16 %v3811, %v3809
    %v4718 = vpack.c.b16 %v3814, %v3812
    %v4719 = vpack.c.b16 %v3815, %v3813
    %v4720 = vpack.c.b16 %v3818, %v3816
    %v4721 = vpack.c.b16 %v3819, %v3817
    %v4722 = vpack.c.b16 %v3822, %v3820
    %v4723 = vpack.c.b16 %v3823, %v3821
    %v4724 = vpack.c.b16 %v3826, %v3824
    %v4725 = vpack.c.b16 %v3827, %v3825
    %v4726 = vpack.c.b16 %v3830, %v3828
    %v4727 = vpack.c.b16 %v3831, %v3829
    %v4728 = vpack.c.b16 %v3834, %v3832
    %v4729 = vpack.c.b16 %v3835, %v3833
    %v4730 = vpack.c.b16 %v3838, %v3836
    %v4731 = vpack.c.b16 %v3839, %v3837
    %v4732 = vpack.c.b16 %v3842, %v3840
    %v4733 = vpack.c.b16 %v3843, %v3841
    %v4734 = vpack.c.b16 %v3846, %v3844
    %v4735 = vpack.c.b16 %v3847, %v3845
    %v4736 = vpack.c.b16 %v3850, %v3848
    %v4737 = vpack.c.b16 %v3851, %v3849
    %v4738 = vpack.c.b16 %v3854, %v3852
    %v4739 = vpack.c.b16 %v3855, %v3853
    %v4740 = vpack.c.b16 %v3858, %v3856
    %v4741 = vpack.c.b16 %v3859, %v3857
    %v4742 = vpack.c.b16 %v3862, %v3860
    %v4743 = vpack.c.b16 %v3863, %v3861
    %v4744 = vpack.c.b16 %v3866, %v3864
    %v4745 = vpack.c.b16 %v3867, %v3865
    %v4746 = vpack.c.b16 %v3870, %v3868
    %v4747 = vpack.c.b16 %v3871, %v3869
    %v4748 = vpack.c.b16 %v3874, %v3872
    %v4749 = vpack.c.b16 %v3875, %v3873
    %v4750 = vpack.c.b16 %v3878, %v3876
    %v4751 = vpack.c.b16 %v3879, %v3877
    %v4752 = vpack.c.b16 %v3882, %v3880
    %v4753 = vpack.c.b16 %v3883, %v3881
    %v4754 = vpack.c.b16 %v3886, %v3884
    %v4755 = vpack.c.b16 %v3887, %v3885
    %v4756 = vpack.c.b16 %v3890, %v3888
    %v4757 = vpack.c.b16 %v3891, %v3889
    %v4758 = vpack.c.b16 %v3894, %v3892
    %v4759 = vpack.c.b16 %v3895, %v3893
    %v4760 = vpack.c.b16 %v3898, %v3896
    %v4761 = vpack.c.b16 %v3899, %v3897
    %v4762 = vpack.c.b16 %v3902, %v3900
    %v4763 = vpack.c.b16 %v3903, %v3901
    %v4764 = vpack.c.b16 %v3906, %v3904
    %v4765 = vpack.c.b16 %v3907, %v3905
    %v4766 = vpack.c.b16 %v3910, %v3908
    %v4767 = vpack.c.b16 %v3911, %v3909
    %v4768 = vpack.c.b16 %v3914, %v3912
    %v4769 = vpack.c.b16 %v3915, %v3913
    %v4770 = vpack.c.b16 %v3918, %v3916
    %v4771 = vpack.c.b16 %v3919, %v3917
    %v4772 = vpack.c.b16 %v3922, %v3920
    %v4773 = vpack.c.b16 %v3923, %v3921
    %v4774 = vpack.c.b16 %v3926, %v3924
    %v4775 = vpack.c.b16 %v3927, %v3925
    %v4776 = vpack.c.b16 %v3930, %v3928
    %v4777 = vpack.c.b16 %v3931, %v3929
    %v4778 = vpack.c.b16 %v3934, %v3932
    %v4779 = vpack.c.b16 %v3935, %v3933
    %v4780 = vpack.c.b16 %v3938, %v3936
    %v4781 = vpack.c.b16 %v3939, %v3937
    %v4782 = vpack.c.b16 %v3942, %v3940
    %v4783 = vpack.c.b16 %v3943, %v3941
    %v4784 = vpack.c.b16 %v3946, %v3944
    %v4785 = vpack.c.b16 %v3947, %v3945
    %v4786 = vpack.c.b16 %v3950, %v3948
    %v4787 = vpack.c.b16 %v3951, %v3949
    %v4788 = vpack.c.b16 %v3954, %v3952
    %v4789 = vpack.c.b16 %v3955, %v3953
    %v4790 = vpack.c.b16 %v3958, %v3956
    %v4791 = vpack.c.b16 %v3959, %v3957
    %v4792 = vpack.c.b16 %v3962, %v3960
    %v4793 = vpack.c.b16 %v3963, %v3961
    %v4794 = vpack.c.b16 %v3966, %v3964
    %v4795 = vpack.c.b16 %v3967, %v3965
    %v4796 = vpack.c.b16 %v3970, %v3968
    %v4797 = vpack.c.b16 %v3971, %v3969
    %v4798 = vpack.c.b16 %v3974, %v3972
    %v4799 = vpack.c.b16 %v3975, %v3973
    %v4800 = vpack.c.b16 %v3978, %v3976
    %v4801 = vpack.c.b16 %v3979, %v3977
    %v4802 = vpack.c.b16 %v3982, %v3980
    %v4803 = vpack.c.b16 %v3983, %v3981
    %v4804 = vpack.c.b16 %v3986, %v3984
    %v4805 = vpack.c.b16 %v3987, %v3985
    %v4806 = vpack.c.b16 %v3990, %v3988
    %v4807 = vpack.c.b16 %v3991, %v3989
    %v4808 = vpack.c.b16 %v3994, %v3992
    %v4809 = vpack.c.b16 %v3995, %v3993
    %v4810 = vpack.c.b16 %v3998, %v3996
    %v4811 = vpack.c.b16 %v3999, %v3997
    %v4812 = vpack.c.b16 %v4002, %v4000
    %v4813 = vpack.c.b16 %v4003, %v4001
    %v4814 = vpack.c.b16 %v4006, %v4004
    %v4815 = vpack.c.b16 %v4007, %v4005
    %v4816 = vpack.c.b16 %v4010, %v4008
    %v4817 = vpack.c.b16 %v4011, %v4009
    %v4818 = vpack.c.b16 %v4014, %v4012
    %v4819 = vpack.c.b16 %v4015, %v4013
    %v4820 = vpack.c.b16 %v4018, %v4016
    %v4821 = vpack.c.b16 %v4019, %v4017
    %v4822 = vpack.c.b16 %v4022, %v4020
    %v4823 = vpack.c.b16 %v4023, %v4021
    %v4824 = vpack.c.b16 %v4026, %v4024
    %v4825 = vpack.c.b16 %v4027, %v4025
    %v4826 = vpack.c.b16 %v4030, %v4028
    %v4827 = vpack.c.b16 %v4031, %v4029
    %v4828 = vpack.c.b16 %v4034, %v4032
    %v4829 = vpack.c.b16 %v4035, %v4033
    %v4830 = vpack.c.b16 %v4038, %v4036
    %v4831 = vpack.c.b16 %v4039, %v4037
    %v4832 = vpack.c.b16 %v4042, %v4040
    %v4833 = vpack.c.b16 %v4043, %v4041
    %v4834 = vpack.c.b16 %v4046, %v4044
    %v4835 = vpack.c.b16 %v4047, %v4045
    %v4836 = vpack.c.b16 %v4050, %v4048
    %v4837 = vpack.c.b16 %v4051, %v4049
    %v4838 = vpack.c.b16 %v4054, %v4052
    %v4839 = vpack.c.b16 %v4055, %v4053
    %v4840 = vpack.c.b16 %v4058, %v4056
    %v4841 = vpack.c.b16 %v4059, %v4057
    %v4842 = vpack.c.b16 %v4062, %v4060
    %v4843 = vpack.c.b16 %v4063, %v4061
    %v4844 = vpack.c.b16 %v4066, %v4064
    %v4845 = vpack.c.b16 %v4067, %v4065
    %v4846 = vpack.c.b16 %v4070, %v4068
    %v4847 = vpack.c.b16 %v4071, %v4069
    %v4848 = vpack.c.b16 %v4074, %v4072
    %v4849 = vpack.c.b16 %v4075, %v4073
    %v4850 = vpack.c.b16 %v4078, %v4076
    %v4851 = vpack.c.b16 %v4079, %v4077
    %v4852 = vpack.c.b16 %v4082, %v4080
    %v4853 = vpack.c.b16 %v4083, %v4081
    %v4854 = vpack.c.b16 %v4086, %v4084
    %v4855 = vpack.c.b16 %v4087, %v4085
    %v4856 = vpack.c.b16 %v4090, %v4088
    %v4857 = vpack.c.b16 %v4091, %v4089
    %v4858 = vpack.c.b16 %v4094, %v4092
    %v4859 = vpack.c.b16 %v4095, %v4093
    %v4860 = vpack.c.b16 %v4098, %v4096
    %v4861 = vpack.c.b16 %v4099, %v4097
    %v4862 = vpack.c.b16 %v4102, %v4100
    %v4863 = vpack.c.b16 %v4103, %v4101
    %v4864 = vpack.c.b16 %v4106, %v4104
    %v4865 = vpack.c.b16 %v4107, %v4105
    %v4866 = vpack.c.b16 %v4110, %v4108
    %v4867 = vpack.c.b16 %v4111, %v4109
    %v4868 = vpack.c.b16 %v4114, %v4112
    %v4869 = vpack.c.b16 %v4115, %v4113
    %v4870 = vpack.c.b16 %v4118, %v4116
    %v4871 = vpack.c.b16 %v4119, %v4117
    %v4872 = vpack.c.b16 %v4122, %v4120
    %v4873 = vpack.c.b16 %v4123, %v4121
    %v4874 = vpack.c.b16 %v4126, %v4124
    %v4875 = vpack.c.b16 %v4127, %v4125
    %v4876 = vpack.c.b16 %v4130, %v4128
    %v4877 = vpack.c.b16 %v4131, %v4129
    %v4878 = vpack.c.b16 %v4134, %v4132
    %v4879 = vpack.c.b16 %v4135, %v4133
    %v4880 = vpack.c.b16 %v4138, %v4136
    %v4881 = vpack.c.b16 %v4139, %v4137
    %v4882 = vpack.c.b16 %v4142, %v4140
    %v4883 = vpack.c.b16 %v4143, %v4141
    %v4884 = vpack.c.b16 %v4146, %v4144
    %v4885 = vpack.c.b16 %v4147, %v4145
    %v4886 = vpack.c.b16 %v4150, %v4148
    %v4887 = vpack.c.b16 %v4151, %v4149
    %v4888 = vpack.c.b16 %v4154, %v4152
    %v4889 = vpack.c.b16 %v4155, %v4153
    %v4890 = vpack.c.b16 %v4158, %v4156
    %v4891 = vpack.c.b16 %v4159, %v4157
    %v4892 = vpack.c.b16 %v4162, %v4160
    %v4893 = vpack.c.b16 %v4163, %v4161
    %v4894 = vpack.c.b16 %v4166, %v4164
    %v4895 = vpack.c.b16 %v4167, %v4165
    %v4896 = vpack.c.b16 %v4170, %v4168
    %v4897 = vpack.c.b16 %v4171, %v4169
    %v4898 = vpack.c.b16 %v4172, %v4172
    %v4899 = vpack.c.b16 %v4173, %v4173
    %vm5624 = vcmask 293888
    %v5626 = vsel %vm5624, %v1261, 0
    %vm5628 = vcmask 1041408
    %v5630 = vsel %vm5628, %v4898, 0
    %v5633 = vsel %vm5628, %v4899, 0
    %5635 = vmatprep.subr.bf16.mxu0 %v4175
    %5636 = vmatpush1.bf16.msra.mxu0 %v4174
    %5637 = vmatprep.subr.bf16.mxu0 %v4177
    %5638 = vmatpush1.bf16.msra.mxu0 %v4176
    %5639 = vmatprep.subr.bf16.mxu0 %v4179
    %5640 = vmatpush1.bf16.msra.mxu0 %v4178
    %5641 = vmatprep.subr.bf16.mxu0 %v4181
    %5642 = vmatpush1.bf16.msra.mxu0 %v4180
    %5643 = vmatprep.subr.bf16.mxu0 %v4183
    %5644 = vmatpush1.bf16.msra.mxu0 %v4182
    %5645 = vmatprep.subr.bf16.mxu0 %v4185
    %5646 = vmatpush1.bf16.msra.mxu0 %v4184
    %5647 = vmatprep.subr.bf16.mxu0 %v4187
    %5648 = vmatpush1.bf16.msra.mxu0 %v4186
    %5649 = vmatprep.subr.bf16.mxu0 %v4189
    %5650 = vmatpush1.bf16.msra.mxu0 %v4188
    %5651 = vmatprep.subr.bf16.mxu0 %v4191
    %5652 = vmatpush1.bf16.msra.mxu0 %v4190
    %5653 = vmatprep.subr.bf16.mxu0 %v4193
    %5654 = vmatpush1.bf16.msra.mxu0 %v4192
    %5655 = vmatprep.subr.bf16.mxu0 %v4195
    %5656 = vmatpush1.bf16.msra.mxu0 %v4194
    %5657 = vmatprep.subr.bf16.mxu0 %v4197
    %5658 = vmatpush1.bf16.msra.mxu0 %v4196
    %5659 = vmatprep.subr.bf16.mxu0 %v4199
    %5660 = vmatpush1.bf16.msra.mxu0 %v4198
    %5661 = vmatprep.subr.bf16.mxu0 %v4201
    %5662 = vmatpush1.bf16.msra.mxu0 %v4200
    %5663 = vmatprep.subr.bf16.mxu0 %v4203
    %5664 = vmatpush1.bf16.msra.mxu0 %v4202
    %5665 = vmatprep.subr.bf16.mxu0 %v4205
    %5666 = vmatpush1.bf16.msra.mxu0 %v4204
    %5667 = vmatprep.mubr.bf16.mxu0 %v1217
    %5668 = vmatmul.mubr.bf16.gmra.mrb[0].mxu0 %v1216
    %v5669 = vpop.f32.mrb[0].mxu0
    %v5670 = vadd.f32 %v1992, %v5669
    %v5671 = vpop.f32.mrb[0].mxu0
    %v5672 = vadd.f32 %v1996, %v5671
    %v5673 = vpop.f32.mrb[0].mxu0
    %v5674 = vadd.f32 %v1992, %v5673
    %v5675 = vpop.f32.mrb[0].mxu0
    %v5676 = vadd.f32 %v1996, %v5675
    %5677 = vdwg.mxu0
    %5678 = vmatprep.subr.bf16.mxu0 %v4207
    %5679 = vmatpush1.bf16.msra.mxu0 %v4206
    %5680 = vmatprep.subr.bf16.mxu0 %v4209
    %5681 = vmatpush1.bf16.msra.mxu0 %v4208
    %5682 = vmatprep.subr.bf16.mxu0 %v4211
    %5683 = vmatpush1.bf16.msra.mxu0 %v4210
    %5684 = vmatprep.subr.bf16.mxu0 %v4213
    %5685 = vmatpush1.bf16.msra.mxu0 %v4212
    %5686 = vmatprep.subr.bf16.mxu0 %v4215
    %5687 = vmatpush1.bf16.msra.mxu0 %v4214
    %5688 = vmatprep.subr.bf16.mxu0 %v4217
    %5689 = vmatpush1.bf16.msra.mxu0 %v4216
    %5690 = vmatprep.subr.bf16.mxu0 %v4219
    %5691 = vmatpush1.bf16.msra.mxu0 %v4218
    %5692 = vmatprep.subr.bf16.mxu0 %v4221
    %5693 = vmatpush1.bf16.msra.mxu0 %v4220
    %5694 = vmatprep.subr.bf16.mxu0 %v4223
    %5695 = vmatpush1.bf16.msra.mxu0 %v4222
    %5696 = vmatprep.subr.bf16.mxu0 %v4225
    %5697 = vmatpush1.bf16.msra.mxu0 %v4224
    %5698 = vmatprep.subr.bf16.mxu0 %v4227
    %5699 = vmatpush1.bf16.msra.mxu0 %v4226
    %5700 = vmatprep.subr.bf16.mxu0 %v4229
    %5701 = vmatpush1.bf16.msra.mxu0 %v4228
    %5702 = vmatprep.subr.bf16.mxu0 %v4231
    %5703 = vmatpush1.bf16.msra.mxu0 %v4230
    %5704 = vmatprep.subr.bf16.mxu0 %v4233
    %5705 = vmatpush1.bf16.msra.mxu0 %v4232
    %5706 = vmatprep.subr.bf16.mxu0 %v4235
    %5707 = vmatpush1.bf16.msra.mxu0 %v4234
    %5708 = vmatprep.subr.bf16.mxu0 %v4237
    %5709 = vmatpush1.bf16.msra.mxu0 %v4236
    %5710 = vmatprep.mubr.bf16.mxu0 %v1219
    %5711 = vmatmul.mubr.bf16.gmra.mrb[0].mxu0 %v1218
    %v5712 = vpop.f32.mrb[0].mxu0
    %v5713 = vadd.f32 %v5670, %v5712
    %v5714 = vpop.f32.mrb[0].mxu0
    %v5715 = vadd.f32 %v5672, %v5714
    %v5716 = vpop.f32.mrb[0].mxu0
    %v5717 = vadd.f32 %v5674, %v5716
    %v5718 = vpop.f32.mrb[0].mxu0
    %v5719 = vadd.f32 %v5676, %v5718
    %5720 = vdwg.mxu0
    %5721 = vmatprep.subr.bf16.mxu0 %v4239
    %5722 = vmatpush1.bf16.msra.mxu0 %v4238
    %5723 = vmatprep.subr.bf16.mxu0 %v4241
    %5724 = vmatpush1.bf16.msra.mxu0 %v4240
    %5725 = vmatprep.subr.bf16.mxu0 %v4243
    %5726 = vmatpush1.bf16.msra.mxu0 %v4242
    %5727 = vmatprep.subr.bf16.mxu0 %v4245
    %5728 = vmatpush1.bf16.msra.mxu0 %v4244
    %5729 = vmatprep.subr.bf16.mxu0 %v4247
    %5730 = vmatpush1.bf16.msra.mxu0 %v4246
    %5731 = vmatprep.subr.bf16.mxu0 %v4249
    %5732 = vmatpush1.bf16.msra.mxu0 %v4248
    %5733 = vmatprep.subr.bf16.mxu0 %v4251
    %5734 = vmatpush1.bf16.msra.mxu0 %v4250
    %5735 = vmatprep.subr.bf16.mxu0 %v4253
    %5736 = vmatpush1.bf16.msra.mxu0 %v4252
    %5737 = vmatprep.subr.bf16.mxu0 %v4255
    %5738 = vmatpush1.bf16.msra.mxu0 %v4254
    %5739 = vmatprep.subr.bf16.mxu0 %v4257
    %5740 = vmatpush1.bf16.msra.mxu0 %v4256
    %5741 = vmatprep.subr.bf16.mxu0 %v4259
    %5742 = vmatpush1.bf16.msra.mxu0 %v4258
    %5743 = vmatprep.subr.bf16.mxu0 %v4261
    %5744 = vmatpush1.bf16.msra.mxu0 %v4260
    %5745 = vmatprep.subr.bf16.mxu0 %v4263
    %5746 = vmatpush1.bf16.msra.mxu0 %v4262
    %5747 = vmatprep.subr.bf16.mxu0 %v4265
    %5748 = vmatpush1.bf16.msra.mxu0 %v4264
    %5749 = vmatprep.subr.bf16.mxu0 %v4267
    %5750 = vmatpush1.bf16.msra.mxu0 %v4266
    %5751 = vmatprep.subr.bf16.mxu0 %v4269
    %5752 = vmatpush1.bf16.msra.mxu0 %v4268
    %5753 = vmatprep.mubr.bf16.mxu0 %v1221
    %5754 = vmatmul.mubr.bf16.gmra.mrb[0].mxu0 %v1220
    %v5755 = vpop.f32.mrb[0].mxu0
    %v5756 = vadd.f32 %v5713, %v5755
    %v5757 = vpop.f32.mrb[0].mxu0
    %v5758 = vadd.f32 %v5715, %v5757
    %v5759 = vpop.f32.mrb[0].mxu0
    %v5760 = vadd.f32 %v5717, %v5759
    %v5761 = vpop.f32.mrb[0].mxu0
    %v5762 = vadd.f32 %v5719, %v5761
    %5763 = vdwg.mxu0
    %5764 = vmatprep.subr.bf16.mxu0 %v4271
    %5765 = vmatpush1.bf16.msra.mxu0 %v4270
    %5766 = vmatprep.subr.bf16.mxu0 %v4273
    %5767 = vmatpush1.bf16.msra.mxu0 %v4272
    %5768 = vmatprep.subr.bf16.mxu0 %v4275
    %5769 = vmatpush1.bf16.msra.mxu0 %v4274
    %5770 = vmatprep.subr.bf16.mxu0 %v4277
    %5771 = vmatpush1.bf16.msra.mxu0 %v4276
    %5772 = vmatprep.subr.bf16.mxu0 %v4279
    %5773 = vmatpush1.bf16.msra.mxu0 %v4278
    %5774 = vmatprep.subr.bf16.mxu0 %v4281
    %5775 = vmatpush1.bf16.msra.mxu0 %v4280
    %5776 = vmatprep.subr.bf16.mxu0 %v4283
    %5777 = vmatpush1.bf16.msra.mxu0 %v4282
    %5778 = vmatprep.subr.bf16.mxu0 %v4285
    %5779 = vmatpush1.bf16.msra.mxu0 %v4284
    %5780 = vmatprep.subr.bf16.mxu0 %v4287
    %5781 = vmatpush1.bf16.msra.mxu0 %v4286
    %5782 = vmatprep.subr.bf16.mxu0 %v4289
    %5783 = vmatpush1.bf16.msra.mxu0 %v4288
    %5784 = vmatprep.subr.bf16.mxu0 %v4291
    %5785 = vmatpush1.bf16.msra.mxu0 %v4290
    %5786 = vmatprep.subr.bf16.mxu0 %v4293
    %5787 = vmatpush1.bf16.msra.mxu0 %v4292
    %5788 = vmatprep.subr.bf16.mxu0 %v4295
    %5789 = vmatpush1.bf16.msra.mxu0 %v4294
    %5790 = vmatprep.subr.bf16.mxu0 %v4297
    %5791 = vmatpush1.bf16.msra.mxu0 %v4296
    %5792 = vmatprep.subr.bf16.mxu0 %v4299
    %5793 = vmatpush1.bf16.msra.mxu0 %v4298
    %5794 = vmatprep.subr.bf16.mxu0 %v4301
    %5795 = vmatpush1.bf16.msra.mxu0 %v4300
    %5796 = vmatprep.mubr.bf16.mxu0 %v1223
    %5797 = vmatmul.mubr.bf16.gmra.mrb[0].mxu0 %v1222
    %v5798 = vpop.f32.mrb[0].mxu0
    %v5799 = vadd.f32 %v5756, %v5798
    %v5800 = vpop.f32.mrb[0].mxu0
    %v5801 = vadd.f32 %v5758, %v5800
    %v5802 = vpop.f32.mrb[0].mxu0
    %v5803 = vadd.f32 %v5760, %v5802
    %v5804 = vpop.f32.mrb[0].mxu0
    %v5805 = vadd.f32 %v5762, %v5804
    %5806 = vdwg.mxu0
    %5807 = vmatprep.subr.bf16.mxu0 %v4303
    %5808 = vmatpush1.bf16.msra.mxu0 %v4302
    %5809 = vmatprep.subr.bf16.mxu0 %v4305
    %5810 = vmatpush1.bf16.msra.mxu0 %v4304
    %5811 = vmatprep.subr.bf16.mxu0 %v4307
    %5812 = vmatpush1.bf16.msra.mxu0 %v4306
    %5813 = vmatprep.subr.bf16.mxu0 %v4309
    %5814 = vmatpush1.bf16.msra.mxu0 %v4308
    %5815 = vmatprep.subr.bf16.mxu0 %v4311
    %5816 = vmatpush1.bf16.msra.mxu0 %v4310
    %5817 = vmatprep.subr.bf16.mxu0 %v4313
    %5818 = vmatpush1.bf16.msra.mxu0 %v4312
    %5819 = vmatprep.subr.bf16.mxu0 %v4315
    %5820 = vmatpush1.bf16.msra.mxu0 %v4314
    %5821 = vmatprep.subr.bf16.mxu0 %v4317
    %5822 = vmatpush1.bf16.msra.mxu0 %v4316
    %5823 = vmatprep.subr.bf16.mxu0 %v4319
    %5824 = vmatpush1.bf16.msra.mxu0 %v4318
    %5825 = vmatprep.subr.bf16.mxu0 %v4321
    %5826 = vmatpush1.bf16.msra.mxu0 %v4320
    %5827 = vmatprep.subr.bf16.mxu0 %v4323
    %5828 = vmatpush1.bf16.msra.mxu0 %v4322
    %5829 = vmatprep.subr.bf16.mxu0 %v4325
    %5830 = vmatpush1.bf16.msra.mxu0 %v4324
    %5831 = vmatprep.subr.bf16.mxu0 %v4327
    %5832 = vmatpush1.bf16.msra.mxu0 %v4326
    %5833 = vmatprep.subr.bf16.mxu0 %v4329
    %5834 = vmatpush1.bf16.msra.mxu0 %v4328
    %5835 = vmatprep.subr.bf16.mxu0 %v4331
    %5836 = vmatpush1.bf16.msra.mxu0 %v4330
    %5837 = vmatprep.subr.bf16.mxu0 %v4333
    %5838 = vmatpush1.bf16.msra.mxu0 %v4332
    %5839 = vmatprep.mubr.bf16.mxu0 %v1225
    %5840 = vmatmul.mubr.bf16.gmra.mrb[0].mxu0 %v1224
    %v5841 = vpop.f32.mrb[0].mxu0
    %v5842 = vadd.f32 %v5799, %v5841
    %v5843 = vpop.f32.mrb[0].mxu0
    %v5844 = vadd.f32 %v5801, %v5843
    %v5845 = vpop.f32.mrb[0].mxu0
    %v5846 = vadd.f32 %v5803, %v5845
    %v5847 = vpop.f32.mrb[0].mxu0
    %v5848 = vadd.f32 %v5805, %v5847
    %5849 = vdwg.mxu0
    %5850 = vmatprep.subr.bf16.mxu0 %v4335
    %5851 = vmatpush1.bf16.msra.mxu0 %v4334
    %5852 = vmatprep.subr.bf16.mxu0 %v4337
    %5853 = vmatpush1.bf16.msra.mxu0 %v4336
    %5854 = vmatprep.subr.bf16.mxu0 %v4339
    %5855 = vmatpush1.bf16.msra.mxu0 %v4338
    %5856 = vmatprep.subr.bf16.mxu0 %v4341
    %5857 = vmatpush1.bf16.msra.mxu0 %v4340
    %5858 = vmatprep.subr.bf16.mxu0 %v4343
    %5859 = vmatpush1.bf16.msra.mxu0 %v4342
    %5860 = vmatprep.subr.bf16.mxu0 %v4345
    %5861 = vmatpush1.bf16.msra.mxu0 %v4344
    %5862 = vmatprep.subr.bf16.mxu0 %v4347
    %5863 = vmatpush1.bf16.msra.mxu0 %v4346
    %5864 = vmatprep.subr.bf16.mxu0 %v4349
    %5865 = vmatpush1.bf16.msra.mxu0 %v4348
    %5866 = vmatprep.subr.bf16.mxu0 %v4351
    %5867 = vmatpush1.bf16.msra.mxu0 %v4350
    %5868 = vmatprep.subr.bf16.mxu0 %v4353
    %5869 = vmatpush1.bf16.msra.mxu0 %v4352
    %5870 = vmatprep.subr.bf16.mxu0 %v4355
    %5871 = vmatpush1.bf16.msra.mxu0 %v4354
    %5872 = vmatprep.subr.bf16.mxu0 %v4357
    %5873 = vmatpush1.bf16.msra.mxu0 %v4356
    %5874 = vmatprep.subr.bf16.mxu0 %v4359
    %5875 = vmatpush1.bf16.msra.mxu0 %v4358
    %5876 = vmatprep.subr.bf16.mxu0 %v4361
    %5877 = vmatpush1.bf16.msra.mxu0 %v4360
    %5878 = vmatprep.subr.bf16.mxu0 %v4363
    %5879 = vmatpush1.bf16.msra.mxu0 %v4362
    %5880 = vmatprep.subr.bf16.mxu0 %v4365
    %5881 = vmatpush1.bf16.msra.mxu0 %v4364
    %5882 = vmatprep.mubr.bf16.mxu0 %v1227
    %5883 = vmatmul.mubr.bf16.gmra.mrb[0].mxu0 %v1226
    %v5884 = vpop.f32.mrb[0].mxu0
    %v5885 = vadd.f32 %v5842, %v5884
    %v5886 = vpop.f32.mrb[0].mxu0
    %v5887 = vadd.f32 %v5844, %v5886
    %v5888 = vpop.f32.mrb[0].mxu0
    %v5889 = vadd.f32 %v5846, %v5888
    %v5890 = vpop.f32.mrb[0].mxu0
    %v5891 = vadd.f32 %v5848, %v5890
    %5892 = vdwg.mxu0
    %5893 = vmatprep.subr.bf16.mxu0 %v4367
    %5894 = vmatpush1.bf16.msra.mxu0 %v4366
    %5895 = vmatprep.subr.bf16.mxu0 %v4369
    %5896 = vmatpush1.bf16.msra.mxu0 %v4368
    %5897 = vmatprep.subr.bf16.mxu0 %v4371
    %5898 = vmatpush1.bf16.msra.mxu0 %v4370
    %5899 = vmatprep.subr.bf16.mxu0 %v4373
    %5900 = vmatpush1.bf16.msra.mxu0 %v4372
    %5901 = vmatprep.subr.bf16.mxu0 %v4375
    %5902 = vmatpush1.bf16.msra.mxu0 %v4374
    %5903 = vmatprep.subr.bf16.mxu0 %v4377
    %5904 = vmatpush1.bf16.msra.mxu0 %v4376
    %5905 = vmatprep.subr.bf16.mxu0 %v4379
    %5906 = vmatpush1.bf16.msra.mxu0 %v4378
    %5907 = vmatprep.subr.bf16.mxu0 %v4381
    %5908 = vmatpush1.bf16.msra.mxu0 %v4380
    %5909 = vmatprep.subr.bf16.mxu0 %v4383
    %5910 = vmatpush1.bf16.msra.mxu0 %v4382
    %5911 = vmatprep.subr.bf16.mxu0 %v4385
    %5912 = vmatpush1.bf16.msra.mxu0 %v4384
    %5913 = vmatprep.subr.bf16.mxu0 %v4387
    %5914 = vmatpush1.bf16.msra.mxu0 %v4386
    %5915 = vmatprep.subr.bf16.mxu0 %v4389
    %5916 = vmatpush1.bf16.msra.mxu0 %v4388
    %5917 = vmatprep.subr.bf16.mxu0 %v4391
    %5918 = vmatpush1.bf16.msra.mxu0 %v4390
    %5919 = vmatprep.subr.bf16.mxu0 %v4393
    %5920 = vmatpush1.bf16.msra.mxu0 %v4392
    %5921 = vmatprep.subr.bf16.mxu0 %v4395
    %5922 = vmatpush1.bf16.msra.mxu0 %v4394
    %5923 = vmatprep.subr.bf16.mxu0 %v4397
    %5924 = vmatpush1.bf16.msra.mxu0 %v4396
    %5925 = vmatprep.mubr.bf16.mxu0 %v1229
    %5926 = vmatmul.mubr.bf16.gmra.mrb[0].mxu0 %v1228
    %v5927 = vpop.f32.mrb[0].mxu0
    %v5928 = vadd.f32 %v5885, %v5927
    %v5929 = vpop.f32.mrb[0].mxu0
    %v5930 = vadd.f32 %v5887, %v5929
    %v5931 = vpop.f32.mrb[0].mxu0
    %v5932 = vadd.f32 %v5889, %v5931
    %v5933 = vpop.f32.mrb[0].mxu0
    %v5934 = vadd.f32 %v5891, %v5933
    %5935 = vdwg.mxu0
    %5936 = vmatprep.subr.bf16.mxu0 %v4399
    %5937 = vmatpush1.bf16.msra.mxu0 %v4398
    %5938 = vmatprep.subr.bf16.mxu0 %v4401
    %5939 = vmatpush1.bf16.msra.mxu0 %v4400
    %5940 = vmatprep.subr.bf16.mxu0 %v4403
    %5941 = vmatpush1.bf16.msra.mxu0 %v4402
    %5942 = vmatprep.subr.bf16.mxu0 %v4405
    %5943 = vmatpush1.bf16.msra.mxu0 %v4404
    %5944 = vmatprep.subr.bf16.mxu0 %v4407
    %5945 = vmatpush1.bf16.msra.mxu0 %v4406
    %5946 = vmatprep.subr.bf16.mxu0 %v4409
    %5947 = vmatpush1.bf16.msra.mxu0 %v4408
    %5948 = vmatprep.subr.bf16.mxu0 %v4411
    %5949 = vmatpush1.bf16.msra.mxu0 %v4410
    %5950 = vmatprep.subr.bf16.mxu0 %v4413
    %5951 = vmatpush1.bf16.msra.mxu0 %v4412
    %5952 = vmatprep.subr.bf16.mxu0 %v4415
    %5953 = vmatpush1.bf16.msra.mxu0 %v4414
    %5954 = vmatprep.subr.bf16.mxu0 %v4417
    %5955 = vmatpush1.bf16.msra.mxu0 %v4416
    %5956 = vmatprep.subr.bf16.mxu0 %v4419
    %5957 = vmatpush1.bf16.msra.mxu0 %v4418
    %5958 = vmatprep.subr.bf16.mxu0 %v4421
    %5959 = vmatpush1.bf16.msra.mxu0 %v4420
    %5960 = vmatprep.subr.bf16.mxu0 %v4423
    %5961 = vmatpush1.bf16.msra.mxu0 %v4422
    %5962 = vmatprep.subr.bf16.mxu0 %v4425
    %5963 = vmatpush1.bf16.msra.mxu0 %v4424
    %5964 = vmatprep.subr.bf16.mxu0 %v4427
    %5965 = vmatpush1.bf16.msra.mxu0 %v4426
    %5966 = vmatprep.subr.bf16.mxu0 %v4429
    %5967 = vmatpush1.bf16.msra.mxu0 %v4428
    %5968 = vmatprep.mubr.bf16.mxu0 %v1231
    %5969 = vmatmul.mubr.bf16.gmra.mrb[0].mxu0 %v1230
    %v5970 = vpop.f32.mrb[0].mxu0
    %v5971 = vadd.f32 %v5928, %v5970
    %v5972 = vpop.f32.mrb[0].mxu0
    %v5973 = vadd.f32 %v5930, %v5972
    %v5974 = vpop.f32.mrb[0].mxu0
    %v5975 = vadd.f32 %v5932, %v5974
    %v5976 = vpop.f32.mrb[0].mxu0
    %v5977 = vadd.f32 %v5934, %v5976
    %5978 = vdwg.mxu0
    %5979 = vmatprep.subr.bf16.mxu0 %v4431
    %5980 = vmatpush1.bf16.msra.mxu0 %v4430
    %5981 = vmatprep.subr.bf16.mxu0 %v4433
    %5982 = vmatpush1.bf16.msra.mxu0 %v4432
    %5983 = vmatprep.subr.bf16.mxu0 %v4435
    %5984 = vmatpush1.bf16.msra.mxu0 %v4434
    %5985 = vmatprep.subr.bf16.mxu0 %v4437
    %5986 = vmatpush1.bf16.msra.mxu0 %v4436
    %5987 = vmatprep.subr.bf16.mxu0 %v4439
    %5988 = vmatpush1.bf16.msra.mxu0 %v4438
    %5989 = vmatprep.subr.bf16.mxu0 %v4441
    %5990 = vmatpush1.bf16.msra.mxu0 %v4440
    %5991 = vmatprep.subr.bf16.mxu0 %v4443
    %5992 = vmatpush1.bf16.msra.mxu0 %v4442
    %5993 = vmatprep.subr.bf16.mxu0 %v4445
    %5994 = vmatpush1.bf16.msra.mxu0 %v4444
    %5995 = vmatprep.subr.bf16.mxu0 %v4447
    %5996 = vmatpush1.bf16.msra.mxu0 %v4446
    %5997 = vmatprep.subr.bf16.mxu0 %v4449
    %5998 = vmatpush1.bf16.msra.mxu0 %v4448
    %5999 = vmatprep.subr.bf16.mxu0 %v4451
    %6000 = vmatpush1.bf16.msra.mxu0 %v4450
    %6001 = vmatprep.subr.bf16.mxu0 %v4453
    %6002 = vmatpush1.bf16.msra.mxu0 %v4452
    %6003 = vmatprep.subr.bf16.mxu0 %v4455
    %6004 = vmatpush1.bf16.msra.mxu0 %v4454
    %6005 = vmatprep.subr.bf16.mxu0 %v4457
    %6006 = vmatpush1.bf16.msra.mxu0 %v4456
    %6007 = vmatprep.subr.bf16.mxu0 %v4459
    %6008 = vmatpush1.bf16.msra.mxu0 %v4458
    %6009 = vmatprep.subr.bf16.mxu0 %v4461
    %6010 = vmatpush1.bf16.msra.mxu0 %v4460
    %6011 = vmatprep.mubr.bf16.mxu0 %v1233
    %6012 = vmatmul.mubr.bf16.gmra.mrb[0].mxu0 %v1232
    %v6013 = vpop.f32.mrb[0].mxu0
    %v6014 = vadd.f32 %v5971, %v6013
    %v6015 = vpop.f32.mrb[0].mxu0
    %v6016 = vadd.f32 %v5973, %v6015
    %v6017 = vpop.f32.mrb[0].mxu0
    %v6018 = vadd.f32 %v5975, %v6017
    %v6019 = vpop.f32.mrb[0].mxu0
    %v6020 = vadd.f32 %v5977, %v6019
    %6021 = vdwg.mxu0
    %6022 = vmatprep.subr.bf16.mxu0 %v4463
    %6023 = vmatpush1.bf16.msra.mxu0 %v4462
    %6024 = vmatprep.subr.bf16.mxu0 %v4465
    %6025 = vmatpush1.bf16.msra.mxu0 %v4464
    %6026 = vmatprep.subr.bf16.mxu0 %v4467
    %6027 = vmatpush1.bf16.msra.mxu0 %v4466
    %6028 = vmatprep.subr.bf16.mxu0 %v4469
    %6029 = vmatpush1.bf16.msra.mxu0 %v4468
    %6030 = vmatprep.subr.bf16.mxu0 %v4471
    %6031 = vmatpush1.bf16.msra.mxu0 %v4470
    %6032 = vmatprep.subr.bf16.mxu0 %v4473
    %6033 = vmatpush1.bf16.msra.mxu0 %v4472
    %6034 = vmatprep.subr.bf16.mxu0 %v4475
    %6035 = vmatpush1.bf16.msra.mxu0 %v4474
    %6036 = vmatprep.subr.bf16.mxu0 %v4477
    %6037 = vmatpush1.bf16.msra.mxu0 %v4476
    %6038 = vmatprep.subr.bf16.mxu0 %v4479
    %6039 = vmatpush1.bf16.msra.mxu0 %v4478
    %6040 = vmatprep.subr.bf16.mxu0 %v4481
    %6041 = vmatpush1.bf16.msra.mxu0 %v4480
    %6042 = vmatprep.subr.bf16.mxu0 %v4483
    %6043 = vmatpush1.bf16.msra.mxu0 %v4482
    %6044 = vmatprep.subr.bf16.mxu0 %v4485
    %6045 = vmatpush1.bf16.msra.mxu0 %v4484
    %6046 = vmatprep.subr.bf16.mxu0 %v4487
    %6047 = vmatpush1.bf16.msra.mxu0 %v4486
    %6048 = vmatprep.subr.bf16.mxu0 %v4489
    %6049 = vmatpush1.bf16.msra.mxu0 %v4488
    %6050 = vmatprep.subr.bf16.mxu0 %v4491
    %6051 = vmatpush1.bf16.msra.mxu0 %v4490
    %6052 = vmatprep.subr.bf16.mxu0 %v4493
    %6053 = vmatpush1.bf16.msra.mxu0 %v4492
    %6054 = vmatprep.mubr.bf16.mxu0 %v1235
    %6055 = vmatmul.mubr.bf16.gmra.mrb[0].mxu0 %v1234
    %v6056 = vpop.f32.mrb[0].mxu0
    %v6057 = vadd.f32 %v6014, %v6056
    %v6058 = vpop.f32.mrb[0].mxu0
    %v6059 = vadd.f32 %v6016, %v6058
    %v6060 = vpop.f32.mrb[0].mxu0
    %v6061 = vadd.f32 %v6018, %v6060
    %v6062 = vpop.f32.mrb[0].mxu0
    %v6063 = vadd.f32 %v6020, %v6062
    %6064 = vdwg.mxu0
    %6065 = vmatprep.subr.bf16.mxu0 %v4495
    %6066 = vmatpush1.bf16.msra.mxu0 %v4494
    %6067 = vmatprep.subr.bf16.mxu0 %v4497
    %6068 = vmatpush1.bf16.msra.mxu0 %v4496
    %6069 = vmatprep.subr.bf16.mxu0 %v4499
    %6070 = vmatpush1.bf16.msra.mxu0 %v4498
    %6071 = vmatprep.subr.bf16.mxu0 %v4501
    %6072 = vmatpush1.bf16.msra.mxu0 %v4500
    %6073 = vmatprep.subr.bf16.mxu0 %v4503
    %6074 = vmatpush1.bf16.msra.mxu0 %v4502
    %6075 = vmatprep.subr.bf16.mxu0 %v4505
    %6076 = vmatpush1.bf16.msra.mxu0 %v4504
    %6077 = vmatprep.subr.bf16.mxu0 %v4507
    %6078 = vmatpush1.bf16.msra.mxu0 %v4506
    %6079 = vmatprep.subr.bf16.mxu0 %v4509
    %6080 = vmatpush1.bf16.msra.mxu0 %v4508
    %6081 = vmatprep.subr.bf16.mxu0 %v4511
    %6082 = vmatpush1.bf16.msra.mxu0 %v4510
    %6083 = vmatprep.subr.bf16.mxu0 %v4513
    %6084 = vmatpush1.bf16.msra.mxu0 %v4512
    %6085 = vmatprep.subr.bf16.mxu0 %v4515
    %6086 = vmatpush1.bf16.msra.mxu0 %v4514
    %6087 = vmatprep.subr.bf16.mxu0 %v4517
    %6088 = vmatpush1.bf16.msra.mxu0 %v4516
    %6089 = vmatprep.subr.bf16.mxu0 %v4519
    %6090 = vmatpush1.bf16.msra.mxu0 %v4518
    %6091 = vmatprep.subr.bf16.mxu0 %v4521
    %6092 = vmatpush1.bf16.msra.mxu0 %v4520
    %6093 = vmatprep.subr.bf16.mxu0 %v4523
    %6094 = vmatpush1.bf16.msra.mxu0 %v4522
    %6095 = vmatprep.subr.bf16.mxu0 %v4525
    %6096 = vmatpush1.bf16.msra.mxu0 %v4524
    %6097 = vmatprep.mubr.bf16.mxu0 %v1237
    %6098 = vmatmul.mubr.bf16.gmra.mrb[0].mxu0 %v1236
    %v6099 = vpop.f32.mrb[0].mxu0
    %v6100 = vadd.f32 %v6057, %v6099
    %v6101 = vpop.f32.mrb[0].mxu0
    %v6102 = vadd.f32 %v6059, %v6101
    %v6103 = vpop.f32.mrb[0].mxu0
    %v6104 = vadd.f32 %v6061, %v6103
    %v6105 = vpop.f32.mrb[0].mxu0
    %v6106 = vadd.f32 %v6063, %v6105
    %6107 = vdwg.mxu0
    %6108 = vmatprep.subr.bf16.mxu0 %v4527
    %6109 = vmatpush1.bf16.msra.mxu0 %v4526
    %6110 = vmatprep.subr.bf16.mxu0 %v4529
    %6111 = vmatpush1.bf16.msra.mxu0 %v4528
    %6112 = vmatprep.subr.bf16.mxu0 %v4531
    %6113 = vmatpush1.bf16.msra.mxu0 %v4530
    %6114 = vmatprep.subr.bf16.mxu0 %v4533
    %6115 = vmatpush1.bf16.msra.mxu0 %v4532
    %6116 = vmatprep.subr.bf16.mxu0 %v4535
    %6117 = vmatpush1.bf16.msra.mxu0 %v4534
    %6118 = vmatprep.subr.bf16.mxu0 %v4537
    %6119 = vmatpush1.bf16.msra.mxu0 %v4536
    %6120 = vmatprep.subr.bf16.mxu0 %v4539
    %6121 = vmatpush1.bf16.msra.mxu0 %v4538
    %6122 = vmatprep.subr.bf16.mxu0 %v4541
    %6123 = vmatpush1.bf16.msra.mxu0 %v4540
    %6124 = vmatprep.subr.bf16.mxu0 %v4543
    %6125 = vmatpush1.bf16.msra.mxu0 %v4542
    %6126 = vmatprep.subr.bf16.mxu0 %v4545
    %6127 = vmatpush1.bf16.msra.mxu0 %v4544
    %6128 = vmatprep.subr.bf16.mxu0 %v4547
    %6129 = vmatpush1.bf16.msra.mxu0 %v4546
    %6130 = vmatprep.subr.bf16.mxu0 %v4549
    %6131 = vmatpush1.bf16.msra.mxu0 %v4548
    %6132 = vmatprep.subr.bf16.mxu0 %v4551
    %6133 = vmatpush1.bf16.msra.mxu0 %v4550
    %6134 = vmatprep.subr.bf16.mxu0 %v4553
    %6135 = vmatpush1.bf16.msra.mxu0 %v4552
    %6136 = vmatprep.subr.bf16.mxu0 %v4555
    %6137 = vmatpush1.bf16.msra.mxu0 %v4554
    %6138 = vmatprep.subr.bf16.mxu0 %v4557
    %6139 = vmatpush1.bf16.msra.mxu0 %v4556
    %6140 = vmatprep.mubr.bf16.mxu0 %v1239
    %6141 = vmatmul.mubr.bf16.gmra.mrb[0].mxu0 %v1238
    %v6142 = vpop.f32.mrb[0].mxu0
    %v6143 = vadd.f32 %v6100, %v6142
    %v6144 = vpop.f32.mrb[0].mxu0
    %v6145 = vadd.f32 %v6102, %v6144
    %v6146 = vpop.f32.mrb[0].mxu0
    %v6147 = vadd.f32 %v6104, %v6146
    %v6148 = vpop.f32.mrb[0].mxu0
    %v6149 = vadd.f32 %v6106, %v6148
    %6150 = vdwg.mxu0
    %6151 = vmatprep.subr.bf16.mxu0 %v4559
    %6152 = vmatpush1.bf16.msra.mxu0 %v4558
    %6153 = vmatprep.subr.bf16.mxu0 %v4561
    %6154 = vmatpush1.bf16.msra.mxu0 %v4560
    %6155 = vmatprep.subr.bf16.mxu0 %v4563
    %6156 = vmatpush1.bf16.msra.mxu0 %v4562
    %6157 = vmatprep.subr.bf16.mxu0 %v4565
    %6158 = vmatpush1.bf16.msra.mxu0 %v4564
    %6159 = vmatprep.subr.bf16.mxu0 %v4567
    %6160 = vmatpush1.bf16.msra.mxu0 %v4566
    %6161 = vmatprep.subr.bf16.mxu0 %v4569
    %6162 = vmatpush1.bf16.msra.mxu0 %v4568
    %6163 = vmatprep.subr.bf16.mxu0 %v4571
    %6164 = vmatpush1.bf16.msra.mxu0 %v4570
    %6165 = vmatprep.subr.bf16.mxu0 %v4573
    %6166 = vmatpush1.bf16.msra.mxu0 %v4572
    %6167 = vmatprep.subr.bf16.mxu0 %v4575
    %6168 = vmatpush1.bf16.msra.mxu0 %v4574
    %6169 = vmatprep.subr.bf16.mxu0 %v4577
    %6170 = vmatpush1.bf16.msra.mxu0 %v4576
    %6171 = vmatprep.subr.bf16.mxu0 %v4579
    %6172 = vmatpush1.bf16.msra.mxu0 %v4578
    %6173 = vmatprep.subr.bf16.mxu0 %v4581
    %6174 = vmatpush1.bf16.msra.mxu0 %v4580
    %6175 = vmatprep.subr.bf16.mxu0 %v4583
    %6176 = vmatpush1.bf16.msra.mxu0 %v4582
    %6177 = vmatprep.subr.bf16.mxu0 %v4585
    %6178 = vmatpush1.bf16.msra.mxu0 %v4584
    %6179 = vmatprep.subr.bf16.mxu0 %v4587
    %6180 = vmatpush1.bf16.msra.mxu0 %v4586
    %6181 = vmatprep.subr.bf16.mxu0 %v4589
    %6182 = vmatpush1.bf16.msra.mxu0 %v4588
    %6183 = vmatprep.mubr.bf16.mxu0 %v1241
    %6184 = vmatmul.mubr.bf16.gmra.mrb[0].mxu0 %v1240
    %v6185 = vpop.f32.mrb[0].mxu0
    %v6186 = vadd.f32 %v6143, %v6185
    %v6187 = vpop.f32.mrb[0].mxu0
    %v6188 = vadd.f32 %v6145, %v6187
    %v6189 = vpop.f32.mrb[0].mxu0
    %v6190 = vadd.f32 %v6147, %v6189
    %v6191 = vpop.f32.mrb[0].mxu0
    %v6192 = vadd.f32 %v6149, %v6191
    %6193 = vdwg.mxu0
    %6194 = vmatprep.subr.bf16.mxu0 %v4591
    %6195 = vmatpush1.bf16.msra.mxu0 %v4590
    %6196 = vmatprep.subr.bf16.mxu0 %v4593
    %6197 = vmatpush1.bf16.msra.mxu0 %v4592
    %6198 = vmatprep.subr.bf16.mxu0 %v4595
    %6199 = vmatpush1.bf16.msra.mxu0 %v4594
    %6200 = vmatprep.subr.bf16.mxu0 %v4597
    %6201 = vmatpush1.bf16.msra.mxu0 %v4596
    %6202 = vmatprep.subr.bf16.mxu0 %v4599
    %6203 = vmatpush1.bf16.msra.mxu0 %v4598
    %6204 = vmatprep.subr.bf16.mxu0 %v4601
    %6205 = vmatpush1.bf16.msra.mxu0 %v4600
    %6206 = vmatprep.subr.bf16.mxu0 %v4603
    %6207 = vmatpush1.bf16.msra.mxu0 %v4602
    %6208 = vmatprep.subr.bf16.mxu0 %v4605
    %6209 = vmatpush1.bf16.msra.mxu0 %v4604
    %6210 = vmatprep.subr.bf16.mxu0 %v4607
    %6211 = vmatpush1.bf16.msra.mxu0 %v4606
    %6212 = vmatprep.subr.bf16.mxu0 %v4609
    %6213 = vmatpush1.bf16.msra.mxu0 %v4608
    %6214 = vmatprep.subr.bf16.mxu0 %v4611
    %6215 = vmatpush1.bf16.msra.mxu0 %v4610
    %6216 = vmatprep.subr.bf16.mxu0 %v4613
    %6217 = vmatpush1.bf16.msra.mxu0 %v4612
    %6218 = vmatprep.subr.bf16.mxu0 %v4615
    %6219 = vmatpush1.bf16.msra.mxu0 %v4614
    %6220 = vmatprep.subr.bf16.mxu0 %v4617
    %6221 = vmatpush1.bf16.msra.mxu0 %v4616
    %6222 = vmatprep.subr.bf16.mxu0 %v4619
    %6223 = vmatpush1.bf16.msra.mxu0 %v4618
    %6224 = vmatprep.subr.bf16.mxu0 %v4621
    %6225 = vmatpush1.bf16.msra.mxu0 %v4620
    %6226 = vmatprep.mubr.bf16.mxu0 %v1243
    %6227 = vmatmul.mubr.bf16.gmra.mrb[0].mxu0 %v1242
    %v6228 = vpop.f32.mrb[0].mxu0
    %v6229 = vadd.f32 %v6186, %v6228
    %v6230 = vpop.f32.mrb[0].mxu0
    %v6231 = vadd.f32 %v6188, %v6230
    %v6232 = vpop.f32.mrb[0].mxu0
    %v6233 = vadd.f32 %v6190, %v6232
    %v6234 = vpop.f32.mrb[0].mxu0
    %v6235 = vadd.f32 %v6192, %v6234
    %6236 = vdwg.mxu0
    %6237 = vmatprep.subr.bf16.mxu0 %v4623
    %6238 = vmatpush1.bf16.msra.mxu0 %v4622
    %6239 = vmatprep.subr.bf16.mxu0 %v4625
    %6240 = vmatpush1.bf16.msra.mxu0 %v4624
    %6241 = vmatprep.subr.bf16.mxu0 %v4627
    %6242 = vmatpush1.bf16.msra.mxu0 %v4626
    %6243 = vmatprep.subr.bf16.mxu0 %v4629
    %6244 = vmatpush1.bf16.msra.mxu0 %v4628
    %6245 = vmatprep.subr.bf16.mxu0 %v4631
    %6246 = vmatpush1.bf16.msra.mxu0 %v4630
    %6247 = vmatprep.subr.bf16.mxu0 %v4633
    %6248 = vmatpush1.bf16.msra.mxu0 %v4632
    %6249 = vmatprep.subr.bf16.mxu0 %v4635
    %6250 = vmatpush1.bf16.msra.mxu0 %v4634
    %6251 = vmatprep.subr.bf16.mxu0 %v4637
    %6252 = vmatpush1.bf16.msra.mxu0 %v4636
    %6253 = vmatprep.subr.bf16.mxu0 %v4639
    %6254 = vmatpush1.bf16.msra.mxu0 %v4638
    %6255 = vmatprep.subr.bf16.mxu0 %v4641
    %6256 = vmatpush1.bf16.msra.mxu0 %v4640
    %6257 = vmatprep.subr.bf16.mxu0 %v4643
    %6258 = vmatpush1.bf16.msra.mxu0 %v4642
    %6259 = vmatprep.subr.bf16.mxu0 %v4645
    %6260 = vmatpush1.bf16.msra.mxu0 %v4644
    %6261 = vmatprep.subr.bf16.mxu0 %v4647
    %6262 = vmatpush1.bf16.msra.mxu0 %v4646
    %6263 = vmatprep.subr.bf16.mxu0 %v4649
    %6264 = vmatpush1.bf16.msra.mxu0 %v4648
    %6265 = vmatprep.subr.bf16.mxu0 %v4651
    %6266 = vmatpush1.bf16.msra.mxu0 %v4650
    %6267 = vmatprep.subr.bf16.mxu0 %v4653
    %6268 = vmatpush1.bf16.msra.mxu0 %v4652
    %6269 = vmatprep.mubr.bf16.mxu0 %v1245
    %6270 = vmatmul.mubr.bf16.gmra.mrb[0].mxu0 %v1244
    %v6271 = vpop.f32.mrb[0].mxu0
    %v6272 = vadd.f32 %v6229, %v6271
    %v6273 = vpop.f32.mrb[0].mxu0
    %v6274 = vadd.f32 %v6231, %v6273
    %v6275 = vpop.f32.mrb[0].mxu0
    %v6276 = vadd.f32 %v6233, %v6275
    %v6277 = vpop.f32.mrb[0].mxu0
    %v6278 = vadd.f32 %v6235, %v6277
    %6279 = vdwg.mxu0
    %6280 = vmatprep.subr.bf16.mxu0 %v4655
    %6281 = vmatpush1.bf16.msra.mxu0 %v4654
    %6282 = vmatprep.subr.bf16.mxu0 %v4657
    %6283 = vmatpush1.bf16.msra.mxu0 %v4656
    %6284 = vmatprep.subr.bf16.mxu0 %v4659
    %6285 = vmatpush1.bf16.msra.mxu0 %v4658
    %6286 = vmatprep.subr.bf16.mxu0 %v4661
    %6287 = vmatpush1.bf16.msra.mxu0 %v4660
    %6288 = vmatprep.subr.bf16.mxu0 %v4663
    %6289 = vmatpush1.bf16.msra.mxu0 %v4662
    %6290 = vmatprep.subr.bf16.mxu0 %v4665
    %6291 = vmatpush1.bf16.msra.mxu0 %v4664
    %6292 = vmatprep.subr.bf16.mxu0 %v4667
    %6293 = vmatpush1.bf16.msra.mxu0 %v4666
    %6294 = vmatprep.subr.bf16.mxu0 %v4669
    %6295 = vmatpush1.bf16.msra.mxu0 %v4668
    %6296 = vmatprep.subr.bf16.mxu0 %v4671
    %6297 = vmatpush1.bf16.msra.mxu0 %v4670
    %6298 = vmatprep.subr.bf16.mxu0 %v4673
    %6299 = vmatpush1.bf16.msra.mxu0 %v4672
    %6300 = vmatprep.subr.bf16.mxu0 %v4675
    %6301 = vmatpush1.bf16.msra.mxu0 %v4674
    %6302 = vmatprep.subr.bf16.mxu0 %v4677
    %6303 = vmatpush1.bf16.msra.mxu0 %v4676
    %6304 = vmatprep.subr.bf16.mxu0 %v4679
    %6305 = vmatpush1.bf16.msra.mxu0 %v4678
    %6306 = vmatprep.subr.bf16.mxu0 %v4681
    %6307 = vmatpush1.bf16.msra.mxu0 %v4680
    %6308 = vmatprep.subr.bf16.mxu0 %v4683
    %6309 = vmatpush1.bf16.msra.mxu0 %v4682
    %6310 = vmatprep.subr.bf16.mxu0 %v4685
    %6311 = vmatpush1.bf16.msra.mxu0 %v4684
    %6312 = vmatprep.mubr.bf16.mxu0 %v1247
    %6313 = vmatmul.mubr.bf16.gmra.mrb[0].mxu0 %v1246
    %v6314 = vpop.f32.mrb[0].mxu0
    %v6315 = vadd.f32 %v6272, %v6314
    %v6316 = vpop.f32.mrb[0].mxu0
    %v6317 = vadd.f32 %v6274, %v6316
    %v6318 = vpop.f32.mrb[0].mxu0
    %v6319 = vadd.f32 %v6276, %v6318
    %v6320 = vpop.f32.mrb[0].mxu0
    %v6321 = vadd.f32 %v6278, %v6320
    %6322 = vdwg.mxu0
    %6323 = vmatprep.subr.bf16.mxu0 %v4687
    %6324 = vmatpush1.bf16.msra.mxu0 %v4686
    %6325 = vmatprep.subr.bf16.mxu0 %v4689
    %6326 = vmatpush1.bf16.msra.mxu0 %v4688
    %6327 = vmatprep.subr.bf16.mxu0 %v4691
    %6328 = vmatpush1.bf16.msra.mxu0 %v4690
    %6329 = vmatprep.subr.bf16.mxu0 %v4693
    %6330 = vmatpush1.bf16.msra.mxu0 %v4692
    %6331 = vmatprep.subr.bf16.mxu0 %v4695
    %6332 = vmatpush1.bf16.msra.mxu0 %v4694
    %6333 = vmatprep.subr.bf16.mxu0 %v4697
    %6334 = vmatpush1.bf16.msra.mxu0 %v4696
    %6335 = vmatprep.subr.bf16.mxu0 %v4699
    %6336 = vmatpush1.bf16.msra.mxu0 %v4698
    %6337 = vmatprep.subr.bf16.mxu0 %v4701
    %6338 = vmatpush1.bf16.msra.mxu0 %v4700
    %6339 = vmatprep.subr.bf16.mxu0 %v4703
    %6340 = vmatpush1.bf16.msra.mxu0 %v4702
    %6341 = vmatprep.subr.bf16.mxu0 %v4705
    %6342 = vmatpush1.bf16.msra.mxu0 %v4704
    %6343 = vmatprep.subr.bf16.mxu0 %v4707
    %6344 = vmatpush1.bf16.msra.mxu0 %v4706
    %6345 = vmatprep.subr.bf16.mxu0 %v4709
    %6346 = vmatpush1.bf16.msra.mxu0 %v4708
    %6347 = vmatprep.subr.bf16.mxu0 %v4711
    %6348 = vmatpush1.bf16.msra.mxu0 %v4710
    %6349 = vmatprep.subr.bf16.mxu0 %v4713
    %6350 = vmatpush1.bf16.msra.mxu0 %v4712
    %6351 = vmatprep.subr.bf16.mxu0 %v4715
    %6352 = vmatpush1.bf16.msra.mxu0 %v4714
    %6353 = vmatprep.subr.bf16.mxu0 %v4717
    %6354 = vmatpush1.bf16.msra.mxu0 %v4716
    %6355 = vmatprep.mubr.bf16.mxu0 %v1249
    %6356 = vmatmul.mubr.bf16.gmra.mrb[0].mxu0 %v1248
    %v6357 = vpop.f32.mrb[0].mxu0
    %v6358 = vadd.f32 %v6315, %v6357
    %v6359 = vpop.f32.mrb[0].mxu0
    %v6360 = vadd.f32 %v6317, %v6359
    %v6361 = vpop.f32.mrb[0].mxu0
    %v6362 = vadd.f32 %v6319, %v6361
    %v6363 = vpop.f32.mrb[0].mxu0
    %v6364 = vadd.f32 %v6321, %v6363
    %6365 = vdwg.mxu0
    %6366 = vmatprep.subr.bf16.mxu0 %v4719
    %6367 = vmatpush1.bf16.msra.mxu0 %v4718
    %6368 = vmatprep.subr.bf16.mxu0 %v4721
    %6369 = vmatpush1.bf16.msra.mxu0 %v4720
    %6370 = vmatprep.subr.bf16.mxu0 %v4723
    %6371 = vmatpush1.bf16.msra.mxu0 %v4722
    %6372 = vmatprep.subr.bf16.mxu0 %v4725
    %6373 = vmatpush1.bf16.msra.mxu0 %v4724
    %6374 = vmatprep.subr.bf16.mxu0 %v4727
    %6375 = vmatpush1.bf16.msra.mxu0 %v4726
    %6376 = vmatprep.subr.bf16.mxu0 %v4729
    %6377 = vmatpush1.bf16.msra.mxu0 %v4728
    %6378 = vmatprep.subr.bf16.mxu0 %v4731
    %6379 = vmatpush1.bf16.msra.mxu0 %v4730
    %6380 = vmatprep.subr.bf16.mxu0 %v4733
    %6381 = vmatpush1.bf16.msra.mxu0 %v4732
    %6382 = vmatprep.subr.bf16.mxu0 %v4735
    %6383 = vmatpush1.bf16.msra.mxu0 %v4734
    %6384 = vmatprep.subr.bf16.mxu0 %v4737
    %6385 = vmatpush1.bf16.msra.mxu0 %v4736
    %6386 = vmatprep.subr.bf16.mxu0 %v4739
    %6387 = vmatpush1.bf16.msra.mxu0 %v4738
    %6388 = vmatprep.subr.bf16.mxu0 %v4741
    %6389 = vmatpush1.bf16.msra.mxu0 %v4740
    %6390 = vmatprep.subr.bf16.mxu0 %v4743
    %6391 = vmatpush1.bf16.msra.mxu0 %v4742
    %6392 = vmatprep.subr.bf16.mxu0 %v4745
    %6393 = vmatpush1.bf16.msra.mxu0 %v4744
    %6394 = vmatprep.subr.bf16.mxu0 %v4747
    %6395 = vmatpush1.bf16.msra.mxu0 %v4746
    %6396 = vmatprep.subr.bf16.mxu0 %v4749
    %6397 = vmatpush1.bf16.msra.mxu0 %v4748
    %6398 = vmatprep.mubr.bf16.mxu0 %v1251
    %6399 = vmatmul.mubr.bf16.gmra.mrb[0].mxu0 %v1250
    %v6400 = vpop.f32.mrb[0].mxu0
    %v6401 = vadd.f32 %v6358, %v6400
    %v6402 = vpop.f32.mrb[0].mxu0
    %v6403 = vadd.f32 %v6360, %v6402
    %v6404 = vpop.f32.mrb[0].mxu0
    %v6405 = vadd.f32 %v6362, %v6404
    %v6406 = vpop.f32.mrb[0].mxu0
    %v6407 = vadd.f32 %v6364, %v6406
    %6408 = vdwg.mxu0
    %6409 = vmatprep.subr.bf16.mxu0 %v4751
    %6410 = vmatpush1.bf16.msra.mxu0 %v4750
    %6411 = vmatprep.subr.bf16.mxu0 %v4753
    %6412 = vmatpush1.bf16.msra.mxu0 %v4752
    %6413 = vmatprep.subr.bf16.mxu0 %v4755
    %6414 = vmatpush1.bf16.msra.mxu0 %v4754
    %6415 = vmatprep.subr.bf16.mxu0 %v4757
    %6416 = vmatpush1.bf16.msra.mxu0 %v4756
    %6417 = vmatprep.subr.bf16.mxu0 %v4759
    %6418 = vmatpush1.bf16.msra.mxu0 %v4758
    %6419 = vmatprep.subr.bf16.mxu0 %v4761
    %6420 = vmatpush1.bf16.msra.mxu0 %v4760
    %6421 = vmatprep.subr.bf16.mxu0 %v4763
    %6422 = vmatpush1.bf16.msra.mxu0 %v4762
    %6423 = vmatprep.subr.bf16.mxu0 %v4765
    %6424 = vmatpush1.bf16.msra.mxu0 %v4764
    %6425 = vmatprep.subr.bf16.mxu0 %v4767
    %6426 = vmatpush1.bf16.msra.mxu0 %v4766
    %6427 = vmatprep.subr.bf16.mxu0 %v4769
    %6428 = vmatpush1.bf16.msra.mxu0 %v4768
    %6429 = vmatprep.subr.bf16.mxu0 %v4771
    %6430 = vmatpush1.bf16.msra.mxu0 %v4770
    %6431 = vmatprep.subr.bf16.mxu0 %v4773
    %6432 = vmatpush1.bf16.msra.mxu0 %v4772
    %6433 = vmatprep.subr.bf16.mxu0 %v4775
    %6434 = vmatpush1.bf16.msra.mxu0 %v4774
    %6435 = vmatprep.subr.bf16.mxu0 %v4777
    %6436 = vmatpush1.bf16.msra.mxu0 %v4776
    %6437 = vmatprep.subr.bf16.mxu0 %v4779
    %6438 = vmatpush1.bf16.msra.mxu0 %v4778
    %6439 = vmatprep.subr.bf16.mxu0 %v4781
    %6440 = vmatpush1.bf16.msra.mxu0 %v4780
    %6441 = vmatprep.mubr.bf16.mxu0 %v1253
    %6442 = vmatmul.mubr.bf16.gmra.mrb[0].mxu0 %v1252
    %v6443 = vpop.f32.mrb[0].mxu0
    %v6444 = vadd.f32 %v6401, %v6443
    %v6445 = vpop.f32.mrb[0].mxu0
    %v6446 = vadd.f32 %v6403, %v6445
    %v6447 = vpop.f32.mrb[0].mxu0
    %v6448 = vadd.f32 %v6405, %v6447
    %v6449 = vpop.f32.mrb[0].mxu0
    %v6450 = vadd.f32 %v6407, %v6449
    %6451 = vdwg.mxu0
    %6452 = vmatprep.subr.bf16.mxu0 %v4783
    %6453 = vmatpush1.bf16.msra.mxu0 %v4782
    %6454 = vmatprep.subr.bf16.mxu0 %v4785
    %6455 = vmatpush1.bf16.msra.mxu0 %v4784
    %6456 = vmatprep.subr.bf16.mxu0 %v4787
    %6457 = vmatpush1.bf16.msra.mxu0 %v4786
    %6458 = vmatprep.subr.bf16.mxu0 %v4789
    %6459 = vmatpush1.bf16.msra.mxu0 %v4788
    %6460 = vmatprep.subr.bf16.mxu0 %v4791
    %6461 = vmatpush1.bf16.msra.mxu0 %v4790
    %6462 = vmatprep.subr.bf16.mxu0 %v4793
    %6463 = vmatpush1.bf16.msra.mxu0 %v4792
    %6464 = vmatprep.subr.bf16.mxu0 %v4795
    %6465 = vmatpush1.bf16.msra.mxu0 %v4794
    %6466 = vmatprep.subr.bf16.mxu0 %v4797
    %6467 = vmatpush1.bf16.msra.mxu0 %v4796
    %6468 = vmatprep.subr.bf16.mxu0 %v4799
    %6469 = vmatpush1.bf16.msra.mxu0 %v4798
    %6470 = vmatprep.subr.bf16.mxu0 %v4801
    %6471 = vmatpush1.bf16.msra.mxu0 %v4800
    %6472 = vmatprep.subr.bf16.mxu0 %v4803
    %6473 = vmatpush1.bf16.msra.mxu0 %v4802
    %6474 = vmatprep.subr.bf16.mxu0 %v4805
    %6475 = vmatpush1.bf16.msra.mxu0 %v4804
    %6476 = vmatprep.subr.bf16.mxu0 %v4807
    %6477 = vmatpush1.bf16.msra.mxu0 %v4806
    %6478 = vmatprep.subr.bf16.mxu0 %v4809
    %6479 = vmatpush1.bf16.msra.mxu0 %v4808
    %6480 = vmatprep.subr.bf16.mxu0 %v4811
    %6481 = vmatpush1.bf16.msra.mxu0 %v4810
    %6482 = vmatprep.subr.bf16.mxu0 %v4813
    %6483 = vmatpush1.bf16.msra.mxu0 %v4812
    %6484 = vmatprep.mubr.bf16.mxu0 %v1255
    %6485 = vmatmul.mubr.bf16.gmra.mrb[0].mxu0 %v1254
    %v6486 = vpop.f32.mrb[0].mxu0
    %v6487 = vadd.f32 %v6444, %v6486
    %v6488 = vpop.f32.mrb[0].mxu0
    %v6489 = vadd.f32 %v6446, %v6488
    %v6490 = vpop.f32.mrb[0].mxu0
    %v6491 = vadd.f32 %v6448, %v6490
    %v6492 = vpop.f32.mrb[0].mxu0
    %v6493 = vadd.f32 %v6450, %v6492
    %6494 = vdwg.mxu0
    %6495 = vmatprep.subr.bf16.mxu0 %v4815
    %6496 = vmatpush1.bf16.msra.mxu0 %v4814
    %6497 = vmatprep.subr.bf16.mxu0 %v4817
    %6498 = vmatpush1.bf16.msra.mxu0 %v4816
    %6499 = vmatprep.subr.bf16.mxu0 %v4819
    %6500 = vmatpush1.bf16.msra.mxu0 %v4818
    %6501 = vmatprep.subr.bf16.mxu0 %v4821
    %6502 = vmatpush1.bf16.msra.mxu0 %v4820
    %6503 = vmatprep.subr.bf16.mxu0 %v4823
    %6504 = vmatpush1.bf16.msra.mxu0 %v4822
    %6505 = vmatprep.subr.bf16.mxu0 %v4825
    %6506 = vmatpush1.bf16.msra.mxu0 %v4824
    %6507 = vmatprep.subr.bf16.mxu0 %v4827
    %6508 = vmatpush1.bf16.msra.mxu0 %v4826
    %6509 = vmatprep.subr.bf16.mxu0 %v4829
    %6510 = vmatpush1.bf16.msra.mxu0 %v4828
    %6511 = vmatprep.subr.bf16.mxu0 %v4831
    %6512 = vmatpush1.bf16.msra.mxu0 %v4830
    %6513 = vmatprep.subr.bf16.mxu0 %v4833
    %6514 = vmatpush1.bf16.msra.mxu0 %v4832
    %6515 = vmatprep.subr.bf16.mxu0 %v4835
    %6516 = vmatpush1.bf16.msra.mxu0 %v4834
    %6517 = vmatprep.subr.bf16.mxu0 %v4837
    %6518 = vmatpush1.bf16.msra.mxu0 %v4836
    %6519 = vmatprep.subr.bf16.mxu0 %v4839
    %6520 = vmatpush1.bf16.msra.mxu0 %v4838
    %6521 = vmatprep.subr.bf16.mxu0 %v4841
    %6522 = vmatpush1.bf16.msra.mxu0 %v4840
    %6523 = vmatprep.subr.bf16.mxu0 %v4843
    %6524 = vmatpush1.bf16.msra.mxu0 %v4842
    %6525 = vmatprep.subr.bf16.mxu0 %v4845
    %6526 = vmatpush1.bf16.msra.mxu0 %v4844
    %6527 = vmatprep.mubr.bf16.mxu0 %v1257
    %6528 = vmatmul.mubr.bf16.gmra.mrb[0].mxu0 %v1256
    %v6529 = vpop.f32.mrb[0].mxu0
    %v6530 = vadd.f32 %v6487, %v6529
    %v6531 = vpop.f32.mrb[0].mxu0
    %v6532 = vadd.f32 %v6489, %v6531
    %v6533 = vpop.f32.mrb[0].mxu0
    %v6534 = vadd.f32 %v6491, %v6533
    %v6535 = vpop.f32.mrb[0].mxu0
    %v6536 = vadd.f32 %v6493, %v6535
    %6537 = vdwg.mxu0
    %6538 = vmatprep.subr.bf16.mxu0 %v4847
    %6539 = vmatpush1.bf16.msra.mxu0 %v4846
    %6540 = vmatprep.subr.bf16.mxu0 %v4849
    %6541 = vmatpush1.bf16.msra.mxu0 %v4848
    %6542 = vmatprep.subr.bf16.mxu0 %v4851
    %6543 = vmatpush1.bf16.msra.mxu0 %v4850
    %6544 = vmatprep.subr.bf16.mxu0 %v4853
    %6545 = vmatpush1.bf16.msra.mxu0 %v4852
    %6546 = vmatprep.subr.bf16.mxu0 %v4855
    %6547 = vmatpush1.bf16.msra.mxu0 %v4854
    %6548 = vmatprep.subr.bf16.mxu0 %v4857
    %6549 = vmatpush1.bf16.msra.mxu0 %v4856
    %6550 = vmatprep.subr.bf16.mxu0 %v4859
    %6551 = vmatpush1.bf16.msra.mxu0 %v4858
    %6552 = vmatprep.subr.bf16.mxu0 %v4861
    %6553 = vmatpush1.bf16.msra.mxu0 %v4860
    %6554 = vmatprep.subr.bf16.mxu0 %v4863
    %6555 = vmatpush1.bf16.msra.mxu0 %v4862
    %6556 = vmatprep.subr.bf16.mxu0 %v4865
    %6557 = vmatpush1.bf16.msra.mxu0 %v4864
    %6558 = vmatprep.subr.bf16.mxu0 %v4867
    %6559 = vmatpush1.bf16.msra.mxu0 %v4866
    %6560 = vmatprep.subr.bf16.mxu0 %v4869
    %6561 = vmatpush1.bf16.msra.mxu0 %v4868
    %6562 = vmatprep.subr.bf16.mxu0 %v4871
    %6563 = vmatpush1.bf16.msra.mxu0 %v4870
    %6564 = vmatprep.subr.bf16.mxu0 %v4873
    %6565 = vmatpush1.bf16.msra.mxu0 %v4872
    %6566 = vmatprep.subr.bf16.mxu0 %v4875
    %6567 = vmatpush1.bf16.msra.mxu0 %v4874
    %6568 = vmatprep.subr.bf16.mxu0 %v4877
    %6569 = vmatpush1.bf16.msra.mxu0 %v4876
    %6570 = vmatprep.mubr.bf16.mxu0 %v1259
    %6571 = vmatmul.mubr.bf16.gmra.mrb[0].mxu0 %v1258
    %v6572 = vpop.f32.mrb[0].mxu0
    %v6573 = vadd.f32 %v6530, %v6572
    %v6574 = vpop.f32.mrb[0].mxu0
    %v6575 = vadd.f32 %v6532, %v6574
    %v6576 = vpop.f32.mrb[0].mxu0
    %v6577 = vadd.f32 %v6534, %v6576
    %v6578 = vpop.f32.mrb[0].mxu0
    %v6579 = vadd.f32 %v6536, %v6578
    %6580 = vdwg.mxu0
    %6581 = vmatprep.subr.bf16.mxu0 %v4879
    %6582 = vmatpush1.bf16.msra.mxu0 %v4878
    %6583 = vmatprep.subr.bf16.mxu0 %v4881
    %6584 = vmatpush1.bf16.msra.mxu0 %v4880
    %6585 = vmatprep.subr.bf16.mxu0 %v4883
    %6586 = vmatpush1.bf16.msra.mxu0 %v4882
    %6587 = vmatprep.subr.bf16.mxu0 %v4885
    %6588 = vmatpush1.bf16.msra.mxu0 %v4884
    %6589 = vmatprep.subr.bf16.mxu0 %v4887
    %6590 = vmatpush1.bf16.msra.mxu0 %v4886
    %6591 = vmatprep.subr.bf16.mxu0 %v4889
    %6592 = vmatpush1.bf16.msra.mxu0 %v4888
    %6593 = vmatprep.subr.bf16.mxu0 %v4891
    %6594 = vmatpush1.bf16.msra.mxu0 %v4890
    %6595 = vmatprep.subr.bf16.mxu0 %v4893
    %6596 = vmatpush1.bf16.msra.mxu0 %v4892
    %6597 = vmatprep.subr.bf16.mxu0 %v4895
    %6598 = vmatpush1.bf16.msra.mxu0 %v4894
    %6599 = vmatprep.subr.bf16.mxu0 %v4897
    %6600 = vmatpush1.bf16.msra.mxu0 %v4896
    %6601 = vmatprep.subr.bf16.mxu0 %v5633
    %6602 = vmatpush1.bf16.msra.mxu0 %v5630
    %6603 = vmatprep.subr.bf16.mxu0 0
    %6604 = vmatpush1.bf16.msra.mxu0 0
    %6605 = vmatprep.subr.bf16.mxu0 0
    %6606 = vmatpush1.bf16.msra.mxu0 0
    %6607 = vmatprep.subr.bf16.mxu0 0
    %6608 = vmatpush1.bf16.msra.mxu0 0
    %6609 = vmatprep.subr.bf16.mxu0 0
    %6610 = vmatpush1.bf16.msra.mxu0 0
    %6611 = vmatprep.subr.bf16.mxu0 0
    %6612 = vmatpush1.bf16.msra.mxu0 0
    %6613 = vmatprep.mubr.bf16.mxu0 %v5626
    %6614 = vmatmul.mubr.bf16.gmra.mrb[0].mxu0 %v1260
    %v6615 = vpop.f32.mrb[0].mxu0
    %v6616 = vadd.f32 %v6573, %v6615
    %v6617 = vpop.f32.mrb[0].mxu0
    %v6618 = vadd.f32 %v6575, %v6617
    %v6619 = vpop.f32.mrb[0].mxu0
    %v6620 = vadd.f32 %v6577, %v6619
    %v6621 = vpop.f32.mrb[0].mxu0
    %v6622 = vadd.f32 %v6579, %v6621
    %6623 = vdwg.mxu0
    %v6624 = vmax.f32 %v6616, 0.0
    %v6625 = vmax.f32 %v6618, 0.0
    %v6626 = vmax.f32 %v6620, 0.0
    %v6627 = vmax.f32 %v6622, 0.0
    %v6628 = vpack.c.bf16 %v6626, %v6624
    %v6629 = vpack.c.bf16 %v6627, %v6625
    %v6630 = vld [vmem:[#allocation9] sm:$0xff]
    %v6631 = vld [vmem:[#allocation9 + $0x8] sm:$0xff]
    %v6632 = vld [vmem:[#allocation9 + $0x10] sm:$0xff]
    %v6633 = vld [vmem:[#allocation9 + $0x18] sm:$0xff]
    %v6634 = vld [vmem:[#allocation9 + $0x20] sm:$0xff]
    %v6635 = vld [vmem:[#allocation9 + $0x28] sm:$0xff]
    %v6636 = vld [vmem:[#allocation9 + $0x30] sm:$0xff]
    %v6637 = vld [vmem:[#allocation9 + $0x38] sm:$0xff]
    %v6638 = vld [vmem:[#allocation9 + $0x40] sm:$0xff]
    %v6639 = vld [vmem:[#allocation9 + $0x48] sm:$0xff]
    %v6640 = vld [vmem:[#allocation9 + $0x50] sm:$0xff]
    %v6641 = vld [vmem:[#allocation9 + $0x58] sm:$0xff]
    %v6642 = vld [vmem:[#allocation9 + $0x60] sm:$0xff]
    %v6643 = vld [vmem:[#allocation9 + $0x68] sm:$0xff]
    %v6644 = vld [vmem:[#allocation9 + $0x70] sm:$0xff]
    %v6645 = vld [vmem:[#allocation9 + $0x78] sm:$0xff]
    %v6646 = vld [vmem:[#allocation9 + $0x80] sm:$0xff]
    %v6647 = vld [vmem:[#allocation9 + $0x88] sm:$0xff]
    %v6648 = vld [vmem:[#allocation9 + $0x90] sm:$0xff]
    %v6649 = vld [vmem:[#allocation9 + $0x98] sm:$0xff]
    %v6650 = vld [vmem:[#allocation9 + $0xa0] sm:$0xff]
    %v6651 = vld [vmem:[#allocation9 + $0xa8] sm:$0xff]
    %v6652 = vld [vmem:[#allocation9 + $0xb0] sm:$0xff]
    %v6653 = vld [vmem:[#allocation9 + $0xb8] sm:$0xff]
    %v6654 = vld [vmem:[#allocation9 + $0xc0] sm:$0xff]
    %v6655 = vld [vmem:[#allocation9 + $0xc8] sm:$0xff]
    %v6656 = vld [vmem:[#allocation9 + $0xd0] sm:$0xff]
    %v6657 = vld [vmem:[#allocation9 + $0xd8] sm:$0xff]
    %v6658 = vld [vmem:[#allocation9 + $0xe0] sm:$0xff]
    %v6659 = vld [vmem:[#allocation9 + $0xe8] sm:$0xff]
    %v6660 = vld [vmem:[#allocation9 + $0xf0] sm:$0xff]
    %v6661 = vld [vmem:[#allocation9 + $0xf8] sm:$0xff]
    %v6662 = vld [vmem:[#allocation10] sm:$0x3]
    %v6664 = vlaneseq
    %v6665 = vshrl.u32 %v6664, 7
    %v6666 = vsub.s32 0, %v6665
    %v6667 = vrot.slane %v6662, %v6666
    %v6668 = vlaneseq
    %v6669 = vshrl.u32 %v6668, 7
    %v6670 = vsub.s32 1, %v6669
    %v6671 = vrot.slane %v6662, %v6670
    %v6706 = vunpack.c.l.b16 %v6630
    %v6707 = vunpack.c.h.b16 %v6630
    %v6708 = vunpack.c.l.b16 %v6631
    %v6709 = vunpack.c.h.b16 %v6631
    %v6710 = vunpack.c.l.b16 %v6632
    %v6711 = vunpack.c.h.b16 %v6632
    %v6712 = vunpack.c.l.b16 %v6633
    %v6713 = vunpack.c.h.b16 %v6633
    %v6714 = vunpack.c.l.b16 %v6634
    %v6715 = vunpack.c.h.b16 %v6634
    %v6716 = vunpack.c.l.b16 %v6635
    %v6717 = vunpack.c.h.b16 %v6635
    %v6718 = vunpack.c.l.b16 %v6636
    %v6719 = vunpack.c.h.b16 %v6636
    %v6720 = vunpack.c.l.b16 %v6637
    %v6721 = vunpack.c.h.b16 %v6637
    %v6722 = vunpack.c.l.b16 %v6638
    %v6723 = vunpack.c.h.b16 %v6638
    %v6724 = vunpack.c.l.b16 %v6639
    %v6725 = vunpack.c.h.b16 %v6639
    %v6726 = vunpack.c.l.b16 %v6640
    %v6727 = vunpack.c.h.b16 %v6640
    %v6728 = vunpack.c.l.b16 %v6641
    %v6729 = vunpack.c.h.b16 %v6641
    %v6730 = vunpack.c.l.b16 %v6642
    %v6731 = vunpack.c.h.b16 %v6642
    %v6732 = vunpack.c.l.b16 %v6643
    %v6733 = vunpack.c.h.b16 %v6643
    %v6734 = vunpack.c.l.b16 %v6644
    %v6735 = vunpack.c.h.b16 %v6644
    %v6736 = vunpack.c.l.b16 %v6645
    %v6737 = vunpack.c.h.b16 %v6645
    %v6738 = vunpack.c.l.b16 %v6646
    %v6739 = vunpack.c.h.b16 %v6646
    %v6740 = vunpack.c.l.b16 %v6647
    %v6741 = vunpack.c.h.b16 %v6647
    %v6742 = vunpack.c.l.b16 %v6648
    %v6743 = vunpack.c.h.b16 %v6648
    %v6744 = vunpack.c.l.b16 %v6649
    %v6745 = vunpack.c.h.b16 %v6649
    %v6746 = vunpack.c.l.b16 %v6650
    %v6747 = vunpack.c.h.b16 %v6650
    %v6748 = vunpack.c.l.b16 %v6651
    %v6749 = vunpack.c.h.b16 %v6651
    %v6750 = vunpack.c.l.b16 %v6652
    %v6751 = vunpack.c.h.b16 %v6652
    %v6752 = vunpack.c.l.b16 %v6653
    %v6753 = vunpack.c.h.b16 %v6653
    %v6754 = vunpack.c.l.b16 %v6654
    %v6755 = vunpack.c.h.b16 %v6654
    %v6756 = vunpack.c.l.b16 %v6655
    %v6757 = vunpack.c.h.b16 %v6655
    %v6758 = vunpack.c.l.b16 %v6656
    %v6759 = vunpack.c.h.b16 %v6656
    %v6760 = vunpack.c.l.b16 %v6657
    %v6761 = vunpack.c.h.b16 %v6657
    %v6762 = vunpack.c.l.b16 %v6658
    %v6763 = vunpack.c.h.b16 %v6658
    %v6764 = vunpack.c.l.b16 %v6659
    %v6765 = vunpack.c.h.b16 %v6659
    %v6766 = vunpack.c.l.b16 %v6660
    %v6767 = vunpack.c.h.b16 %v6660
    %v6768 = vunpack.c.l.b16 %v6661
    %v6769 = vunpack.c.h.b16 %v6661
    %v6770 = vpack.c.b16 %v6708, %v6706
    %v6771 = vpack.c.b16 %v6709, %v6707
    %v6772 = vpack.c.b16 %v6712, %v6710
    %v6773 = vpack.c.b16 %v6713, %v6711
    %v6774 = vpack.c.b16 %v6716, %v6714
    %v6775 = vpack.c.b16 %v6717, %v6715
    %v6776 = vpack.c.b16 %v6720, %v6718
    %v6777 = vpack.c.b16 %v6721, %v6719
    %v6778 = vpack.c.b16 %v6724, %v6722
    %v6779 = vpack.c.b16 %v6725, %v6723
    %v6780 = vpack.c.b16 %v6728, %v6726
    %v6781 = vpack.c.b16 %v6729, %v6727
    %v6782 = vpack.c.b16 %v6732, %v6730
    %v6783 = vpack.c.b16 %v6733, %v6731
    %v6784 = vpack.c.b16 %v6736, %v6734
    %v6785 = vpack.c.b16 %v6737, %v6735
    %v6786 = vpack.c.b16 %v6740, %v6738
    %v6787 = vpack.c.b16 %v6741, %v6739
    %v6788 = vpack.c.b16 %v6744, %v6742
    %v6789 = vpack.c.b16 %v6745, %v6743
    %v6790 = vpack.c.b16 %v6748, %v6746
    %v6791 = vpack.c.b16 %v6749, %v6747
    %v6792 = vpack.c.b16 %v6752, %v6750
    %v6793 = vpack.c.b16 %v6753, %v6751
    %v6794 = vpack.c.b16 %v6756, %v6754
    %v6795 = vpack.c.b16 %v6757, %v6755
    %v6796 = vpack.c.b16 %v6760, %v6758
    %v6797 = vpack.c.b16 %v6761, %v6759
    %v6798 = vpack.c.b16 %v6764, %v6762
    %v6799 = vpack.c.b16 %v6765, %v6763
    %v6800 = vpack.c.b16 %v6768, %v6766
    %v6801 = vpack.c.b16 %v6769, %v6767
    %6834 = vmatprep.subr.bf16.mxu0 %v6771
    %6835 = vmatpush1.bf16.msra.mxu0 %v6770
    %6836 = vmatprep.subr.bf16.mxu0 %v6773
    %6837 = vmatpush1.bf16.msra.mxu0 %v6772
    %6838 = vmatprep.subr.bf16.mxu0 %v6775
    %6839 = vmatpush1.bf16.msra.mxu0 %v6774
    %6840 = vmatprep.subr.bf16.mxu0 %v6777
    %6841 = vmatpush1.bf16.msra.mxu0 %v6776
    %6842 = vmatprep.subr.bf16.mxu0 %v6779
    %6843 = vmatpush1.bf16.msra.mxu0 %v6778
    %6844 = vmatprep.subr.bf16.mxu0 %v6781
    %6845 = vmatpush1.bf16.msra.mxu0 %v6780
    %6846 = vmatprep.subr.bf16.mxu0 %v6783
    %6847 = vmatpush1.bf16.msra.mxu0 %v6782
    %6848 = vmatprep.subr.bf16.mxu0 %v6785
    %6849 = vmatpush1.bf16.msra.mxu0 %v6784
    %6850 = vmatprep.subr.bf16.mxu0 %v6787
    %6851 = vmatpush1.bf16.msra.mxu0 %v6786
    %6852 = vmatprep.subr.bf16.mxu0 %v6789
    %6853 = vmatpush1.bf16.msra.mxu0 %v6788
    %6854 = vmatprep.subr.bf16.mxu0 %v6791
    %6855 = vmatpush1.bf16.msra.mxu0 %v6790
    %6856 = vmatprep.subr.bf16.mxu0 %v6793
    %6857 = vmatpush1.bf16.msra.mxu0 %v6792
    %6858 = vmatprep.subr.bf16.mxu0 %v6795
    %6859 = vmatpush1.bf16.msra.mxu0 %v6794
    %6860 = vmatprep.subr.bf16.mxu0 %v6797
    %6861 = vmatpush1.bf16.msra.mxu0 %v6796
    %6862 = vmatprep.subr.bf16.mxu0 %v6799
    %6863 = vmatpush1.bf16.msra.mxu0 %v6798
    %6864 = vmatprep.subr.bf16.mxu0 %v6801
    %6865 = vmatpush1.bf16.msra.mxu0 %v6800
    %6866 = vmatprep.mubr.bf16.mxu0 %v6629
    %6867 = vmatmul.mubr.bf16.gmra.mrb[0].mxu0 %v6628
    %v6868 = vpop.f32.mrb[0].mxu0
    %v6869 = vadd.f32 %v6667, %v6868
    %v6870 = vpop.f32.mrb[0].mxu0
    %v6871 = vadd.f32 %v6671, %v6870
    %v6872 = vpop.f32.mrb[0].mxu0
    %v6873 = vadd.f32 %v6667, %v6872
    %v6874 = vpop.f32.mrb[0].mxu0
    %v6875 = vadd.f32 %v6671, %v6874
    %6876 = vdwg.mxu0
    %v6877 = vlaneseq
    %v6878 = vand.u32 %v6877, 127
    %v6879 = vadd.s32 %v6878, 128
    %vm6880 = vcmp.lt.s32.totalorder %v6878, 235
    %vm6881 = vcmp.lt.s32.totalorder %v6879, 235
    %v6882 = vsel %vm6880, %v6869, 3e+38
    %v6883 = vsel %vm6881, %v6871, 3e+38
    %v6884 = vsel %vm6880, %v6873, 3e+38
    %v6885 = vsel %vm6881, %v6875, 3e+38
    %v6886 = vmin.f32 %v6882, %v6883
    %6887 = vmin.xlane.f32.xlu0 %v6886
    %v6888 = vpop.xlane.xlu0 %6887
    %v6889 = vmin.f32 %v6884, %v6885
    %6890 = vmin.xlane.f32.xlu0 %v6889
    %v6891 = vpop.xlane.xlu0 %6890
    %v6892 = vsel %vm6880, %v6869, -3e+38
    %v6893 = vsel %vm6881, %v6871, -3e+38
    %v6894 = vsel %vm6880, %v6873, -3e+38
    %v6895 = vsel %vm6881, %v6875, -3e+38
    %v6896 = vmax.f32 %v6892, %v6893
    %6897 = vmax.xlane.f32.xlu0 %v6896
    %v6898 = vpop.xlane.xlu0 %6897
    %v6899 = vmax.f32 %v6894, %v6895
    %6900 = vmax.xlane.f32.xlu0 %v6899
    %v6901 = vpop.xlane.xlu0 %6900
    %v6902 = vld [vmem:[#allocation4] sm:$0x3]
    %v6903 = vld [vmem:[#allocation4 + $0x2] sm:$0x3]
    %v6904 = vld [vmem:[#allocation4 + $0x4] sm:$0x3]
    %v6905 = vld [vmem:[#allocation4 + $0x6] sm:$0x3]
    %v6906 = vld [vmem:[#allocation4 + $0x8] sm:$0x3]
    %v6907 = vld [vmem:[#allocation4 + $0xa] sm:$0x3]
    %v6908 = vld [vmem:[#allocation4 + $0xc] sm:$0x3]
    %v6909 = vld [vmem:[#allocation4 + $0xe] sm:$0x3]
    %vm6910 = vcmp.gt.bf16.partialorder %v6902, 0
    %vm6911 = vcmp.gt.bf16.partialorder %v6903, 0
    %vm6912 = vcmp.gt.bf16.partialorder %v6904, 0
    %vm6913 = vcmp.gt.bf16.partialorder %v6905, 0
    %vm6914 = vcmp.gt.bf16.partialorder %v6906, 0
    %vm6915 = vcmp.gt.bf16.partialorder %v6907, 0
    %vm6916 = vcmp.gt.bf16.partialorder %v6908, 0
    %vm6917 = vcmp.gt.bf16.partialorder %v6909, 0
    %v6918 = vsub.f32 %v6888, %v6898
    %v6919 = vsub.f32 %v6891, %v6901
    %v6920 = vsub.f32 %v6918, 40.0
    %v6921 = vsub.f32 %v6919, 40.0
    %v6922 = vadd.f32 %v6869, %v6920
    %v6923 = vadd.f32 %v6871, %v6920
    %v6924 = vadd.f32 %v6873, %v6921
    %v6925 = vadd.f32 %v6875, %v6921
    %v6926 = vsel %vm6910, 65537, 0
    %v6927 = vsel %vm6911, 65537, 0
    %v6928 = vsel %vm6912, 65537, 0
    %v6929 = vsel %vm6913, 65537, 0
    %v6930 = vsel %vm6914, 65537, 0
    %v6931 = vsel %vm6915, 65537, 0
    %v6932 = vsel %vm6916, 65537, 0
    %v6933 = vsel %vm6917, 65537, 0
    %v6934 = vunpack.c.l.b16 %v6926
    %v6935 = vunpack.c.l.b16 %v6927
    %v6936 = vunpack.c.l.b16 %v6928
    %v6937 = vunpack.c.l.b16 %v6929
    %v6938 = vunpack.c.l.b16 %v6930
    %v6939 = vunpack.c.l.b16 %v6931
    %v6940 = vunpack.c.l.b16 %v6932
    %v6941 = vunpack.c.l.b16 %v6933
    %vm6942 = vcmp.ne.s32.totalorder %v6934, 0
    %vm6943 = vcmp.ne.s32.totalorder %v6935, 0
    %vm6944 = vcmp.ne.s32.totalorder %v6936, 0
    %vm6945 = vcmp.ne.s32.totalorder %v6937, 0
    %vm6946 = vcmp.ne.s32.totalorder %v6938, 0
    %vm6947 = vcmp.ne.s32.totalorder %v6939, 0
    %vm6948 = vcmp.ne.s32.totalorder %v6940, 0
    %vm6949 = vcmp.ne.s32.totalorder %v6941, 0
    %v6950 = vsel %vm6942, 1, 0
    %v6951 = vsel %vm6943, 1, 0
    %v6952 = vsel %vm6944, 1, 0
    %v6953 = vsel %vm6945, 1, 0
    %v6954 = vsel %vm6946, 1, 0
    %v6955 = vsel %vm6947, 1, 0
    %v6956 = vsel %vm6948, 1, 0
    %v6957 = vsel %vm6949, 1, 0
    %v6958 = vcombine.low %v6950, %v6951
    %v6959 = vcombine.low %v6952, %v6953
    %v6961 = vunpack.c.l.s4 1983009808
    %v6962 = vunpack.c.0.s8 %v6961
    %v6963 = vlaneseq
    %v6964 = vshrl.u32 %v6963, 7
    %v6965 = vsub.s32 %v6962, %v6964
    %v6966 = vrot.slane %v6958, %v6965
    %v6968 = vunpack.c.l.s4 1983009808
    %v6969 = vunpack.c.0.s8 %v6968
    %v6970 = vlaneseq
    %v6971 = vshrl.u32 %v6970, 7
    %v6972 = vsub.s32 %v6969, %v6971
    %v6973 = vrot.slane %v6959, %v6972
    %v6974 = vcombine.low %v6966, %v6973
    %v6975 = vcombine.high %v6966, %v6973
    %v6976 = vcombine.low %v6954, %v6955
    %v6977 = vcombine.low %v6956, %v6957
    %v6979 = vunpack.c.l.s4 1983009808
    %v6980 = vunpack.c.0.s8 %v6979
    %v6981 = vlaneseq
    %v6982 = vshrl.u32 %v6981, 7
    %v6983 = vsub.s32 %v6980, %v6982
    %v6984 = vrot.slane %v6976, %v6983
    %v6986 = vunpack.c.l.s4 1983009808
    %v6987 = vunpack.c.0.s8 %v6986
    %v6988 = vlaneseq
    %v6989 = vshrl.u32 %v6988, 7
    %v6990 = vsub.s32 %v6987, %v6989
    %v6991 = vrot.slane %v6977, %v6990
    %v6992 = vcombine.low %v6984, %v6991
    %v6993 = vcombine.high %v6984, %v6991
    %vm6994 = vcmp.ne.s32.totalorder %v6974, 0
    %vm6995 = vcmp.ne.s32.totalorder %v6975, 0
    %vm6996 = vcmp.ne.s32.totalorder %v6992, 0
    %vm6997 = vcmp.ne.s32.totalorder %v6993, 0
    %v6998 = vsel %vm6994, %v6869, %v6922
    %v6999 = vsel %vm6995, %v6871, %v6923
    %v7000 = vsel %vm6996, %v6873, %v6924
    %v7001 = vsel %vm6997, %v6875, %v6925
    %v7002 = vsel %vm6880, %v6998, -3e+38
    %v7003 = vsel %vm6881, %v6999, -3e+38
    %v7004 = vsel %vm6880, %v7000, -3e+38
    %v7005 = vsel %vm6881, %v7001, -3e+38
    %v7006 = vmax.f32 %v7002, %v7003
    %7007 = vmax.xlane.f32.xlu0 %v7006
    %v7008 = vpop.xlane.xlu0 %7007
    %v7009 = vmax.f32 %v7004, %v7005
    %7010 = vmax.xlane.f32.xlu0 %v7009
    %v7011 = vpop.xlane.xlu0 %7010
    %vm7012 = vcmp.eq.f32.partialorder %v7002, %v7008
    %vm7013 = vcmp.eq.f32.partialorder %v7003, %v7008
    %vm7014 = vcmp.eq.f32.partialorder %v7004, %v7011
    %vm7015 = vcmp.eq.f32.partialorder %v7005, %v7011
    %v7016 = vsel %vm7012, %v6878, 256
    %v7017 = vsel %vm7013, %v6879, 256
    %v7018 = vsel %vm7014, %v6878, 256
    %v7019 = vsel %vm7015, %v6879, 256
    %vm7020 = vcmp.lt.s32.totalorder %v7016, %v7017
    %v7021 = vsel %vm7020, %v7016, %v7017
    %v7022 = vand.u32 %v7021, 65535
    %v7023 = vshra.s32 %v7021, 16
    %v7024 = vcvt.s32.f32 %v7022
    %v7025 = vcvt.s32.f32 %v7023
    %7026 = vmin.xlane.f32.xlu0 %v7025
    %v7027 = vpop.xlane.xlu0 %7026
    %vm7028 = vcmp.eq.f32.partialorder %v7025, %v7027
    %v7029 = vsel %vm7028, %v7024, inf
    %7030 = vmin.xlane.f32.xlu0 %v7029
    %v7031 = vpop.xlane.xlu0 %7030
    %v7032 = vcvt.f32.s32 %v7031
    %v7033 = vcvt.f32.s32 %v7027
    %v7034 = vshll.u32 %v7033, 16
    %v7035 = vadd.s32 %v7034, %v7032
    %vm7036 = vcmp.lt.s32.totalorder %v7018, %v7019
    %v7037 = vsel %vm7036, %v7018, %v7019
    %v7038 = vand.u32 %v7037, 65535
    %v7039 = vshra.s32 %v7037, 16
    %v7040 = vcvt.s32.f32 %v7038
    %v7041 = vcvt.s32.f32 %v7039
    %7042 = vmin.xlane.f32.xlu0 %v7041
    %v7043 = vpop.xlane.xlu0 %7042
    %vm7044 = vcmp.eq.f32.partialorder %v7041, %v7043
    %v7045 = vsel %vm7044, %v7040, inf
    %7046 = vmin.xlane.f32.xlu0 %v7045
    %v7047 = vpop.xlane.xlu0 %7046
    %v7048 = vcvt.f32.s32 %v7047
    %v7049 = vcvt.f32.s32 %v7043
    %v7050 = vshll.u32 %v7049, 16
    %v7051 = vadd.s32 %v7050, %v7048
    %vm7052 = vcmask 7168
    %7053 = vst.msk [vmem:[#allocation12] sm:$0xff] %vm7052, %v7035
    %7054 = vst.msk [vmem:[#allocation12 + $0x8] sm:$0xff] %vm7052, %v7051
    // Predicated region
    $region50: #{tpu_custom_call.1} parent=1 // pred_check
      _
    $region51: #{tpu_custom_call.1} parent=1 // pred_check_branch
      %7056 = sbr.rel (0) target = $region53
    $region52: #{tpu_custom_call.1} parent=1 // pred_region
      // Predicated region
      $region54: #{tpu_custom_call.1} parent=52 // pred_check
        _
      $region55: #{tpu_custom_call.1} parent=52 // pred_check_branch
        %7058 = sbr.rel (0) target = $region57
      $region56: #{tpu_custom_call.1} parent=52 // pred_region
        // Predicated region
        $region58: #{tpu_custom_call.1} parent=56 // pred_check
          _
        $region59: #{tpu_custom_call.1} parent=56 // pred_check_branch
          %7060 = sbr.rel target = $region61
        $region60: #{tpu_custom_call.1} parent=56 // pred_region
          // Predicated region
          $region73: #{tpu_custom_call.1} parent=60 // pred_check
            _
          $region74: #{tpu_custom_call.1} parent=60 // pred_check_branch
            %7075 = sbr.rel (0) target = $region76
          $region75: #{tpu_custom_call.1} parent=60 // pred_region
            loop: start=0, step=1, limit=1
            $region77: #{tpu_custom_call.1} parent=75 // loop_pre_header
              _
            $region78: #{tpu_custom_call.1} parent=75 // loop_header
              %s7078 = sphi 0, %s7082
              %p7079 = scmp.ge.s32.totalorder %s7078, 1
              %s7083 = sphi [#allocation12], [#allocation12]
              %s7084 = sphi %s6, %s6
            $region79: #{tpu_custom_call.1} parent=75 // loop_header_branch
              %7081 = sbr.rel (%p7079) target = $region83
            $region80: #{tpu_custom_call.1} parent=75 // loop_body
              %v7085 = vld [vmem:[%s7083] sm:$0x3]
              %7086 = vst [vmem:[%s7084] sm:$0x3] %v7085
            $region81: #{tpu_custom_call.1} parent=75 // loop_footer
              %s7082 = sadd.s32 1, %s7078
            $region82: #{tpu_custom_call.1} parent=75 // loop_footer_branch
              %7077 = sbr.rel target = $region78
            $region83: #{tpu_custom_call.1} parent=75 // loop_exit
              _
          $region76: #{tpu_custom_call.1} parent=60 // pred_fallthru
            _
        $region61: #{tpu_custom_call.1} parent=56 // pred_fallthru
          _
        // Predicated region
        $region62: #{tpu_custom_call.1} parent=56 // pred_check
          _
        $region63: #{tpu_custom_call.1} parent=56 // pred_check_branch
          %7062 = sbr.rel (0) target = $region65
        $region64: #{tpu_custom_call.1} parent=56 // pred_region
          loop: start=0, step=1, limit=1
          $region66: #{tpu_custom_call.1} parent=64 // loop_pre_header
            _
          $region67: #{tpu_custom_call.1} parent=64 // loop_header
            %s7065 = sphi 0, %s7069
            %p7066 = scmp.ge.s32.totalorder %s7065, 1
            %s7070 = sphi [#allocation12], [#allocation12]
            %s7071 = sphi %s6, %s6
          $region68: #{tpu_custom_call.1} parent=64 // loop_header_branch
            %7068 = sbr.rel (%p7066) target = $region72
          $region69: #{tpu_custom_call.1} parent=64 // loop_body
            %v7072 = vld [vmem:[%s7070] sm:$0x3]
            %7073 = vst [vmem:[%s7071] sm:$0x3] %v7072
          $region70: #{tpu_custom_call.1} parent=64 // loop_footer
            %s7069 = sadd.s32 1, %s7065
          $region71: #{tpu_custom_call.1} parent=64 // loop_footer_branch
            %7064 = sbr.rel target = $region67
          $region72: #{tpu_custom_call.1} parent=64 // loop_exit
            _
        $region65: #{tpu_custom_call.1} parent=56 // pred_fallthru
          _
      $region57: #{tpu_custom_call.1} parent=52 // pred_fallthru
        _
      %7087 = vnop
    $region53: #{tpu_custom_call.1} parent=1 // pred_fallthru
      _
    // Predicated region
    $region84: #{tpu_custom_call.1} parent=1 // pred_check
      _
    $region85: #{tpu_custom_call.1} parent=1 // pred_check_branch
      %7089 = sbr.rel (0) target = $region87
    $region86: #{tpu_custom_call.1} parent=1 // pred_region
      _
    $region87: #{tpu_custom_call.1} parent=1 // pred_fallthru
      _
    %7090 = vsyncpa [#allocation3], 1
    %7091 = vsyncpa [#allocation5], 1
    %7092 = vsyncpa [#allocation8], 1
    %7093 = vsyncpa [#allocation11], 1

</llo_original>
